<compile_context>
chip_gen: v6e
topology: v6e:2x2x1
jax: 0.10.0
libtpu: 0.0.40
codegen_flags: <defaults>
</compile_context>

<pallas_src>
import functools

import jax
import jax.numpy as jnp
from jax import lax
from jax.experimental import pallas as pl
from jax.experimental.pallas import tpu as pltpu


def _fire_kernel(x_ref, ws_ref, bs_ref, we_ref, bcat_ref, o_ref, s_pad_ref,
                 *, B, H, W, Cin, S, Cout, compute_dtype):
    """One block of B images per grid step.

    x_ref    : (B, H, W, Cin)    activations, caller dtype (cast in-kernel)
    ws_ref   : (Cin, S)          squeeze 1x1 weights (compute dtype)
    bs_ref   : (1, S)            squeeze bias (f32)
    we_ref   : (9, S, Cout)      fused expand weights, tap k = (ky, kx):
                                 [we1 if k == centre else 0 | we3[ky, kx]]
    bcat_ref : (1, Cout)         concat([be1, be3]) (f32)
    o_ref    : (B, H, W, Cout)   output (out dtype)
    s_pad_ref: (B, H+2, W+2, S)  VMEM scratch: zero halo + squeezed activations
    """
    # ---- squeeze 1x1 conv + ReLU: one (B*H*W, Cin) @ (Cin, S) MXU matmul ----
    # In-kernel cast: VPU work hidden under the MXU, no extra HBM pass.
    x2d = x_ref[...].reshape(B * H * W, Cin).astype(compute_dtype)
    s = jnp.dot(x2d, ws_ref[...], preferred_element_type=jnp.float32)
    s = jnp.maximum(s + bs_ref[...], 0.0)                     # (B*H*W, S) f32

    # ---- stage squeezed activations with a zero 1-pixel halo ----
    # Border-only zeroing, every step; the interior is fully overwritten below.
    zrow = jnp.zeros((B, 1, W + 2, S), s_pad_ref.dtype)
    zcol = jnp.zeros((B, H, 1, S), s_pad_ref.dtype)
    s_pad_ref[:, 0:1, :, :] = zrow                    # top halo row
    s_pad_ref[:, H + 1:H + 2, :, :] = zrow            # bottom halo row
    s_pad_ref[:, 1:H + 1, 0:1, :] = zcol              # left halo column
    s_pad_ref[:, 1:H + 1, W + 1:W + 2, :] = zcol      # right halo column
    s_pad_ref[:, 1:H + 1, 1:W + 1, :] = (
        s.reshape(B, H, W, S).astype(s_pad_ref.dtype))

    # ---- expand: 9 per-tap matmuls accumulated in f32 ----
    # No im2col patch matrix and no lane-offset concatenate; the 1x1 expand
    # rides the centre tap, so the bias/ReLU epilogue sees one lane-dense
    # (B*H*W, Cout) slab and the output is a single contiguous store.
    acc = None
    for k in range(9):
        ky, kx = divmod(k, 3)
        patch = s_pad_ref[:, ky:ky + H, kx:kx + W, :].reshape(B * H * W, S)
        contrib = jnp.dot(patch, we_ref[k], preferred_element_type=jnp.float32)
        acc = contrib if acc is None else acc + contrib
    out = jnp.maximum(acc + bcat_ref[...], 0.0)               # (B*H*W, Cout)
    o_ref[...] = out.reshape(B, H, W, Cout).astype(o_ref.dtype)


def _build_fused_expand_weights(we1, we3):
    """we1 (S, E1), we3 (3, 3, S, E3) HWIO  ->  (9, S, E1+E3) per-tap blocks.

    Tap k = (ky, kx): the first E1 output columns carry we1 only on the centre
    tap (zeros elsewhere); the last E3 columns carry we3[ky, kx].
    """
    blocks = []
    for ky in range(3):
        for kx in range(3):
            w1 = we1 if (ky, kx) == (1, 1) else jnp.zeros_like(we1)
            blocks.append(jnp.concatenate([w1, we3[ky, kx]], axis=1))
    return jnp.stack(blocks, axis=0)


def _padded_bytes(shape, dtype):
    """Rough VMEM footprint of an array under (8, 128) tiling."""
    itemsize = jnp.dtype(dtype).itemsize
    if len(shape) < 2:
        lanes = -(-int(shape[-1] if shape else 1) // 128) * 128
        return 8 * lanes * itemsize
    lanes = -(-int(shape[-1]) // 128) * 128
    subl = -(-int(shape[-2]) // 8) * 8
    rest = 1
    for d in shape[:-2]:
        rest *= int(d)
    return rest * subl * lanes * itemsize


def _derive_vmem_limit(B, H, W, Cin, S, Cout, x_dtype, compute_dtype, out_dtype):
    """Per-step footprint (padded) with margin, clamped to a safe range."""
    blocks = 2 * (_padded_bytes((B, H, W, Cin), x_dtype)
                  + _padded_bytes((B, H, W, Cout), out_dtype))       # dbl-buf
    consts = 2 * (_padded_bytes((Cin, S), compute_dtype)
                  + _padded_bytes((1, S), jnp.float32)
                  + _padded_bytes((9, S, Cout), compute_dtype)
                  + _padded_bytes((1, Cout), jnp.float32))
    scratch = _padded_bytes((B, H + 2, W + 2, S), compute_dtype)
    temps = (_padded_bytes((B * H * W, Cin), jnp.float32)
             + 2 * _padded_bytes((B * H * W, S), jnp.float32)
             + 2 * _padded_bytes((B * H * W, Cout), jnp.float32))
    est = 2 * (blocks + consts + scratch + temps)
    return int(min(max(est, 32 * 1024 * 1024), 48 * 1024 * 1024))


def fire_module_pallas_nhwc(x_nhwc, ws, bs, we1, be1, we3, be3,
                            *, compute_dtype=jnp.float32,
                            out_dtype=jnp.float32,
                            images_per_step=1):
    """NHWC entry point (preferred: keeps activations NHWC end-to-end).

    ws (Cin, S), bs (1, S), we1 (S, E1), be1 (1, E1),
    we3 (3, 3, S, E3) HWIO, be3 (1, E3).
    Returns (N, H, W, E1+E3) in out_dtype.
    """
    N, H, W, Cin = x_nhwc.shape
    S = ws.shape[1]
    E1 = we1.shape[1]
    E3 = we3.shape[3]
    Cout = E1 + E3

    B = images_per_step if (images_per_step > 0 and N % images_per_step == 0) else 1
    grid_n = N // B

    # Weights/biases are small: cast once in the wrapper. Activations are cast
    # inside the kernel (no extra HBM pass). Accumulation stays f32.
    ws_c = ws.astype(compute_dtype)
    bs_c = bs.reshape(1, S).astype(jnp.float32)
    we_c = _build_fused_expand_weights(we1, we3).astype(compute_dtype)
    bcat = jnp.concatenate([be1.reshape(1, E1), be3.reshape(1, E3)],
                           axis=1).astype(jnp.float32)

    kernel = functools.partial(_fire_kernel, B=B, H=H, W=W, Cin=Cin, S=S,
                               Cout=Cout, compute_dtype=compute_dtype)

    flops = 2 * N * H * W * (Cin * S + 9 * S * Cout)
    bytes_accessed = (x_nhwc.size * x_nhwc.dtype.itemsize
                      + N * H * W * Cout * jnp.dtype(out_dtype).itemsize
                      + ws_c.size * ws_c.dtype.itemsize
                      + we_c.size * we_c.dtype.itemsize
                      + (S + Cout) * 4)

    return pl.pallas_call(
        kernel,
        out_shape=jax.ShapeDtypeStruct((N, H, W, Cout), out_dtype),
        grid_spec=pltpu.PrefetchScalarGridSpec(
            num_scalar_prefetch=0,
            grid=(grid_n,),
            in_specs=[
                pl.BlockSpec((B, H, W, Cin), lambda n: (n, 0, 0, 0)),
                pl.BlockSpec((Cin, S), lambda n: (0, 0)),
                pl.BlockSpec((1, S), lambda n: (0, 0)),
                pl.BlockSpec((9, S, Cout), lambda n: (0, 0, 0)),
                pl.BlockSpec((1, Cout), lambda n: (0, 0)),
            ],
            out_specs=pl.BlockSpec((B, H, W, Cout), lambda n: (n, 0, 0, 0)),
            scratch_shapes=[pltpu.VMEM((B, H + 2, W + 2, S), compute_dtype)],
        ),
        compiler_params=pltpu.CompilerParams(
            dimension_semantics=("parallel",),
            vmem_limit_bytes=_derive_vmem_limit(
                B, H, W, Cin, S, Cout, x_nhwc.dtype, compute_dtype, out_dtype),
        ),
        cost_estimate=pl.CostEstimate(
            flops=int(flops), transcendentals=0,
            bytes_accessed=int(bytes_accessed)),
    )(x_nhwc, ws_c, bs_c, we_c, bcat)


def fire_module_pallas(x_nchw, ws, bs, we1, be1, we3, be3,
                       *, compute_dtype=jnp.float32, out_dtype=jnp.float32,
                       images_per_step=1):
    """NCHW wrapper matching the PyTorch module's I/O layout.

    Note: the two transposes are full HBM passes; real pipelines should call
    fire_module_pallas_nhwc directly and stay NHWC (and bf16) between layers.
    """
    x_nhwc = jnp.transpose(x_nchw, (0, 2, 3, 1))
    out_nhwc = fire_module_pallas_nhwc(
        x_nhwc, ws, bs, we1, be1, we3, be3,
        compute_dtype=compute_dtype, out_dtype=out_dtype,
        images_per_step=images_per_step)
    return jnp.transpose(out_nhwc, (0, 3, 1, 2))


def fire_module_ref(x_nchw, ws, bs, we1, be1, we3, be3):
    """Pure-JAX f32 reference matching the PyTorch semantics."""
    x = jnp.transpose(x_nchw, (0, 2, 3, 1)).astype(jnp.float32)
    s = jnp.einsum('nhwc,cs->nhws', x, ws) + bs.reshape(-1)
    s = jnp.maximum(s, 0.0)
    e1 = jnp.einsum('nhws,se->nhwe', s, we1) + be1.reshape(-1)
    e3 = lax.conv_general_dilated(
        s, we3, window_strides=(1, 1), padding='SAME',
        dimension_numbers=('NHWC', 'HWIO', 'NHWC')) + be3.reshape(-1)
    out = jnp.maximum(jnp.concatenate([e1, e3], axis=-1), 0.0)
    return jnp.transpose(out, (0, 3, 1, 2))


if __name__ == "__main__":
    # FireModule(in_channels=8, s_1x1=4, e_1x1=8, e_3x3=8) — toy shapes.
    N, Cin, H, W = 2, 8, 16, 16
    S, E1, E3 = 4, 8, 8

    key = jax.random.PRNGKey(0)
    ks = jax.random.split(key, 7)

    x = jax.random.normal(ks[0], (N, Cin, H, W), jnp.float32)

    # "PyTorch-shaped" params, reordered to the kernel layout.
    w_s1 = jax.random.normal(ks[1], (S, Cin, 1, 1), jnp.float32) * 0.1
    b_s1 = jax.random.normal(ks[2], (S,), jnp.float32) * 0.1
    w_e1 = jax.random.normal(ks[3], (E1, S, 1, 1), jnp.float32) * 0.1
    b_e1 = jax.random.normal(ks[4], (E1,), jnp.float32) * 0.1
    w_e3 = jax.random.normal(ks[5], (E3, S, 3, 3), jnp.float32) * 0.1
    b_e3 = jax.random.normal(ks[6], (E3,), jnp.float32) * 0.1

    ws = jnp.transpose(w_s1[:, :, 0, 0], (1, 0))            # (Cin, S)
    bs = b_s1.reshape(1, S)
    we1 = jnp.transpose(w_e1[:, :, 0, 0], (1, 0))           # (S, E1)
    be1 = b_e1.reshape(1, E1)
    we3 = jnp.transpose(w_e3, (2, 3, 1, 0))                 # (3, 3, S, E3) HWIO
    be3 = b_e3.reshape(1, E3)

    ref = fire_module_ref(x, ws, bs, we1, be1, we3, be3)

    # f32 compute path, one image per step: must match the f32 ref tightly.
    out_f32 = jax.block_until_ready(
        fire_module_pallas(x, ws, bs, we1, be1, we3, be3,
                           compute_dtype=jnp.float32))
    assert out_f32.shape == (N, E1 + E3, H, W)
    assert jnp.allclose(out_f32, ref, atol=1e-4, rtol=1e-4), "f32 mismatch"

    # f32 compute path, both images batched into one grid step.
    out_f32_b2 = jax.block_until_ready(
        fire_module_pallas(x, ws, bs, we1, be1, we3, be3,
                           compute_dtype=jnp.float32, images_per_step=2))
    assert out_f32_b2.shape == (N, E1 + E3, H, W)
    assert jnp.allclose(out_f32_b2, ref, atol=1e-4, rtol=1e-4), "batched mismatch"

    # bf16 MXU inputs + bf16 output: looser tolerance (bf16 mantissa; the
    # squeeze activations are double-rounded f32 -> bf16 before the expand).
    out_bf16 = jax.block_until_ready(
        fire_module_pallas(x, ws, bs, we1, be1, we3, be3,
                           compute_dtype=jnp.bfloat16, out_dtype=jnp.bfloat16))
    assert out_bf16.shape == (N, E1 + E3, H, W)
    assert jnp.allclose(out_bf16.astype(jnp.float32), ref,
                        atol=5e-2, rtol=5e-2), "bf16 mismatch"

    print("KERNEL_OK")
</pallas_src>

<mosaic_0001>
module attributes {stable_mosaic.version = 11 : i64} {
  func.func @_fire_kernel(%arg0: i32, %arg1: memref<1x16x16x8xf32, #tpu.memory_space<vmem>>, %arg2: memref<8x4xf32, #tpu.memory_space<vmem>>, %arg3: memref<1x4xf32, #tpu.memory_space<vmem>>, %arg4: memref<9x4x16xf32, #tpu.memory_space<vmem>>, %arg5: memref<1x16xf32, #tpu.memory_space<vmem>>, %arg6: memref<1x16x16x16xf32, #tpu.memory_space<vmem>>, %arg7: memref<1x18x18x4xf32, #tpu.memory_space<vmem>>) attributes {dimension_semantics = [#tpu.dimension_semantics<parallel>], iteration_bounds = array<i64: 2>, scalar_prefetch = 0 : i64, scratch_operands = 1 : i64, tpu.core_type = #tpu.core_type<tc>, window_params = [{transform_indices = @transform_0, window_bounds = array<i64: 1, 16, 16, 8>}, {pipeline_mode = #tpu.pipeline_mode<synchronous>, transform_indices = @transform_1, window_bounds = array<i64: 8, 4>}, {pipeline_mode = #tpu.pipeline_mode<synchronous>, transform_indices = @transform_2, window_bounds = array<i64: 1, 4>}, {pipeline_mode = #tpu.pipeline_mode<synchronous>, transform_indices = @transform_3, window_bounds = array<i64: 9, 4, 16>}, {pipeline_mode = #tpu.pipeline_mode<synchronous>, transform_indices = @transform_4, window_bounds = array<i64: 1, 16>}, {transform_indices = @transform_5, window_bounds = array<i64: 1, 16, 16, 16>}]} {
    %c0 = arith.constant 0 : index
    %c0_0 = arith.constant 0 : index
    %c0_1 = arith.constant 0 : index
    %c0_2 = arith.constant 0 : index
    %0 = vector.load %arg1[%c0, %c0_0, %c0_1, %c0_2] : memref<1x16x16x8xf32, #tpu.memory_space<vmem>>, vector<1x16x16x8xf32>
    %1 = vector.shape_cast %0 : vector<1x16x16x8xf32> to vector<256x8xf32>
    %c0_3 = arith.constant 0 : index
    %c0_4 = arith.constant 0 : index
    %2 = vector.load %arg2[%c0_3, %c0_4] : memref<8x4xf32, #tpu.memory_space<vmem>>, vector<8x4xf32>
    %cst = arith.constant dense<0.000000e+00> : vector<256x4xf32>
    %3 = tpu.matmul %1, %2, %cst {dimension_numbers = #tpu.dot_dimension_numbers<[1], [0], [0], [1], [0, 0, 1, 1], [], []>} : vector<256x8xf32>, vector<8x4xf32>, vector<256x4xf32> -> vector<256x4xf32>
    %c0_5 = arith.constant 0 : index
    %c0_6 = arith.constant 0 : index
    %4 = vector.load %arg3[%c0_5, %c0_6] : memref<1x4xf32, #tpu.memory_space<vmem>>, vector<1x4xf32>
    %5 = vector.broadcast %4 : vector<1x4xf32> to vector<256x4xf32>
    %6 = arith.addf %3, %5 : vector<256x4xf32>
    %cst_7 = arith.constant 0.000000e+00 : f32
    %7 = vector.broadcast %cst_7 : f32 to vector<256x4xf32>
    %8 = arith.maximumf %6, %7 : vector<256x4xf32>
    %cst_8 = arith.constant 0.000000e+00 : f32
    %9 = vector.broadcast %cst_8 : f32 to vector<1x1x18x4xf32>
    %cst_9 = arith.constant 0.000000e+00 : f32
    %10 = vector.broadcast %cst_9 : f32 to vector<1x16x1x4xf32>
    %c0_10 = arith.constant 0 : index
    %c0_11 = arith.constant 0 : index
    %c0_12 = arith.constant 0 : index
    %c0_13 = arith.constant 0 : index
    %11 = vector.load %arg7[%c0_10, %c0_11, %c0_12, %c0_13] : memref<1x18x18x4xf32, #tpu.memory_space<vmem>>, vector<1x1x18x4xf32>
    tpu.vector_store %arg7[%c0_10, %c0_11, %c0_12, %c0_13], %9 {strides = array<i32>} : memref<1x18x18x4xf32, #tpu.memory_space<vmem>>, vector<1x1x18x4xf32>,
    %c0_14 = arith.constant 0 : index
    %c17 = arith.constant 17 : index
    %c0_15 = arith.constant 0 : index
    %c0_16 = arith.constant 0 : index
    %12 = vector.load %arg7[%c0_14, %c17, %c0_15, %c0_16] : memref<1x18x18x4xf32, #tpu.memory_space<vmem>>, vector<1x1x18x4xf32>
    tpu.vector_store %arg7[%c0_14, %c17, %c0_15, %c0_16], %9 {strides = array<i32>} : memref<1x18x18x4xf32, #tpu.memory_space<vmem>>, vector<1x1x18x4xf32>,
    %c0_17 = arith.constant 0 : index
    %c1 = arith.constant 1 : index
    %c0_18 = arith.constant 0 : index
    %c0_19 = arith.constant 0 : index
    %13 = vector.load %arg7[%c0_17, %c1, %c0_18, %c0_19] : memref<1x18x18x4xf32, #tpu.memory_space<vmem>>, vector<1x16x1x4xf32>
    tpu.vector_store %arg7[%c0_17, %c1, %c0_18, %c0_19], %10 {strides = array<i32>} : memref<1x18x18x4xf32, #tpu.memory_space<vmem>>, vector<1x16x1x4xf32>,
    %c0_20 = arith.constant 0 : index
    %c1_21 = arith.constant 1 : index
    %c17_22 = arith.constant 17 : index
    %c0_23 = arith.constant 0 : index
    %14 = vector.load %arg7[%c0_20, %c1_21, %c17_22, %c0_23] : memref<1x18x18x4xf32, #tpu.memory_space<vmem>>, vector<1x16x1x4xf32>
    tpu.vector_store %arg7[%c0_20, %c1_21, %c17_22, %c0_23], %10 {strides = array<i32>} : memref<1x18x18x4xf32, #tpu.memory_space<vmem>>, vector<1x16x1x4xf32>,
    %15 = vector.shape_cast %8 : vector<256x4xf32> to vector<1x16x16x4xf32>
    %c0_24 = arith.constant 0 : index
    %c1_25 = arith.constant 1 : index
    %c1_26 = arith.constant 1 : index
    %c0_27 = arith.constant 0 : index
    %16 = vector.load %arg7[%c0_24, %c1_25, %c1_26, %c0_27] : memref<1x18x18x4xf32, #tpu.memory_space<vmem>>, vector<1x16x16x4xf32>
    tpu.vector_store %arg7[%c0_24, %c1_25, %c1_26, %c0_27], %15 {strides = array<i32>} : memref<1x18x18x4xf32, #tpu.memory_space<vmem>>, vector<1x16x16x4xf32>,
    %c0_28 = arith.constant 0 : index
    %c0_29 = arith.constant 0 : index
    %c0_30 = arith.constant 0 : index
    %c0_31 = arith.constant 0 : index
    %17 = vector.load %arg7[%c0_28, %c0_29, %c0_30, %c0_31] : memref<1x18x18x4xf32, #tpu.memory_space<vmem>>, vector<1x16x16x4xf32>
    %18 = vector.shape_cast %17 : vector<1x16x16x4xf32> to vector<256x4xf32>
    %c0_32 = arith.constant 0 : index
    %c0_33 = arith.constant 0 : index
    %c0_34 = arith.constant 0 : index
    %19 = vector.load %arg4[%c0_32, %c0_33, %c0_34] : memref<9x4x16xf32, #tpu.memory_space<vmem>>, vector<1x4x16xf32>
    %20 = vector.shape_cast %19 : vector<1x4x16xf32> to vector<4x16xf32>
    %cst_35 = arith.constant dense<0.000000e+00> : vector<256x16xf32>
    %21 = tpu.matmul %18, %20, %cst_35 {dimension_numbers = #tpu.dot_dimension_numbers<[1], [0], [0], [1], [0, 0, 1, 1], [], []>} : vector<256x4xf32>, vector<4x16xf32>, vector<256x16xf32> -> vector<256x16xf32>
    %c0_36 = arith.constant 0 : index
    %c0_37 = arith.constant 0 : index
    %c1_38 = arith.constant 1 : index
    %c0_39 = arith.constant 0 : index
    %22 = vector.load %arg7[%c0_36, %c0_37, %c1_38, %c0_39] : memref<1x18x18x4xf32, #tpu.memory_space<vmem>>, vector<1x16x16x4xf32>
    %23 = vector.shape_cast %22 : vector<1x16x16x4xf32> to vector<256x4xf32>
    %c1_40 = arith.constant 1 : index
    %c0_41 = arith.constant 0 : index
    %c0_42 = arith.constant 0 : index
    %24 = vector.load %arg4[%c1_40, %c0_41, %c0_42] : memref<9x4x16xf32, #tpu.memory_space<vmem>>, vector<1x4x16xf32>
    %25 = vector.shape_cast %24 : vector<1x4x16xf32> to vector<4x16xf32>
    %cst_43 = arith.constant dense<0.000000e+00> : vector<256x16xf32>
    %26 = tpu.matmul %23, %25, %cst_43 {dimension_numbers = #tpu.dot_dimension_numbers<[1], [0], [0], [1], [0, 0, 1, 1], [], []>} : vector<256x4xf32>, vector<4x16xf32>, vector<256x16xf32> -> vector<256x16xf32>
    %27 = arith.addf %21, %26 : vector<256x16xf32>
    %c0_44 = arith.constant 0 : index
    %c0_45 = arith.constant 0 : index
    %c2 = arith.constant 2 : index
    %c0_46 = arith.constant 0 : index
    %28 = vector.load %arg7[%c0_44, %c0_45, %c2, %c0_46] : memref<1x18x18x4xf32, #tpu.memory_space<vmem>>, vector<1x16x16x4xf32>
    %29 = vector.shape_cast %28 : vector<1x16x16x4xf32> to vector<256x4xf32>
    %c2_47 = arith.constant 2 : index
    %c0_48 = arith.constant 0 : index
    %c0_49 = arith.constant 0 : index
    %30 = vector.load %arg4[%c2_47, %c0_48, %c0_49] : memref<9x4x16xf32, #tpu.memory_space<vmem>>, vector<1x4x16xf32>
    %31 = vector.shape_cast %30 : vector<1x4x16xf32> to vector<4x16xf32>
    %cst_50 = arith.constant dense<0.000000e+00> : vector<256x16xf32>
    %32 = tpu.matmul %29, %31, %cst_50 {dimension_numbers = #tpu.dot_dimension_numbers<[1], [0], [0], [1], [0, 0, 1, 1], [], []>} : vector<256x4xf32>, vector<4x16xf32>, vector<256x16xf32> -> vector<256x16xf32>
    %33 = arith.addf %27, %32 : vector<256x16xf32>
    %c0_51 = arith.constant 0 : index
    %c1_52 = arith.constant 1 : index
    %c0_53 = arith.constant 0 : index
    %c0_54 = arith.constant 0 : index
    %34 = vector.load %arg7[%c0_51, %c1_52, %c0_53, %c0_54] : memref<1x18x18x4xf32, #tpu.memory_space<vmem>>, vector<1x16x16x4xf32>
    %35 = vector.shape_cast %34 : vector<1x16x16x4xf32> to vector<256x4xf32>
    %c3 = arith.constant 3 : index
    %c0_55 = arith.constant 0 : index
    %c0_56 = arith.constant 0 : index
    %36 = vector.load %arg4[%c3, %c0_55, %c0_56] : memref<9x4x16xf32, #tpu.memory_space<vmem>>, vector<1x4x16xf32>
    %37 = vector.shape_cast %36 : vector<1x4x16xf32> to vector<4x16xf32>
    %cst_57 = arith.constant dense<0.000000e+00> : vector<256x16xf32>
    %38 = tpu.matmul %35, %37, %cst_57 {dimension_numbers = #tpu.dot_dimension_numbers<[1], [0], [0], [1], [0, 0, 1, 1], [], []>} : vector<256x4xf32>, vector<4x16xf32>, vector<256x16xf32> -> vector<256x16xf32>
    %39 = arith.addf %33, %38 : vector<256x16xf32>
    %c0_58 = arith.constant 0 : index
    %c1_59 = arith.constant 1 : index
    %c1_60 = arith.constant 1 : index
    %c0_61 = arith.constant 0 : index
    %40 = vector.load %arg7[%c0_58, %c1_59, %c1_60, %c0_61] : memref<1x18x18x4xf32, #tpu.memory_space<vmem>>, vector<1x16x16x4xf32>
    %41 = vector.shape_cast %40 : vector<1x16x16x4xf32> to vector<256x4xf32>
    %c4 = arith.constant 4 : index
    %c0_62 = arith.constant 0 : index
    %c0_63 = arith.constant 0 : index
    %42 = vector.load %arg4[%c4, %c0_62, %c0_63] : memref<9x4x16xf32, #tpu.memory_space<vmem>>, vector<1x4x16xf32>
    %43 = vector.shape_cast %42 : vector<1x4x16xf32> to vector<4x16xf32>
    %cst_64 = arith.constant dense<0.000000e+00> : vector<256x16xf32>
    %44 = tpu.matmul %41, %43, %cst_64 {dimension_numbers = #tpu.dot_dimension_numbers<[1], [0], [0], [1], [0, 0, 1, 1], [], []>} : vector<256x4xf32>, vector<4x16xf32>, vector<256x16xf32> -> vector<256x16xf32>
    %45 = arith.addf %39, %44 : vector<256x16xf32>
    %c0_65 = arith.constant 0 : index
    %c1_66 = arith.constant 1 : index
    %c2_67 = arith.constant 2 : index
    %c0_68 = arith.constant 0 : index
    %46 = vector.load %arg7[%c0_65, %c1_66, %c2_67, %c0_68] : memref<1x18x18x4xf32, #tpu.memory_space<vmem>>, vector<1x16x16x4xf32>
    %47 = vector.shape_cast %46 : vector<1x16x16x4xf32> to vector<256x4xf32>
    %c5 = arith.constant 5 : index
    %c0_69 = arith.constant 0 : index
    %c0_70 = arith.constant 0 : index
    %48 = vector.load %arg4[%c5, %c0_69, %c0_70] : memref<9x4x16xf32, #tpu.memory_space<vmem>>, vector<1x4x16xf32>
    %49 = vector.shape_cast %48 : vector<1x4x16xf32> to vector<4x16xf32>
    %cst_71 = arith.constant dense<0.000000e+00> : vector<256x16xf32>
    %50 = tpu.matmul %47, %49, %cst_71 {dimension_numbers = #tpu.dot_dimension_numbers<[1], [0], [0], [1], [0, 0, 1, 1], [], []>} : vector<256x4xf32>, vector<4x16xf32>, vector<256x16xf32> -> vector<256x16xf32>
    %51 = arith.addf %45, %50 : vector<256x16xf32>
    %c0_72 = arith.constant 0 : index
    %c2_73 = arith.constant 2 : index
    %c0_74 = arith.constant 0 : index
    %c0_75 = arith.constant 0 : index
    %52 = vector.load %arg7[%c0_72, %c2_73, %c0_74, %c0_75] : memref<1x18x18x4xf32, #tpu.memory_space<vmem>>, vector<1x16x16x4xf32>
    %53 = vector.shape_cast %52 : vector<1x16x16x4xf32> to vector<256x4xf32>
    %c6 = arith.constant 6 : index
    %c0_76 = arith.constant 0 : index
    %c0_77 = arith.constant 0 : index
    %54 = vector.load %arg4[%c6, %c0_76, %c0_77] : memref<9x4x16xf32, #tpu.memory_space<vmem>>, vector<1x4x16xf32>
    %55 = vector.shape_cast %54 : vector<1x4x16xf32> to vector<4x16xf32>
    %cst_78 = arith.constant dense<0.000000e+00> : vector<256x16xf32>
    %56 = tpu.matmul %53, %55, %cst_78 {dimension_numbers = #tpu.dot_dimension_numbers<[1], [0], [0], [1], [0, 0, 1, 1], [], []>} : vector<256x4xf32>, vector<4x16xf32>, vector<256x16xf32> -> vector<256x16xf32>
    %57 = arith.addf %51, %56 : vector<256x16xf32>
    %c0_79 = arith.constant 0 : index
    %c2_80 = arith.constant 2 : index
    %c1_81 = arith.constant 1 : index
    %c0_82 = arith.constant 0 : index
    %58 = vector.load %arg7[%c0_79, %c2_80, %c1_81, %c0_82] : memref<1x18x18x4xf32, #tpu.memory_space<vmem>>, vector<1x16x16x4xf32>
    %59 = vector.shape_cast %58 : vector<1x16x16x4xf32> to vector<256x4xf32>
    %c7 = arith.constant 7 : index
    %c0_83 = arith.constant 0 : index
    %c0_84 = arith.constant 0 : index
    %60 = vector.load %arg4[%c7, %c0_83, %c0_84] : memref<9x4x16xf32, #tpu.memory_space<vmem>>, vector<1x4x16xf32>
    %61 = vector.shape_cast %60 : vector<1x4x16xf32> to vector<4x16xf32>
    %cst_85 = arith.constant dense<0.000000e+00> : vector<256x16xf32>
    %62 = tpu.matmul %59, %61, %cst_85 {dimension_numbers = #tpu.dot_dimension_numbers<[1], [0], [0], [1], [0, 0, 1, 1], [], []>} : vector<256x4xf32>, vector<4x16xf32>, vector<256x16xf32> -> vector<256x16xf32>
    %63 = arith.addf %57, %62 : vector<256x16xf32>
    %c0_86 = arith.constant 0 : index
    %c2_87 = arith.constant 2 : index
    %c2_88 = arith.constant 2 : index
    %c0_89 = arith.constant 0 : index
    %64 = vector.load %arg7[%c0_86, %c2_87, %c2_88, %c0_89] : memref<1x18x18x4xf32, #tpu.memory_space<vmem>>, vector<1x16x16x4xf32>
    %65 = vector.shape_cast %64 : vector<1x16x16x4xf32> to vector<256x4xf32>
    %c8 = arith.constant 8 : index
    %c0_90 = arith.constant 0 : index
    %c0_91 = arith.constant 0 : index
    %66 = vector.load %arg4[%c8, %c0_90, %c0_91] : memref<9x4x16xf32, #tpu.memory_space<vmem>>, vector<1x4x16xf32>
    %67 = vector.shape_cast %66 : vector<1x4x16xf32> to vector<4x16xf32>
    %cst_92 = arith.constant dense<0.000000e+00> : vector<256x16xf32>
    %68 = tpu.matmul %65, %67, %cst_92 {dimension_numbers = #tpu.dot_dimension_numbers<[1], [0], [0], [1], [0, 0, 1, 1], [], []>} : vector<256x4xf32>, vector<4x16xf32>, vector<256x16xf32> -> vector<256x16xf32>
    %69 = arith.addf %63, %68 : vector<256x16xf32>
    %c0_93 = arith.constant 0 : index
    %c0_94 = arith.constant 0 : index
    %70 = vector.load %arg5[%c0_93, %c0_94] : memref<1x16xf32, #tpu.memory_space<vmem>>, vector<1x16xf32>
    %71 = vector.broadcast %70 : vector<1x16xf32> to vector<256x16xf32>
    %72 = arith.addf %69, %71 : vector<256x16xf32>
    %cst_95 = arith.constant 0.000000e+00 : f32
    %73 = vector.broadcast %cst_95 : f32 to vector<256x16xf32>
    %74 = arith.maximumf %72, %73 : vector<256x16xf32>
    %75 = vector.shape_cast %74 : vector<256x16xf32> to vector<1x16x16x16xf32>
    %c0_96 = arith.constant 0 : index
    %c0_97 = arith.constant 0 : index
    %c0_98 = arith.constant 0 : index
    %c0_99 = arith.constant 0 : index
    %76 = vector.load %arg6[%c0_96, %c0_97, %c0_98, %c0_99] : memref<1x16x16x16xf32, #tpu.memory_space<vmem>>, vector<1x16x16x16xf32>
    tpu.vector_store %arg6[%c0_96, %c0_97, %c0_98, %c0_99], %75 {strides = array<i32>} : memref<1x16x16x16xf32, #tpu.memory_space<vmem>>, vector<1x16x16x16xf32>,
    return
  }
  func.func @transform_0(%arg0: i32) -> (i32, i32, i32, i32) {
    %c0_i32 = arith.constant 0 : i32
    %c0_i32_0 = arith.constant 0 : i32
    %c0_i32_1 = arith.constant 0 : i32
    %c0_i32_2 = arith.constant 0 : i32
    return %arg0, %c0_i32, %c0_i32_0, %c0_i32_1 : i32, i32, i32, i32
  }
  func.func @transform_1(%arg0: i32) -> (i32, i32) {
    %c0_i32 = arith.constant 0 : i32
    %c0_i32_0 = arith.constant 0 : i32
    %c0_i32_1 = arith.constant 0 : i32
    return %c0_i32, %c0_i32_0 : i32, i32
  }
  func.func @transform_2(%arg0: i32) -> (i32, i32) {
    %c0_i32 = arith.constant 0 : i32
    %c0_i32_0 = arith.constant 0 : i32
    %c0_i32_1 = arith.constant 0 : i32
    return %c0_i32, %c0_i32_0 : i32, i32
  }
  func.func @transform_3(%arg0: i32) -> (i32, i32, i32) {
    %c0_i32 = arith.constant 0 : i32
    %c0_i32_0 = arith.constant 0 : i32
    %c0_i32_1 = arith.constant 0 : i32
    %c0_i32_2 = arith.constant 0 : i32
    return %c0_i32, %c0_i32_0, %c0_i32_1 : i32, i32, i32
  }
  func.func @transform_4(%arg0: i32) -> (i32, i32) {
    %c0_i32 = arith.constant 0 : i32
    %c0_i32_0 = arith.constant 0 : i32
    %c0_i32_1 = arith.constant 0 : i32
    return %c0_i32, %c0_i32_0 : i32, i32
  }
  func.func @transform_5(%arg0: i32) -> (i32, i32, i32, i32) {
    %c0_i32 = arith.constant 0 : i32
    %c0_i32_0 = arith.constant 0 : i32
    %c0_i32_1 = arith.constant 0 : i32
    %c0_i32_2 = arith.constant 0 : i32
    return %arg0, %c0_i32, %c0_i32_0, %c0_i32_1 : i32, i32, i32, i32
  }
}

</mosaic_0001>

<llo_original>
// kernel: tpu_custom_call.1
$region0: #{tpu_custom_call.1}
  #allocation0 [shape = 'u32[]', space=smem, size = 0x4, offset = 0x4, fixed_abs, tag = 'smem constant byte address 0x4 - core index']
  #allocation1 [shape = 'u32[144,128]{1,0:T(1,128)}', space=vmem, size = 0x12000, scoped, tag = 'internal scratch']
  #allocation2 [shape = 'f32[1,18,18,4]{3,2,1,0:T(8,128)}', space=vmem, size = 0x36000, scoped, tag = 'scratch operand']
  %s0 = inlined_call_operand.vmem [shape: f32[2,16,16,8], index: 0, kind: input, shape index: {}]
  %s1 = inlined_call_operand.vmem [shape: f32[8,4], index: 1, kind: input, shape index: {}]
  %s2 = inlined_call_operand.vmem [shape: f32[1,4], index: 2, kind: input, shape index: {}]
  %s3 = inlined_call_operand.vmem [shape: f32[9,4,16], index: 3, kind: input, shape index: {}]
  %s4 = inlined_call_operand.vmem [shape: f32[1,16], index: 4, kind: input, shape index: {}]
  %s5 = inlined_call_operand.hbm [shape: f32[2,16,16,16], index: 5, kind: output, shape index: {}]
  %s6 = sld [smem:[#allocation0]]
  $region53: #{tpu_custom_call.1} parent=0
    _
  %s8 = ssub.s32 1, %s6
  %s9 = scalar_select 0, %s8, %s6
  $region1: #{tpu_custom_call.1} parent=0
    #allocation3 [shape = 'u8[262144]{0}', space=vmem, size = 0x40000, scoped, tag = 'output window, operand 0']
    #allocation4 [shape = 's32[2]{0}', space=sflag, size = 0x8, scoped, tag = 'scoped memory for tpu_custom_call.1']
    %10 = vsyncpa [#allocation4], 0
    %s11 = scalar_lea.sflag [#allocation4], 1
    %12 = vsyncpa %s11, 0
    loop: start=0, step=1, limit=4
    $region2: #{tpu_custom_call.1} parent=1 // loop_pre_header
      _
    $region3: #{tpu_custom_call.1} parent=1 // loop_header
      %s14 = sphi 0, %s18
      %p15 = scmp.ge.s32.totalorder %s14, 4
      %s24 = sphi 0, %s26
      %s27 = sphi 0, %s24
      %s28 = sphi 0, %s27
      %s44 = sphi 0, %s28
      %s48 = sphi 0, %s48
      %s50 = sphi 0, %s48
      %s51 = sphi 0, %s50
      %s65 = sphi 0, %s51
      %s69 = sphi 0, %s69
      %s71 = sphi 0, %s69
      %s72 = sphi 0, %s71
      %s86 = sphi 0, %s72
      %s90 = sphi 0, %s90
      %s92 = sphi 0, %s90
      %s93 = sphi 0, %s92
      %s107 = sphi 0, %s93
      %s111 = sphi 0, %s111
      %s113 = sphi 0, %s111
      %s114 = sphi 0, %s113
      %s128 = sphi 0, %s114
      %s134 = sphi 0, %s136
      %s137 = sphi 0, %s134
      %s138 = sphi 0, %s137
      %s154 = sphi 0, %s138
    $region4: #{tpu_custom_call.1} parent=1 // loop_header_branch
      %17 = sbr.rel (%p15) target = $region8
    $region5: #{tpu_custom_call.1} parent=1 // loop_body
      %s19 = ssub.s32 %s14, 1
      %s20 = ssub.s32 %s14, 2
      %s21 = sadd.s32 %s14, 1
      %s22 = ssub.s32 %s14, %s21
      %p23 = scmp.eq.s32.totalorder %s22, 0
      %s25 = sadd.s32 %s24, 1
      %s26 = scalar_select %p23, %s24, %s25
      %p29 = pneg %p23
      %p30 = scmp.eq.s32.totalorder %s14, 1
      %p31 = por %p29, %p30
      %p32 = scmp.ne.s32.totalorder %s24, %s27
      %p33 = scmp.eq.s32.totalorder %s14, 0
      %p34 = por %p32, %p33
      %p35 = scmp.ne.s32.totalorder %s24, %s27
      %p36 = scmp.eq.s32.totalorder %s19, 1
      %p37 = por %p35, %p36
      %p38 = scmp.ne.s32.totalorder %s27, %s28
      %p39 = scmp.eq.s32.totalorder %s19, 0
      %p40 = por %p38, %p39
      %p41 = scmp.ne.s32.totalorder %s27, %s28
      %p42 = scmp.eq.s32.totalorder %s20, 1
      %p43 = por %p41, %p42
      %p45 = scmp.ne.s32.totalorder %s28, %s44
      %p46 = scmp.eq.s32.totalorder %s20, 0
      %p47 = por %p45, %p46
      %s49 = sadd.s32 %s48, 1
      %p52 = scmp.eq.s32.totalorder %s14, 1
      %p53 = scmp.ne.s32.totalorder %s48, %s50
      %p54 = scmp.eq.s32.totalorder %s14, 0
      %p55 = por %p53, %p54
      %p56 = scmp.ne.s32.totalorder %s48, %s50
      %p57 = scmp.eq.s32.totalorder %s19, 1
      %p58 = por %p56, %p57
      %p59 = scmp.ne.s32.totalorder %s50, %s51
      %p60 = scmp.eq.s32.totalorder %s19, 0
      %p61 = por %p59, %p60
      %p62 = scmp.ne.s32.totalorder %s50, %s51
      %p63 = scmp.eq.s32.totalorder %s20, 1
      %p64 = por %p62, %p63
      %p66 = scmp.ne.s32.totalorder %s51, %s65
      %p67 = scmp.eq.s32.totalorder %s20, 0
      %p68 = por %p66, %p67
      %s70 = sadd.s32 %s69, 1
      %p73 = scmp.eq.s32.totalorder %s14, 1
      %p74 = scmp.ne.s32.totalorder %s69, %s71
      %p75 = scmp.eq.s32.totalorder %s14, 0
      %p76 = por %p74, %p75
      %p77 = scmp.ne.s32.totalorder %s69, %s71
      %p78 = scmp.eq.s32.totalorder %s19, 1
      %p79 = por %p77, %p78
      %p80 = scmp.ne.s32.totalorder %s71, %s72
      %p81 = scmp.eq.s32.totalorder %s19, 0
      %p82 = por %p80, %p81
      %p83 = scmp.ne.s32.totalorder %s71, %s72
      %p84 = scmp.eq.s32.totalorder %s20, 1
      %p85 = por %p83, %p84
      %p87 = scmp.ne.s32.totalorder %s72, %s86
      %p88 = scmp.eq.s32.totalorder %s20, 0
      %p89 = por %p87, %p88
      %s91 = sadd.s32 %s90, 1
      %p94 = scmp.eq.s32.totalorder %s14, 1
      %p95 = scmp.ne.s32.totalorder %s90, %s92
      %p96 = scmp.eq.s32.totalorder %s14, 0
      %p97 = por %p95, %p96
      %p98 = scmp.ne.s32.totalorder %s90, %s92
      %p99 = scmp.eq.s32.totalorder %s19, 1
      %p100 = por %p98, %p99
      %p101 = scmp.ne.s32.totalorder %s92, %s93
      %p102 = scmp.eq.s32.totalorder %s19, 0
      %p103 = por %p101, %p102
      %p104 = scmp.ne.s32.totalorder %s92, %s93
      %p105 = scmp.eq.s32.totalorder %s20, 1
      %p106 = por %p104, %p105
      %p108 = scmp.ne.s32.totalorder %s93, %s107
      %p109 = scmp.eq.s32.totalorder %s20, 0
      %p110 = por %p108, %p109
      %s112 = sadd.s32 %s111, 1
      %p115 = scmp.eq.s32.totalorder %s14, 1
      %p116 = scmp.ne.s32.totalorder %s111, %s113
      %p117 = scmp.eq.s32.totalorder %s14, 0
      %p118 = por %p116, %p117
      %p119 = scmp.ne.s32.totalorder %s111, %s113
      %p120 = scmp.eq.s32.totalorder %s19, 1
      %p121 = por %p119, %p120
      %p122 = scmp.ne.s32.totalorder %s113, %s114
      %p123 = scmp.eq.s32.totalorder %s19, 0
      %p124 = por %p122, %p123
      %p125 = scmp.ne.s32.totalorder %s113, %s114
      %p126 = scmp.eq.s32.totalorder %s20, 1
      %p127 = por %p125, %p126
      %p129 = scmp.ne.s32.totalorder %s114, %s128
      %p130 = scmp.eq.s32.totalorder %s20, 0
      %p131 = por %p129, %p130
      %s132 = ssub.s32 %s14, %s21
      %p133 = scmp.eq.s32.totalorder %s132, 0
      %s135 = sadd.s32 %s134, 1
      %s136 = scalar_select %p133, %s134, %s135
      %p139 = pneg %p133
      %p140 = scmp.eq.s32.totalorder %s14, 1
      %p141 = por %p139, %p140
      %p142 = scmp.ne.s32.totalorder %s134, %s137
      %p143 = scmp.eq.s32.totalorder %s14, 0
      %p144 = por %p142, %p143
      %p145 = scmp.ne.s32.totalorder %s134, %s137
      %p146 = scmp.eq.s32.totalorder %s19, 1
      %p147 = por %p145, %p146
      %p148 = scmp.ne.s32.totalorder %s137, %s138
      %p149 = scmp.eq.s32.totalorder %s19, 0
      %p150 = por %p148, %p149
      %p151 = scmp.ne.s32.totalorder %s137, %s138
      %p152 = scmp.eq.s32.totalorder %s20, 1
      %p153 = por %p151, %p152
      %p155 = scmp.ne.s32.totalorder %s138, %s154
      %p156 = scmp.eq.s32.totalorder %s20, 0
      %p157 = por %p155, %p156
      %p158 = scmp.le.s32.totalorder 1, %s14
      %p159 = scmp.lt.s32.totalorder %s14, 3
      %p160 = pnand %p158, %p159
      %p161 = pneg %p160
      // Predicated region
      $region9: #{tpu_custom_call.1} parent=5 // pred_check
        _
      $region10: #{tpu_custom_call.1} parent=5 // pred_check_branch
        %163 = sbr.rel (%p160) target = $region12
      $region11: #{tpu_custom_call.1} parent=5 // pred_region
        %s164 = ssub.s32 %s14, 1
        // Predicated region
        $region13: #{tpu_custom_call.1} parent=11 // pred_check
          %p165 = pneg %p61
        $region14: #{tpu_custom_call.1} parent=11 // pred_check_branch
          %167 = sbr.rel (%p165) target = $region16
        $region15: #{tpu_custom_call.1} parent=11 // pred_region
          _
        $region16: #{tpu_custom_call.1} parent=11 // pred_fallthru
          _
        // Predicated region
        $region17: #{tpu_custom_call.1} parent=11 // pred_check
          %p168 = pneg %p82
        $region18: #{tpu_custom_call.1} parent=11 // pred_check_branch
          %170 = sbr.rel (%p168) target = $region20
        $region19: #{tpu_custom_call.1} parent=11 // pred_region
          _
        $region20: #{tpu_custom_call.1} parent=11 // pred_fallthru
          _
        // Predicated region
        $region21: #{tpu_custom_call.1} parent=11 // pred_check
          %p171 = pneg %p103
        $region22: #{tpu_custom_call.1} parent=11 // pred_check_branch
          %173 = sbr.rel (%p171) target = $region24
        $region23: #{tpu_custom_call.1} parent=11 // pred_region
          _
        $region24: #{tpu_custom_call.1} parent=11 // pred_fallthru
          _
        // Predicated region
        $region25: #{tpu_custom_call.1} parent=11 // pred_check
          %p174 = pneg %p124
        $region26: #{tpu_custom_call.1} parent=11 // pred_check_branch
          %176 = sbr.rel (%p174) target = $region28
        $region27: #{tpu_custom_call.1} parent=11 // pred_region
          _
        $region28: #{tpu_custom_call.1} parent=11 // pred_fallthru
          _
      $region12: #{tpu_custom_call.1} parent=5 // pred_fallthru
        _
      %p177 = scmp.lt.s32.totalorder %s14, 2
      // Predicated region
      $region29: #{tpu_custom_call.1} parent=5 // pred_check
        %p178 = pneg %p177
      $region30: #{tpu_custom_call.1} parent=5 // pred_check_branch
        %180 = sbr.rel (%p178) target = $region32
      $region31: #{tpu_custom_call.1} parent=5 // pred_region
        // Predicated region
        $region33: #{tpu_custom_call.1} parent=31 // pred_check
          %p181 = pneg %p34
        $region34: #{tpu_custom_call.1} parent=31 // pred_check_branch
          %183 = sbr.rel (%p181) target = $region36
        $region35: #{tpu_custom_call.1} parent=31 // pred_region
          %p184 = scmp.lt.s32.totalorder %s14, 1
          %s185 = scalar_select %p184, %s14, 1
          %s186 = smul.addr %s185, 32
          %s187 = smul.addr %s186, 8
          %s188 = scalar_lea.vmem %s0, %s187
        $region36: #{tpu_custom_call.1} parent=31 // pred_fallthru
          _
      $region32: #{tpu_custom_call.1} parent=5 // pred_fallthru
        _
      %p189 = scmp.le.s32.totalorder 1, %s14
      %p190 = scmp.lt.s32.totalorder %s14, 3
      %p191 = pnand %p189, %p190
      %p192 = pneg %p191
      // Predicated region
      $region37: #{tpu_custom_call.1} parent=5 // pred_check
        _
      $region38: #{tpu_custom_call.1} parent=5 // pred_check_branch
        %194 = sbr.rel (%p191) target = $region40
      $region39: #{tpu_custom_call.1} parent=5 // pred_region
        %s195 = ssub.s32 %s14, 1
        %p196 = scmp.lt.s32.totalorder %s19, 1
        %s197 = scalar_select %p196, %s19, 1
        %s198 = smul.addr %s197, 32
        %s199 = smul.addr %s198, 8
        %s200 = scalar_lea.vmem %s0, %s199
        %p201 = pneg %p40
        %p202 = pneg %p37
        %p203 = pneg %p61
        %p204 = pneg %p58
        %p205 = pneg %p82
        %p206 = pneg %p79
        %p207 = pneg %p103
        %p208 = pneg %p100
        %p209 = pneg %p124
        %p210 = pneg %p121
        %p211 = pneg %p150
        %p212 = pneg %p147
        %s213 = sand.u32 %s137, 1
        %s214 = scalar_lea.sflag [#allocation4], %s213
        %s215 = sand.u32 %s137, 1
        %s216 = smul.addr %s215, 256
        %s217 = scalar_lea.vmem [#allocation3], %s216
        %p218 = scmp.lt.s32.totalorder %s19, 1
        %s219 = scalar_select %p218, %s19, 1
        %s220 = smul.addr %s219, 32
        %s221 = smul.addr %s220, 8
        %s222 = scalar_lea.vmem %s0, %s221
        %v223 = vld [vmem:[%s222] sm:$0xff]
        %v224 = vld [vmem:[%s222 + $0x8] sm:$0xff]
        %v225 = vld [vmem:[%s222 + $0x10] sm:$0xff]
        %v226 = vld [vmem:[%s222 + $0x18] sm:$0xff]
        %v227 = vld [vmem:[%s222 + $0x20] sm:$0xff]
        %v228 = vld [vmem:[%s222 + $0x28] sm:$0xff]
        %v229 = vld [vmem:[%s222 + $0x30] sm:$0xff]
        %v230 = vld [vmem:[%s222 + $0x38] sm:$0xff]
        %v231 = vld [vmem:[%s222 + $0x40] sm:$0xff]
        %v232 = vld [vmem:[%s222 + $0x48] sm:$0xff]
        %v233 = vld [vmem:[%s222 + $0x50] sm:$0xff]
        %v234 = vld [vmem:[%s222 + $0x58] sm:$0xff]
        %v235 = vld [vmem:[%s222 + $0x60] sm:$0xff]
        %v236 = vld [vmem:[%s222 + $0x68] sm:$0xff]
        %v237 = vld [vmem:[%s222 + $0x70] sm:$0xff]
        %v238 = vld [vmem:[%s222 + $0x78] sm:$0xff]
        %v239 = vld [vmem:[%s222 + $0x80] sm:$0xff]
        %v240 = vld [vmem:[%s222 + $0x88] sm:$0xff]
        %v241 = vld [vmem:[%s222 + $0x90] sm:$0xff]
        %v242 = vld [vmem:[%s222 + $0x98] sm:$0xff]
        %v243 = vld [vmem:[%s222 + $0xa0] sm:$0xff]
        %v244 = vld [vmem:[%s222 + $0xa8] sm:$0xff]
        %v245 = vld [vmem:[%s222 + $0xb0] sm:$0xff]
        %v246 = vld [vmem:[%s222 + $0xb8] sm:$0xff]
        %v247 = vld [vmem:[%s222 + $0xc0] sm:$0xff]
        %v248 = vld [vmem:[%s222 + $0xc8] sm:$0xff]
        %v249 = vld [vmem:[%s222 + $0xd0] sm:$0xff]
        %v250 = vld [vmem:[%s222 + $0xd8] sm:$0xff]
        %v251 = vld [vmem:[%s222 + $0xe0] sm:$0xff]
        %v252 = vld [vmem:[%s222 + $0xe8] sm:$0xff]
        %v253 = vld [vmem:[%s222 + $0xf0] sm:$0xff]
        %v254 = vld [vmem:[%s222 + $0xf8] sm:$0xff]
        %v255 = vld [vmem:[%s1] sm:$0xff]
        %v256 = vld [vmem:[%s2] sm:$0x1]
        %v258 = vlaneseq
        %v259 = vshrl.u32 %v258, 7
        %v260 = vsub.s32 0, %v259
        %v261 = vrot.slane %v256, %v260
        %vm263 = vcmask 64512
        %v265 = vsel %vm263, %v223, 0
        %v268 = vsel %vm263, %v224, 0
        %v271 = vsel %vm263, %v225, 0
        %v274 = vsel %vm263, %v226, 0
        %v277 = vsel %vm263, %v227, 0
        %v280 = vsel %vm263, %v228, 0
        %v283 = vsel %vm263, %v229, 0
        %v286 = vsel %vm263, %v230, 0
        %v289 = vsel %vm263, %v231, 0
        %v292 = vsel %vm263, %v232, 0
        %v295 = vsel %vm263, %v233, 0
        %v298 = vsel %vm263, %v234, 0
        %v301 = vsel %vm263, %v235, 0
        %v304 = vsel %vm263, %v236, 0
        %v307 = vsel %vm263, %v237, 0
        %v310 = vsel %vm263, %v238, 0
        %v313 = vsel %vm263, %v239, 0
        %v316 = vsel %vm263, %v240, 0
        %v319 = vsel %vm263, %v241, 0
        %v322 = vsel %vm263, %v242, 0
        %v325 = vsel %vm263, %v243, 0
        %v328 = vsel %vm263, %v244, 0
        %v331 = vsel %vm263, %v245, 0
        %v334 = vsel %vm263, %v246, 0
        %v337 = vsel %vm263, %v247, 0
        %v340 = vsel %vm263, %v248, 0
        %v343 = vsel %vm263, %v249, 0
        %v346 = vsel %vm263, %v250, 0
        %v349 = vsel %vm263, %v251, 0
        %v352 = vsel %vm263, %v252, 0
        %v355 = vsel %vm263, %v253, 0
        %v358 = vsel %vm263, %v254, 0
        %360 = vmatprep.subr.mxu0 0.0
        %361 = vmatpush1.msra.mxu0 0.0
        %362 = vmatprep.subr.mxu0 0.0
        %363 = vmatpush1.msra.mxu0 0.0
        %364 = vmatprep.subr.mxu0 0.0
        %365 = vmatpush1.msra.mxu0 0.0
        %366 = vmatprep.subr.mxu0 0.0
        %367 = vmatpush1.msra.mxu0 0.0
        %368 = vmatprep.subr.mxu0 0.0
        %369 = vmatpush1.msra.mxu0 0.0
        %370 = vmatprep.subr.mxu0 0.0
        %371 = vmatpush1.msra.mxu0 0.0
        %372 = vmatprep.subr.mxu0 0.0
        %373 = vmatpush1.msra.mxu0 0.0
        %374 = vmatprep.subr.mxu0 0.0
        %375 = vmatpush1.msra.mxu0 0.0
        %376 = vmatprep.subr.mxu0 0.0
        %377 = vmatpush1.msra.mxu0 0.0
        %378 = vmatprep.subr.mxu0 0.0
        %379 = vmatpush1.msra.mxu0 0.0
        %380 = vmatprep.subr.mxu0 0.0
        %381 = vmatpush1.msra.mxu0 0.0
        %382 = vmatprep.subr.mxu0 0.0
        %383 = vmatpush1.msra.mxu0 0.0
        %384 = vmatprep.subr.mxu0 0.0
        %385 = vmatpush1.msra.mxu0 0.0
        %386 = vmatprep.subr.mxu0 0.0
        %387 = vmatpush1.msra.mxu0 0.0
        %388 = vmatprep.subr.mxu0 0.0
        %389 = vmatpush1.msra.mxu0 0.0
        %390 = vmatprep.subr.mxu0 0.0
        %391 = vmatpush1.msra.mxu0 %v255
        %392 = vmatprep.subr.mxu0 0.0
        %393 = vmatpush2.msra.mxu0 0.0
        %394 = vmatprep.subr.mxu0 0.0
        %395 = vmatpush2.msra.mxu0 0.0
        %396 = vmatprep.subr.mxu0 0.0
        %397 = vmatpush2.msra.mxu0 0.0
        %398 = vmatprep.subr.mxu0 0.0
        %399 = vmatpush2.msra.mxu0 0.0
        %400 = vmatprep.subr.mxu0 0.0
        %401 = vmatpush2.msra.mxu0 0.0
        %402 = vmatprep.subr.mxu0 0.0
        %403 = vmatpush2.msra.mxu0 0.0
        %404 = vmatprep.subr.mxu0 0.0
        %405 = vmatpush2.msra.mxu0 0.0
        %406 = vmatprep.subr.mxu0 0.0
        %407 = vmatpush2.msra.mxu0 0.0
        %408 = vmatprep.subr.mxu0 0.0
        %409 = vmatpush2.msra.mxu0 0.0
        %410 = vmatprep.subr.mxu0 0.0
        %411 = vmatpush2.msra.mxu0 0.0
        %412 = vmatprep.subr.mxu0 0.0
        %413 = vmatpush2.msra.mxu0 0.0
        %414 = vmatprep.subr.mxu0 0.0
        %415 = vmatpush2.msra.mxu0 0.0
        %416 = vmatprep.subr.mxu0 0.0
        %417 = vmatpush2.msra.mxu0 0.0
        %418 = vmatprep.subr.mxu0 0.0
        %419 = vmatpush2.msra.mxu0 0.0
        %420 = vmatprep.subr.mxu0 0.0
        %421 = vmatpush2.msra.mxu0 0.0
        %422 = vmatprep.subr.mxu0 0.0
        %423 = vmatpush2.msra.mxu0 0.0
        %424 = vmatprep.mubr.f32.mxu0 0.0
        %425 = vmatmul.mubr.f32.gmra.mxu0 %v265
        %v426 = vpop.f32.mrf.mxu0
        %v427 = vadd.f32 %v261, %v426
        %v428 = vpop.f32.mrf.mxu0
        %429 = vmatprep.mubr.f32.mxu0 0.0
        %430 = vmatmul.mubr.f32.gmra.mxu0 %v268
        %v431 = vpop.f32.mrf.mxu0
        %v432 = vadd.f32 %v261, %v431
        %v433 = vpop.f32.mrf.mxu0
        %434 = vmatprep.mubr.f32.mxu0 0.0
        %435 = vmatmul.mubr.f32.gmra.mxu0 %v271
        %v436 = vpop.f32.mrf.mxu0
        %v437 = vadd.f32 %v261, %v436
        %v438 = vpop.f32.mrf.mxu0
        %439 = vmatprep.mubr.f32.mxu0 0.0
        %440 = vmatmul.mubr.f32.gmra.mxu0 %v274
        %v441 = vpop.f32.mrf.mxu0
        %v442 = vadd.f32 %v261, %v441
        %v443 = vpop.f32.mrf.mxu0
        %444 = vmatprep.mubr.f32.mxu0 0.0
        %445 = vmatmul.mubr.f32.gmra.mxu0 %v277
        %v446 = vpop.f32.mrf.mxu0
        %v447 = vadd.f32 %v261, %v446
        %v448 = vpop.f32.mrf.mxu0
        %449 = vmatprep.mubr.f32.mxu0 0.0
        %450 = vmatmul.mubr.f32.gmra.mxu0 %v280
        %v451 = vpop.f32.mrf.mxu0
        %v452 = vadd.f32 %v261, %v451
        %v453 = vpop.f32.mrf.mxu0
        %454 = vmatprep.mubr.f32.mxu0 0.0
        %455 = vmatmul.mubr.f32.gmra.mxu0 %v283
        %v456 = vpop.f32.mrf.mxu0
        %v457 = vadd.f32 %v261, %v456
        %v458 = vpop.f32.mrf.mxu0
        %459 = vmatprep.mubr.f32.mxu0 0.0
        %460 = vmatmul.mubr.f32.gmra.mxu0 %v286
        %v461 = vpop.f32.mrf.mxu0
        %v462 = vadd.f32 %v261, %v461
        %v463 = vpop.f32.mrf.mxu0
        %464 = vmatprep.mubr.f32.mxu0 0.0
        %465 = vmatmul.mubr.f32.gmra.mxu0 %v289
        %v466 = vpop.f32.mrf.mxu0
        %v467 = vadd.f32 %v261, %v466
        %v468 = vpop.f32.mrf.mxu0
        %469 = vmatprep.mubr.f32.mxu0 0.0
        %470 = vmatmul.mubr.f32.gmra.mxu0 %v292
        %v471 = vpop.f32.mrf.mxu0
        %v472 = vadd.f32 %v261, %v471
        %v473 = vpop.f32.mrf.mxu0
        %474 = vmatprep.mubr.f32.mxu0 0.0
        %475 = vmatmul.mubr.f32.gmra.mxu0 %v295
        %v476 = vpop.f32.mrf.mxu0
        %v477 = vadd.f32 %v261, %v476
        %v478 = vpop.f32.mrf.mxu0
        %479 = vmatprep.mubr.f32.mxu0 0.0
        %480 = vmatmul.mubr.f32.gmra.mxu0 %v298
        %v481 = vpop.f32.mrf.mxu0
        %v482 = vadd.f32 %v261, %v481
        %v483 = vpop.f32.mrf.mxu0
        %484 = vmatprep.mubr.f32.mxu0 0.0
        %485 = vmatmul.mubr.f32.gmra.mxu0 %v301
        %v486 = vpop.f32.mrf.mxu0
        %v487 = vadd.f32 %v261, %v486
        %v488 = vpop.f32.mrf.mxu0
        %489 = vmatprep.mubr.f32.mxu0 0.0
        %490 = vmatmul.mubr.f32.gmra.mxu0 %v304
        %v491 = vpop.f32.mrf.mxu0
        %v492 = vadd.f32 %v261, %v491
        %v493 = vpop.f32.mrf.mxu0
        %494 = vmatprep.mubr.f32.mxu0 0.0
        %495 = vmatmul.mubr.f32.gmra.mxu0 %v307
        %v496 = vpop.f32.mrf.mxu0
        %v497 = vadd.f32 %v261, %v496
        %v498 = vpop.f32.mrf.mxu0
        %499 = vmatprep.mubr.f32.mxu0 0.0
        %500 = vmatmul.mubr.f32.gmra.mxu0 %v310
        %v501 = vpop.f32.mrf.mxu0
        %v502 = vadd.f32 %v261, %v501
        %v503 = vpop.f32.mrf.mxu0
        %504 = vmatprep.mubr.f32.mxu0 0.0
        %505 = vmatmul.mubr.f32.gmra.mxu0 %v313
        %v506 = vpop.f32.mrf.mxu0
        %v507 = vadd.f32 %v261, %v506
        %v508 = vpop.f32.mrf.mxu0
        %509 = vmatprep.mubr.f32.mxu0 0.0
        %510 = vmatmul.mubr.f32.gmra.mxu0 %v316
        %v511 = vpop.f32.mrf.mxu0
        %v512 = vadd.f32 %v261, %v511
        %v513 = vpop.f32.mrf.mxu0
        %514 = vmatprep.mubr.f32.mxu0 0.0
        %515 = vmatmul.mubr.f32.gmra.mxu0 %v319
        %v516 = vpop.f32.mrf.mxu0
        %v517 = vadd.f32 %v261, %v516
        %v518 = vpop.f32.mrf.mxu0
        %519 = vmatprep.mubr.f32.mxu0 0.0
        %520 = vmatmul.mubr.f32.gmra.mxu0 %v322
        %v521 = vpop.f32.mrf.mxu0
        %v522 = vadd.f32 %v261, %v521
        %v523 = vpop.f32.mrf.mxu0
        %524 = vmatprep.mubr.f32.mxu0 0.0
        %525 = vmatmul.mubr.f32.gmra.mxu0 %v325
        %v526 = vpop.f32.mrf.mxu0
        %v527 = vadd.f32 %v261, %v526
        %v528 = vpop.f32.mrf.mxu0
        %529 = vmatprep.mubr.f32.mxu0 0.0
        %530 = vmatmul.mubr.f32.gmra.mxu0 %v328
        %v531 = vpop.f32.mrf.mxu0
        %v532 = vadd.f32 %v261, %v531
        %v533 = vpop.f32.mrf.mxu0
        %534 = vmatprep.mubr.f32.mxu0 0.0
        %535 = vmatmul.mubr.f32.gmra.mxu0 %v331
        %v536 = vpop.f32.mrf.mxu0
        %v537 = vadd.f32 %v261, %v536
        %v538 = vpop.f32.mrf.mxu0
        %539 = vmatprep.mubr.f32.mxu0 0.0
        %540 = vmatmul.mubr.f32.gmra.mxu0 %v334
        %v541 = vpop.f32.mrf.mxu0
        %v542 = vadd.f32 %v261, %v541
        %v543 = vpop.f32.mrf.mxu0
        %544 = vmatprep.mubr.f32.mxu0 0.0
        %545 = vmatmul.mubr.f32.gmra.mxu0 %v337
        %v546 = vpop.f32.mrf.mxu0
        %v547 = vadd.f32 %v261, %v546
        %v548 = vpop.f32.mrf.mxu0
        %549 = vmatprep.mubr.f32.mxu0 0.0
        %550 = vmatmul.mubr.f32.gmra.mxu0 %v340
        %v551 = vpop.f32.mrf.mxu0
        %v552 = vadd.f32 %v261, %v551
        %v553 = vpop.f32.mrf.mxu0
        %554 = vmatprep.mubr.f32.mxu0 0.0
        %555 = vmatmul.mubr.f32.gmra.mxu0 %v343
        %v556 = vpop.f32.mrf.mxu0
        %v557 = vadd.f32 %v261, %v556
        %v558 = vpop.f32.mrf.mxu0
        %559 = vmatprep.mubr.f32.mxu0 0.0
        %560 = vmatmul.mubr.f32.gmra.mxu0 %v346
        %v561 = vpop.f32.mrf.mxu0
        %v562 = vadd.f32 %v261, %v561
        %v563 = vpop.f32.mrf.mxu0
        %564 = vmatprep.mubr.f32.mxu0 0.0
        %565 = vmatmul.mubr.f32.gmra.mxu0 %v349
        %v566 = vpop.f32.mrf.mxu0
        %v567 = vadd.f32 %v261, %v566
        %v568 = vpop.f32.mrf.mxu0
        %569 = vmatprep.mubr.f32.mxu0 0.0
        %570 = vmatmul.mubr.f32.gmra.mxu0 %v352
        %v571 = vpop.f32.mrf.mxu0
        %v572 = vadd.f32 %v261, %v571
        %v573 = vpop.f32.mrf.mxu0
        %574 = vmatprep.mubr.f32.mxu0 0.0
        %575 = vmatmul.mubr.f32.gmra.mxu0 %v355
        %v576 = vpop.f32.mrf.mxu0
        %v577 = vadd.f32 %v261, %v576
        %v578 = vpop.f32.mrf.mxu0
        %579 = vmatprep.mubr.f32.mxu0 0.0
        %580 = vmatmul.mubr.f32.gmra.mxu0 %v358
        %v581 = vpop.f32.mrf.mxu0
        %v582 = vadd.f32 %v261, %v581
        %v583 = vpop.f32.mrf.mxu0
        %584 = vdwg.mxu0
        %v585 = vmax.f32 %v427, 0.0
        %v586 = vmax.f32 %v432, 0.0
        %v587 = vmax.f32 %v437, 0.0
        %v588 = vmax.f32 %v442, 0.0
        %v589 = vmax.f32 %v447, 0.0
        %v590 = vmax.f32 %v452, 0.0
        %v591 = vmax.f32 %v457, 0.0
        %v592 = vmax.f32 %v462, 0.0
        %v593 = vmax.f32 %v467, 0.0
        %v594 = vmax.f32 %v472, 0.0
        %v595 = vmax.f32 %v477, 0.0
        %v596 = vmax.f32 %v482, 0.0
        %v597 = vmax.f32 %v487, 0.0
        %v598 = vmax.f32 %v492, 0.0
        %v599 = vmax.f32 %v497, 0.0
        %v600 = vmax.f32 %v502, 0.0
        %v601 = vmax.f32 %v507, 0.0
        %v602 = vmax.f32 %v512, 0.0
        %v603 = vmax.f32 %v517, 0.0
        %v604 = vmax.f32 %v522, 0.0
        %v605 = vmax.f32 %v527, 0.0
        %v606 = vmax.f32 %v532, 0.0
        %v607 = vmax.f32 %v537, 0.0
        %v608 = vmax.f32 %v542, 0.0
        %v609 = vmax.f32 %v547, 0.0
        %v610 = vmax.f32 %v552, 0.0
        %v611 = vmax.f32 %v557, 0.0
        %v612 = vmax.f32 %v562, 0.0
        %v613 = vmax.f32 %v567, 0.0
        %v614 = vmax.f32 %v572, 0.0
        %v615 = vmax.f32 %v577, 0.0
        %v616 = vmax.f32 %v582, 0.0
        %vm617 = vcmask 31744
        %618 = vst.msk [vmem:[#allocation2] sm:$0xff] %vm617, 0.0
        %619 = vst.msk [vmem:[#allocation2 + $0x8] sm:$0xff] %vm617, 0.0
        %vm620 = vcmask 25600
        %621 = vst.msk [vmem:[#allocation2 + $0x10] sm:$0x3] %vm620, 0.0
        %s622 = scalar_lea.vmem [#allocation2], 408
        %623 = vst.msk [vmem:[%s622] sm:$0xff] %vm617, 0.0
        %624 = vst.msk [vmem:[%s622 + $0x8] sm:$0xff] %vm617, 0.0
        %625 = vst.msk [vmem:[%s622 + $0x10] sm:$0x3] %vm620, 0.0
        %s626 = scalar_lea.vmem [#allocation2], 24
        %vm627 = vcmask 24576
        %628 = vst.msk [vmem:[%s626] sm:$0x1] %vm627, 0.0
        %629 = vst.msk [vmem:[%s626 + $0x18] sm:$0x1] %vm627, 0.0
        %630 = vst.msk [vmem:[%s626 + $0x30] sm:$0x1] %vm627, 0.0
        %631 = vst.msk [vmem:[%s626 + $0x48] sm:$0x1] %vm627, 0.0
        %632 = vst.msk [vmem:[%s626 + $0x60] sm:$0x1] %vm627, 0.0
        %633 = vst.msk [vmem:[%s626 + $0x78] sm:$0x1] %vm627, 0.0
        %634 = vst.msk [vmem:[%s626 + $0x90] sm:$0x1] %vm627, 0.0
        %635 = vst.msk [vmem:[%s626 + $0xa8] sm:$0x1] %vm627, 0.0
        %636 = vst.msk [vmem:[%s626 + $0xc0] sm:$0x1] %vm627, 0.0
        %637 = vst.msk [vmem:[%s626 + $0xd8] sm:$0x1] %vm627, 0.0
        %638 = vst.msk [vmem:[%s626 + $0xf0] sm:$0x1] %vm627, 0.0
        %639 = vst.msk [vmem:[%s626 + $0x108] sm:$0x1] %vm627, 0.0
        %640 = vst.msk [vmem:[%s626 + $0x120] sm:$0x1] %vm627, 0.0
        %641 = vst.msk [vmem:[%s626 + $0x138] sm:$0x1] %vm627, 0.0
        %642 = vst.msk [vmem:[%s626 + $0x150] sm:$0x1] %vm627, 0.0
        %643 = vst.msk [vmem:[%s626 + $0x168] sm:$0x1] %vm627, 0.0
        %644 = vst.msk [vmem:[%s626 + $0x11] sm:$0x1] %vm627, 0.0
        %645 = vst.msk [vmem:[%s626 + $0x29] sm:$0x1] %vm627, 0.0
        %646 = vst.msk [vmem:[%s626 + $0x41] sm:$0x1] %vm627, 0.0
        %647 = vst.msk [vmem:[%s626 + $0x59] sm:$0x1] %vm627, 0.0
        %648 = vst.msk [vmem:[%s626 + $0x71] sm:$0x1] %vm627, 0.0
        %649 = vst.msk [vmem:[%s626 + $0x89] sm:$0x1] %vm627, 0.0
        %650 = vst.msk [vmem:[%s626 + $0xa1] sm:$0x1] %vm627, 0.0
        %651 = vst.msk [vmem:[%s626 + $0xb9] sm:$0x1] %vm627, 0.0
        %652 = vst.msk [vmem:[%s626 + $0xd1] sm:$0x1] %vm627, 0.0
        %653 = vst.msk [vmem:[%s626 + $0xe9] sm:$0x1] %vm627, 0.0
        %654 = vst.msk [vmem:[%s626 + $0x101] sm:$0x1] %vm627, 0.0
        %655 = vst.msk [vmem:[%s626 + $0x119] sm:$0x1] %vm627, 0.0
        %656 = vst.msk [vmem:[%s626 + $0x131] sm:$0x1] %vm627, 0.0
        %657 = vst.msk [vmem:[%s626 + $0x149] sm:$0x1] %vm627, 0.0
        %658 = vst.msk [vmem:[%s626 + $0x161] sm:$0x1] %vm627, 0.0
        %659 = vst.msk [vmem:[%s626 + $0x179] sm:$0x1] %vm627, 0.0
        %660 = vst.msk [vmem:[%s626 + $0x1] sm:$0xff] %vm617, %v585
        %661 = vst.msk [vmem:[%s626 + $0x9] sm:$0xff] %vm617, %v586
        %662 = vst.msk [vmem:[%s626 + $0x19] sm:$0xff] %vm617, %v587
        %663 = vst.msk [vmem:[%s626 + $0x21] sm:$0xff] %vm617, %v588
        %664 = vst.msk [vmem:[%s626 + $0x31] sm:$0xff] %vm617, %v589
        %665 = vst.msk [vmem:[%s626 + $0x39] sm:$0xff] %vm617, %v590
        %666 = vst.msk [vmem:[%s626 + $0x49] sm:$0xff] %vm617, %v591
        %667 = vst.msk [vmem:[%s626 + $0x51] sm:$0xff] %vm617, %v592
        %668 = vst.msk [vmem:[%s626 + $0x61] sm:$0xff] %vm617, %v593
        %669 = vst.msk [vmem:[%s626 + $0x69] sm:$0xff] %vm617, %v594
        %670 = vst.msk [vmem:[%s626 + $0x79] sm:$0xff] %vm617, %v595
        %671 = vst.msk [vmem:[%s626 + $0x81] sm:$0xff] %vm617, %v596
        %672 = vst.msk [vmem:[%s626 + $0x91] sm:$0xff] %vm617, %v597
        %673 = vst.msk [vmem:[%s626 + $0x99] sm:$0xff] %vm617, %v598
        %674 = vst.msk [vmem:[%s626 + $0xa9] sm:$0xff] %vm617, %v599
        %675 = vst.msk [vmem:[%s626 + $0xb1] sm:$0xff] %vm617, %v600
        %676 = vst.msk [vmem:[%s626 + $0xc1] sm:$0xff] %vm617, %v601
        %677 = vst.msk [vmem:[%s626 + $0xc9] sm:$0xff] %vm617, %v602
        %678 = vst.msk [vmem:[%s626 + $0xd9] sm:$0xff] %vm617, %v603
        %679 = vst.msk [vmem:[%s626 + $0xe1] sm:$0xff] %vm617, %v604
        %680 = vst.msk [vmem:[%s626 + $0xf1] sm:$0xff] %vm617, %v605
        %681 = vst.msk [vmem:[%s626 + $0xf9] sm:$0xff] %vm617, %v606
        %682 = vst.msk [vmem:[%s626 + $0x109] sm:$0xff] %vm617, %v607
        %683 = vst.msk [vmem:[%s626 + $0x111] sm:$0xff] %vm617, %v608
        %684 = vst.msk [vmem:[%s626 + $0x121] sm:$0xff] %vm617, %v609
        %685 = vst.msk [vmem:[%s626 + $0x129] sm:$0xff] %vm617, %v610
        %686 = vst.msk [vmem:[%s626 + $0x139] sm:$0xff] %vm617, %v611
        %687 = vst.msk [vmem:[%s626 + $0x141] sm:$0xff] %vm617, %v612
        %688 = vst.msk [vmem:[%s626 + $0x151] sm:$0xff] %vm617, %v613
        %689 = vst.msk [vmem:[%s626 + $0x159] sm:$0xff] %vm617, %v614
        %690 = vst.msk [vmem:[%s626 + $0x169] sm:$0xff] %vm617, %v615
        %691 = vst.msk [vmem:[%s626 + $0x171] sm:$0xff] %vm617, %v616
        %v692 = vld [vmem:[#allocation2] sm:$0xff]
        %v693 = vld [vmem:[#allocation2 + $0x8] sm:$0xff]
        %v694 = vld [vmem:[#allocation2 + $0x18] sm:$0xff]
        %v695 = vld [vmem:[#allocation2 + $0x20] sm:$0xff]
        %v696 = vld [vmem:[#allocation2 + $0x30] sm:$0xff]
        %v697 = vld [vmem:[#allocation2 + $0x38] sm:$0xff]
        %v698 = vld [vmem:[#allocation2 + $0x48] sm:$0xff]
        %v699 = vld [vmem:[#allocation2 + $0x50] sm:$0xff]
        %v700 = vld [vmem:[#allocation2 + $0x60] sm:$0xff]
        %v701 = vld [vmem:[#allocation2 + $0x68] sm:$0xff]
        %v702 = vld [vmem:[#allocation2 + $0x78] sm:$0xff]
        %v703 = vld [vmem:[#allocation2 + $0x80] sm:$0xff]
        %v704 = vld [vmem:[#allocation2 + $0x90] sm:$0xff]
        %v705 = vld [vmem:[#allocation2 + $0x98] sm:$0xff]
        %v706 = vld [vmem:[#allocation2 + $0xa8] sm:$0xff]
        %v707 = vld [vmem:[#allocation2 + $0xb0] sm:$0xff]
        %v708 = vld [vmem:[#allocation2 + $0xc0] sm:$0xff]
        %v709 = vld [vmem:[#allocation2 + $0xc8] sm:$0xff]
        %v710 = vld [vmem:[#allocation2 + $0xd8] sm:$0xff]
        %v711 = vld [vmem:[#allocation2 + $0xe0] sm:$0xff]
        %v712 = vld [vmem:[#allocation2 + $0xf0] sm:$0xff]
        %v713 = vld [vmem:[#allocation2 + $0xf8] sm:$0xff]
        %v714 = vld [vmem:[#allocation2 + $0x108] sm:$0xff]
        %v715 = vld [vmem:[#allocation2 + $0x110] sm:$0xff]
        %v716 = vld [vmem:[#allocation2 + $0x120] sm:$0xff]
        %v717 = vld [vmem:[#allocation2 + $0x128] sm:$0xff]
        %v718 = vld [vmem:[#allocation2 + $0x138] sm:$0xff]
        %v719 = vld [vmem:[#allocation2 + $0x140] sm:$0xff]
        %v720 = vld [vmem:[#allocation2 + $0x150] sm:$0xff]
        %v721 = vld [vmem:[#allocation2 + $0x158] sm:$0xff]
        %v722 = vld [vmem:[#allocation2 + $0x168] sm:$0xff]
        %v723 = vld [vmem:[#allocation2 + $0x170] sm:$0xff]
        %v724 = vld [vmem:[%s3] sm:$0xf]
        %v725 = vld [vmem:[#allocation2 + $0x1] sm:$0xff]
        %v726 = vld [vmem:[#allocation2 + $0x9] sm:$0xff]
        %v727 = vld [vmem:[#allocation2 + $0x19] sm:$0xff]
        %v728 = vld [vmem:[#allocation2 + $0x21] sm:$0xff]
        %v729 = vld [vmem:[#allocation2 + $0x31] sm:$0xff]
        %v730 = vld [vmem:[#allocation2 + $0x39] sm:$0xff]
        %v731 = vld [vmem:[#allocation2 + $0x49] sm:$0xff]
        %v732 = vld [vmem:[#allocation2 + $0x51] sm:$0xff]
        %v733 = vld [vmem:[#allocation2 + $0x61] sm:$0xff]
        %v734 = vld [vmem:[#allocation2 + $0x69] sm:$0xff]
        %v735 = vld [vmem:[#allocation2 + $0x79] sm:$0xff]
        %v736 = vld [vmem:[#allocation2 + $0x81] sm:$0xff]
        %v737 = vld [vmem:[#allocation2 + $0x91] sm:$0xff]
        %v738 = vld [vmem:[#allocation2 + $0x99] sm:$0xff]
        %v739 = vld [vmem:[#allocation2 + $0xa9] sm:$0xff]
        %v740 = vld [vmem:[#allocation2 + $0xb1] sm:$0xff]
        %v741 = vld [vmem:[#allocation2 + $0xc1] sm:$0xff]
        %v742 = vld [vmem:[#allocation2 + $0xc9] sm:$0xff]
        %v743 = vld [vmem:[#allocation2 + $0xd9] sm:$0xff]
        %v744 = vld [vmem:[#allocation2 + $0xe1] sm:$0xff]
        %v745 = vld [vmem:[#allocation2 + $0xf1] sm:$0xff]
        %v746 = vld [vmem:[#allocation2 + $0xf9] sm:$0xff]
        %v747 = vld [vmem:[#allocation2 + $0x109] sm:$0xff]
        %v748 = vld [vmem:[#allocation2 + $0x111] sm:$0xff]
        %v749 = vld [vmem:[#allocation2 + $0x121] sm:$0xff]
        %v750 = vld [vmem:[#allocation2 + $0x129] sm:$0xff]
        %v751 = vld [vmem:[#allocation2 + $0x139] sm:$0xff]
        %v752 = vld [vmem:[#allocation2 + $0x141] sm:$0xff]
        %v753 = vld [vmem:[#allocation2 + $0x151] sm:$0xff]
        %v754 = vld [vmem:[#allocation2 + $0x159] sm:$0xff]
        %v755 = vld [vmem:[#allocation2 + $0x169] sm:$0xff]
        %v756 = vld [vmem:[#allocation2 + $0x171] sm:$0xff]
        %s757 = scalar_lea.vmem %s3, 4
        %v758 = vld [vmem:[%s757] sm:$0xf]
        %v760 = vsel %vm617, %v725, 0
        %v763 = vsel %vm617, %v726, 0
        %v766 = vsel %vm617, %v727, 0
        %v769 = vsel %vm617, %v728, 0
        %v772 = vsel %vm617, %v729, 0
        %v775 = vsel %vm617, %v730, 0
        %v778 = vsel %vm617, %v731, 0
        %v781 = vsel %vm617, %v732, 0
        %v784 = vsel %vm617, %v733, 0
        %v787 = vsel %vm617, %v734, 0
        %v790 = vsel %vm617, %v735, 0
        %v793 = vsel %vm617, %v736, 0
        %v796 = vsel %vm617, %v737, 0
        %v799 = vsel %vm617, %v738, 0
        %v802 = vsel %vm617, %v739, 0
        %v805 = vsel %vm617, %v740, 0
        %v808 = vsel %vm617, %v741, 0
        %v811 = vsel %vm617, %v742, 0
        %v814 = vsel %vm617, %v743, 0
        %v817 = vsel %vm617, %v744, 0
        %v820 = vsel %vm617, %v745, 0
        %v823 = vsel %vm617, %v746, 0
        %v826 = vsel %vm617, %v747, 0
        %v829 = vsel %vm617, %v748, 0
        %v832 = vsel %vm617, %v749, 0
        %v835 = vsel %vm617, %v750, 0
        %v838 = vsel %vm617, %v751, 0
        %v841 = vsel %vm617, %v752, 0
        %v844 = vsel %vm617, %v753, 0
        %v847 = vsel %vm617, %v754, 0
        %v850 = vsel %vm617, %v755, 0
        %v853 = vsel %vm617, %v756, 0
        %vm855 = vcmask 1043456
        %v857 = vsel %vm855, %v758, 0
        %859 = vmatprep.subr.mxu0 0.0
        %860 = vmatpush1.msra.mxu0 0.0
        %861 = vmatprep.subr.mxu0 0.0
        %862 = vmatpush1.msra.mxu0 0.0
        %863 = vmatprep.subr.mxu0 0.0
        %864 = vmatpush1.msra.mxu0 0.0
        %865 = vmatprep.subr.mxu0 0.0
        %866 = vmatpush1.msra.mxu0 0.0
        %867 = vmatprep.subr.mxu0 0.0
        %868 = vmatpush1.msra.mxu0 0.0
        %869 = vmatprep.subr.mxu0 0.0
        %870 = vmatpush1.msra.mxu0 0.0
        %871 = vmatprep.subr.mxu0 0.0
        %872 = vmatpush1.msra.mxu0 0.0
        %873 = vmatprep.subr.mxu0 0.0
        %874 = vmatpush1.msra.mxu0 0.0
        %875 = vmatprep.subr.mxu0 0.0
        %876 = vmatpush1.msra.mxu0 0.0
        %877 = vmatprep.subr.mxu0 0.0
        %878 = vmatpush1.msra.mxu0 0.0
        %879 = vmatprep.subr.mxu0 0.0
        %880 = vmatpush1.msra.mxu0 0.0
        %881 = vmatprep.subr.mxu0 0.0
        %882 = vmatpush1.msra.mxu0 0.0
        %883 = vmatprep.subr.mxu0 0.0
        %884 = vmatpush1.msra.mxu0 0.0
        %885 = vmatprep.subr.mxu0 0.0
        %886 = vmatpush1.msra.mxu0 0.0
        %887 = vmatprep.subr.mxu0 0.0
        %888 = vmatpush1.msra.mxu0 0.0
        %889 = vmatprep.subr.mxu0 0.0
        %890 = vmatpush1.msra.mxu0 %v857
        %891 = vmatprep.subr.mxu0 0.0
        %892 = vmatpush2.msra.mxu0 0.0
        %893 = vmatprep.subr.mxu0 0.0
        %894 = vmatpush2.msra.mxu0 0.0
        %895 = vmatprep.subr.mxu0 0.0
        %896 = vmatpush2.msra.mxu0 0.0
        %897 = vmatprep.subr.mxu0 0.0
        %898 = vmatpush2.msra.mxu0 0.0
        %899 = vmatprep.subr.mxu0 0.0
        %900 = vmatpush2.msra.mxu0 0.0
        %901 = vmatprep.subr.mxu0 0.0
        %902 = vmatpush2.msra.mxu0 0.0
        %903 = vmatprep.subr.mxu0 0.0
        %904 = vmatpush2.msra.mxu0 0.0
        %905 = vmatprep.subr.mxu0 0.0
        %906 = vmatpush2.msra.mxu0 0.0
        %907 = vmatprep.subr.mxu0 0.0
        %908 = vmatpush2.msra.mxu0 0.0
        %909 = vmatprep.subr.mxu0 0.0
        %910 = vmatpush2.msra.mxu0 0.0
        %911 = vmatprep.subr.mxu0 0.0
        %912 = vmatpush2.msra.mxu0 0.0
        %913 = vmatprep.subr.mxu0 0.0
        %914 = vmatpush2.msra.mxu0 0.0
        %915 = vmatprep.subr.mxu0 0.0
        %916 = vmatpush2.msra.mxu0 0.0
        %917 = vmatprep.subr.mxu0 0.0
        %918 = vmatpush2.msra.mxu0 0.0
        %919 = vmatprep.subr.mxu0 0.0
        %920 = vmatpush2.msra.mxu0 0.0
        %921 = vmatprep.subr.mxu0 0.0
        %922 = vmatpush2.msra.mxu0 0.0
        %923 = vmatprep.mubr.f32.mxu0 0.0
        %924 = vmatmul.mubr.f32.gmra.mxu0 %v760
        %v925 = vpop.f32.mrf.mxu0
        %v926 = vadd.f32 0.0, %v925
        %v927 = vpop.f32.mrf.mxu0
        %928 = vmatprep.mubr.f32.mxu0 0.0
        %929 = vmatmul.mubr.f32.gmra.mxu0 %v763
        %v930 = vpop.f32.mrf.mxu0
        %v931 = vadd.f32 0.0, %v930
        %v932 = vpop.f32.mrf.mxu0
        %933 = vmatprep.mubr.f32.mxu0 0.0
        %934 = vmatmul.mubr.f32.gmra.mxu0 %v766
        %v935 = vpop.f32.mrf.mxu0
        %v936 = vadd.f32 0.0, %v935
        %v937 = vpop.f32.mrf.mxu0
        %938 = vmatprep.mubr.f32.mxu0 0.0
        %939 = vmatmul.mubr.f32.gmra.mxu0 %v769
        %v940 = vpop.f32.mrf.mxu0
        %v941 = vadd.f32 0.0, %v940
        %v942 = vpop.f32.mrf.mxu0
        %943 = vmatprep.mubr.f32.mxu0 0.0
        %944 = vmatmul.mubr.f32.gmra.mxu0 %v772
        %v945 = vpop.f32.mrf.mxu0
        %v946 = vadd.f32 0.0, %v945
        %v947 = vpop.f32.mrf.mxu0
        %948 = vmatprep.mubr.f32.mxu0 0.0
        %949 = vmatmul.mubr.f32.gmra.mxu0 %v775
        %v950 = vpop.f32.mrf.mxu0
        %v951 = vadd.f32 0.0, %v950
        %v952 = vpop.f32.mrf.mxu0
        %953 = vmatprep.mubr.f32.mxu0 0.0
        %954 = vmatmul.mubr.f32.gmra.mxu0 %v778
        %v955 = vpop.f32.mrf.mxu0
        %v956 = vadd.f32 0.0, %v955
        %v957 = vpop.f32.mrf.mxu0
        %958 = vmatprep.mubr.f32.mxu0 0.0
        %959 = vmatmul.mubr.f32.gmra.mxu0 %v781
        %v960 = vpop.f32.mrf.mxu0
        %v961 = vadd.f32 0.0, %v960
        %v962 = vpop.f32.mrf.mxu0
        %963 = vmatprep.mubr.f32.mxu0 0.0
        %964 = vmatmul.mubr.f32.gmra.mxu0 %v784
        %v965 = vpop.f32.mrf.mxu0
        %v966 = vadd.f32 0.0, %v965
        %v967 = vpop.f32.mrf.mxu0
        %968 = vmatprep.mubr.f32.mxu0 0.0
        %969 = vmatmul.mubr.f32.gmra.mxu0 %v787
        %v970 = vpop.f32.mrf.mxu0
        %v971 = vadd.f32 0.0, %v970
        %v972 = vpop.f32.mrf.mxu0
        %973 = vmatprep.mubr.f32.mxu0 0.0
        %974 = vmatmul.mubr.f32.gmra.mxu0 %v790
        %v975 = vpop.f32.mrf.mxu0
        %v976 = vadd.f32 0.0, %v975
        %v977 = vpop.f32.mrf.mxu0
        %978 = vmatprep.mubr.f32.mxu0 0.0
        %979 = vmatmul.mubr.f32.gmra.mxu0 %v793
        %v980 = vpop.f32.mrf.mxu0
        %v981 = vadd.f32 0.0, %v980
        %v982 = vpop.f32.mrf.mxu0
        %983 = vmatprep.mubr.f32.mxu0 0.0
        %984 = vmatmul.mubr.f32.gmra.mxu0 %v796
        %v985 = vpop.f32.mrf.mxu0
        %v986 = vadd.f32 0.0, %v985
        %v987 = vpop.f32.mrf.mxu0
        %988 = vmatprep.mubr.f32.mxu0 0.0
        %989 = vmatmul.mubr.f32.gmra.mxu0 %v799
        %v990 = vpop.f32.mrf.mxu0
        %v991 = vadd.f32 0.0, %v990
        %v992 = vpop.f32.mrf.mxu0
        %993 = vmatprep.mubr.f32.mxu0 0.0
        %994 = vmatmul.mubr.f32.gmra.mxu0 %v802
        %v995 = vpop.f32.mrf.mxu0
        %v996 = vadd.f32 0.0, %v995
        %v997 = vpop.f32.mrf.mxu0
        %998 = vmatprep.mubr.f32.mxu0 0.0
        %999 = vmatmul.mubr.f32.gmra.mxu0 %v805
        %v1000 = vpop.f32.mrf.mxu0
        %v1001 = vadd.f32 0.0, %v1000
        %v1002 = vpop.f32.mrf.mxu0
        %1003 = vmatprep.mubr.f32.mxu0 0.0
        %1004 = vmatmul.mubr.f32.gmra.mxu0 %v808
        %v1005 = vpop.f32.mrf.mxu0
        %v1006 = vadd.f32 0.0, %v1005
        %v1007 = vpop.f32.mrf.mxu0
        %1008 = vmatprep.mubr.f32.mxu0 0.0
        %1009 = vmatmul.mubr.f32.gmra.mxu0 %v811
        %v1010 = vpop.f32.mrf.mxu0
        %v1011 = vadd.f32 0.0, %v1010
        %v1012 = vpop.f32.mrf.mxu0
        %1013 = vmatprep.mubr.f32.mxu0 0.0
        %1014 = vmatmul.mubr.f32.gmra.mxu0 %v814
        %v1015 = vpop.f32.mrf.mxu0
        %v1016 = vadd.f32 0.0, %v1015
        %v1017 = vpop.f32.mrf.mxu0
        %1018 = vmatprep.mubr.f32.mxu0 0.0
        %1019 = vmatmul.mubr.f32.gmra.mxu0 %v817
        %v1020 = vpop.f32.mrf.mxu0
        %v1021 = vadd.f32 0.0, %v1020
        %v1022 = vpop.f32.mrf.mxu0
        %1023 = vmatprep.mubr.f32.mxu0 0.0
        %1024 = vmatmul.mubr.f32.gmra.mxu0 %v820
        %v1025 = vpop.f32.mrf.mxu0
        %v1026 = vadd.f32 0.0, %v1025
        %v1027 = vpop.f32.mrf.mxu0
        %1028 = vmatprep.mubr.f32.mxu0 0.0
        %1029 = vmatmul.mubr.f32.gmra.mxu0 %v823
        %v1030 = vpop.f32.mrf.mxu0
        %v1031 = vadd.f32 0.0, %v1030
        %v1032 = vpop.f32.mrf.mxu0
        %1033 = vmatprep.mubr.f32.mxu0 0.0
        %1034 = vmatmul.mubr.f32.gmra.mxu0 %v826
        %v1035 = vpop.f32.mrf.mxu0
        %v1036 = vadd.f32 0.0, %v1035
        %v1037 = vpop.f32.mrf.mxu0
        %1038 = vmatprep.mubr.f32.mxu0 0.0
        %1039 = vmatmul.mubr.f32.gmra.mxu0 %v829
        %v1040 = vpop.f32.mrf.mxu0
        %v1041 = vadd.f32 0.0, %v1040
        %v1042 = vpop.f32.mrf.mxu0
        %1043 = vmatprep.mubr.f32.mxu0 0.0
        %1044 = vmatmul.mubr.f32.gmra.mxu0 %v832
        %v1045 = vpop.f32.mrf.mxu0
        %v1046 = vadd.f32 0.0, %v1045
        %v1047 = vpop.f32.mrf.mxu0
        %1048 = vmatprep.mubr.f32.mxu0 0.0
        %1049 = vmatmul.mubr.f32.gmra.mxu0 %v835
        %v1050 = vpop.f32.mrf.mxu0
        %v1051 = vadd.f32 0.0, %v1050
        %v1052 = vpop.f32.mrf.mxu0
        %1053 = vmatprep.mubr.f32.mxu0 0.0
        %1054 = vmatmul.mubr.f32.gmra.mxu0 %v838
        %v1055 = vpop.f32.mrf.mxu0
        %v1056 = vadd.f32 0.0, %v1055
        %v1057 = vpop.f32.mrf.mxu0
        %1058 = vmatprep.mubr.f32.mxu0 0.0
        %1059 = vmatmul.mubr.f32.gmra.mxu0 %v841
        %v1060 = vpop.f32.mrf.mxu0
        %v1061 = vadd.f32 0.0, %v1060
        %v1062 = vpop.f32.mrf.mxu0
        %1063 = vmatprep.mubr.f32.mxu0 0.0
        %1064 = vmatmul.mubr.f32.gmra.mxu0 %v844
        %v1065 = vpop.f32.mrf.mxu0
        %v1066 = vadd.f32 0.0, %v1065
        %v1067 = vpop.f32.mrf.mxu0
        %1068 = vmatprep.mubr.f32.mxu0 0.0
        %1069 = vmatmul.mubr.f32.gmra.mxu0 %v847
        %v1070 = vpop.f32.mrf.mxu0
        %v1071 = vadd.f32 0.0, %v1070
        %v1072 = vpop.f32.mrf.mxu0
        %1073 = vmatprep.mubr.f32.mxu0 0.0
        %1074 = vmatmul.mubr.f32.gmra.mxu0 %v850
        %v1075 = vpop.f32.mrf.mxu0
        %v1076 = vadd.f32 0.0, %v1075
        %v1077 = vpop.f32.mrf.mxu0
        %1078 = vmatprep.mubr.f32.mxu0 0.0
        %1079 = vmatmul.mubr.f32.gmra.mxu0 %v853
        %v1080 = vpop.f32.mrf.mxu0
        %v1081 = vadd.f32 0.0, %v1080
        %v1082 = vpop.f32.mrf.mxu0
        %1083 = vdwg.mxu0
        %v1085 = vsel %vm617, %v692, 0
        %v1088 = vsel %vm617, %v693, 0
        %v1091 = vsel %vm617, %v694, 0
        %v1094 = vsel %vm617, %v695, 0
        %v1097 = vsel %vm617, %v696, 0
        %v1100 = vsel %vm617, %v697, 0
        %v1103 = vsel %vm617, %v698, 0
        %v1106 = vsel %vm617, %v699, 0
        %v1109 = vsel %vm617, %v700, 0
        %v1112 = vsel %vm617, %v701, 0
        %v1115 = vsel %vm617, %v702, 0
        %v1118 = vsel %vm617, %v703, 0
        %v1121 = vsel %vm617, %v704, 0
        %v1124 = vsel %vm617, %v705, 0
        %v1127 = vsel %vm617, %v706, 0
        %v1130 = vsel %vm617, %v707, 0
        %v1133 = vsel %vm617, %v708, 0
        %v1136 = vsel %vm617, %v709, 0
        %v1139 = vsel %vm617, %v710, 0
        %v1142 = vsel %vm617, %v711, 0
        %v1145 = vsel %vm617, %v712, 0
        %v1148 = vsel %vm617, %v713, 0
        %v1151 = vsel %vm617, %v714, 0
        %v1154 = vsel %vm617, %v715, 0
        %v1157 = vsel %vm617, %v716, 0
        %v1160 = vsel %vm617, %v717, 0
        %v1163 = vsel %vm617, %v718, 0
        %v1166 = vsel %vm617, %v719, 0
        %v1169 = vsel %vm617, %v720, 0
        %v1172 = vsel %vm617, %v721, 0
        %v1175 = vsel %vm617, %v722, 0
        %v1178 = vsel %vm617, %v723, 0
        %v1181 = vsel %vm855, %v724, 0
        %1183 = vmatprep.subr.mxu0 0.0
        %1184 = vmatpush1.msra.mxu0 0.0
        %1185 = vmatprep.subr.mxu0 0.0
        %1186 = vmatpush1.msra.mxu0 0.0
        %1187 = vmatprep.subr.mxu0 0.0
        %1188 = vmatpush1.msra.mxu0 0.0
        %1189 = vmatprep.subr.mxu0 0.0
        %1190 = vmatpush1.msra.mxu0 0.0
        %1191 = vmatprep.subr.mxu0 0.0
        %1192 = vmatpush1.msra.mxu0 0.0
        %1193 = vmatprep.subr.mxu0 0.0
        %1194 = vmatpush1.msra.mxu0 0.0
        %1195 = vmatprep.subr.mxu0 0.0
        %1196 = vmatpush1.msra.mxu0 0.0
        %1197 = vmatprep.subr.mxu0 0.0
        %1198 = vmatpush1.msra.mxu0 0.0
        %1199 = vmatprep.subr.mxu0 0.0
        %1200 = vmatpush1.msra.mxu0 0.0
        %1201 = vmatprep.subr.mxu0 0.0
        %1202 = vmatpush1.msra.mxu0 0.0
        %1203 = vmatprep.subr.mxu0 0.0
        %1204 = vmatpush1.msra.mxu0 0.0
        %1205 = vmatprep.subr.mxu0 0.0
        %1206 = vmatpush1.msra.mxu0 0.0
        %1207 = vmatprep.subr.mxu0 0.0
        %1208 = vmatpush1.msra.mxu0 0.0
        %1209 = vmatprep.subr.mxu0 0.0
        %1210 = vmatpush1.msra.mxu0 0.0
        %1211 = vmatprep.subr.mxu0 0.0
        %1212 = vmatpush1.msra.mxu0 0.0
        %1213 = vmatprep.subr.mxu0 0.0
        %1214 = vmatpush1.msra.mxu0 %v1181
        %1215 = vmatprep.subr.mxu0 0.0
        %1216 = vmatpush2.msra.mxu0 0.0
        %1217 = vmatprep.subr.mxu0 0.0
        %1218 = vmatpush2.msra.mxu0 0.0
        %1219 = vmatprep.subr.mxu0 0.0
        %1220 = vmatpush2.msra.mxu0 0.0
        %1221 = vmatprep.subr.mxu0 0.0
        %1222 = vmatpush2.msra.mxu0 0.0
        %1223 = vmatprep.subr.mxu0 0.0
        %1224 = vmatpush2.msra.mxu0 0.0
        %1225 = vmatprep.subr.mxu0 0.0
        %1226 = vmatpush2.msra.mxu0 0.0
        %1227 = vmatprep.subr.mxu0 0.0
        %1228 = vmatpush2.msra.mxu0 0.0
        %1229 = vmatprep.subr.mxu0 0.0
        %1230 = vmatpush2.msra.mxu0 0.0
        %1231 = vmatprep.subr.mxu0 0.0
        %1232 = vmatpush2.msra.mxu0 0.0
        %1233 = vmatprep.subr.mxu0 0.0
        %1234 = vmatpush2.msra.mxu0 0.0
        %1235 = vmatprep.subr.mxu0 0.0
        %1236 = vmatpush2.msra.mxu0 0.0
        %1237 = vmatprep.subr.mxu0 0.0
        %1238 = vmatpush2.msra.mxu0 0.0
        %1239 = vmatprep.subr.mxu0 0.0
        %1240 = vmatpush2.msra.mxu0 0.0
        %1241 = vmatprep.subr.mxu0 0.0
        %1242 = vmatpush2.msra.mxu0 0.0
        %1243 = vmatprep.subr.mxu0 0.0
        %1244 = vmatpush2.msra.mxu0 0.0
        %1245 = vmatprep.subr.mxu0 0.0
        %1246 = vmatpush2.msra.mxu0 0.0
        %1247 = vmatprep.mubr.f32.mxu0 0.0
        %1248 = vmatmul.mubr.f32.gmra.mxu0 %v1085
        %v1249 = vpop.f32.mrf.mxu0
        %v1250 = vadd.f32 %v926, %v1249
        %v1251 = vpop.f32.mrf.mxu0
        %1252 = vmatprep.mubr.f32.mxu0 0.0
        %1253 = vmatmul.mubr.f32.gmra.mxu0 %v1088
        %v1254 = vpop.f32.mrf.mxu0
        %v1255 = vadd.f32 %v931, %v1254
        %v1256 = vpop.f32.mrf.mxu0
        %1257 = vmatprep.mubr.f32.mxu0 0.0
        %1258 = vmatmul.mubr.f32.gmra.mxu0 %v1091
        %v1259 = vpop.f32.mrf.mxu0
        %v1260 = vadd.f32 %v936, %v1259
        %v1261 = vpop.f32.mrf.mxu0
        %1262 = vmatprep.mubr.f32.mxu0 0.0
        %1263 = vmatmul.mubr.f32.gmra.mxu0 %v1094
        %v1264 = vpop.f32.mrf.mxu0
        %v1265 = vadd.f32 %v941, %v1264
        %v1266 = vpop.f32.mrf.mxu0
        %1267 = vmatprep.mubr.f32.mxu0 0.0
        %1268 = vmatmul.mubr.f32.gmra.mxu0 %v1097
        %v1269 = vpop.f32.mrf.mxu0
        %v1270 = vadd.f32 %v946, %v1269
        %v1271 = vpop.f32.mrf.mxu0
        %1272 = vmatprep.mubr.f32.mxu0 0.0
        %1273 = vmatmul.mubr.f32.gmra.mxu0 %v1100
        %v1274 = vpop.f32.mrf.mxu0
        %v1275 = vadd.f32 %v951, %v1274
        %v1276 = vpop.f32.mrf.mxu0
        %1277 = vmatprep.mubr.f32.mxu0 0.0
        %1278 = vmatmul.mubr.f32.gmra.mxu0 %v1103
        %v1279 = vpop.f32.mrf.mxu0
        %v1280 = vadd.f32 %v956, %v1279
        %v1281 = vpop.f32.mrf.mxu0
        %1282 = vmatprep.mubr.f32.mxu0 0.0
        %1283 = vmatmul.mubr.f32.gmra.mxu0 %v1106
        %v1284 = vpop.f32.mrf.mxu0
        %v1285 = vadd.f32 %v961, %v1284
        %v1286 = vpop.f32.mrf.mxu0
        %1287 = vmatprep.mubr.f32.mxu0 0.0
        %1288 = vmatmul.mubr.f32.gmra.mxu0 %v1109
        %v1289 = vpop.f32.mrf.mxu0
        %v1290 = vadd.f32 %v966, %v1289
        %v1291 = vpop.f32.mrf.mxu0
        %1292 = vmatprep.mubr.f32.mxu0 0.0
        %1293 = vmatmul.mubr.f32.gmra.mxu0 %v1112
        %v1294 = vpop.f32.mrf.mxu0
        %v1295 = vadd.f32 %v971, %v1294
        %v1296 = vpop.f32.mrf.mxu0
        %1297 = vmatprep.mubr.f32.mxu0 0.0
        %1298 = vmatmul.mubr.f32.gmra.mxu0 %v1115
        %v1299 = vpop.f32.mrf.mxu0
        %v1300 = vadd.f32 %v976, %v1299
        %v1301 = vpop.f32.mrf.mxu0
        %1302 = vmatprep.mubr.f32.mxu0 0.0
        %1303 = vmatmul.mubr.f32.gmra.mxu0 %v1118
        %v1304 = vpop.f32.mrf.mxu0
        %v1305 = vadd.f32 %v981, %v1304
        %v1306 = vpop.f32.mrf.mxu0
        %1307 = vmatprep.mubr.f32.mxu0 0.0
        %1308 = vmatmul.mubr.f32.gmra.mxu0 %v1121
        %v1309 = vpop.f32.mrf.mxu0
        %v1310 = vadd.f32 %v986, %v1309
        %v1311 = vpop.f32.mrf.mxu0
        %1312 = vmatprep.mubr.f32.mxu0 0.0
        %1313 = vmatmul.mubr.f32.gmra.mxu0 %v1124
        %v1314 = vpop.f32.mrf.mxu0
        %v1315 = vadd.f32 %v991, %v1314
        %v1316 = vpop.f32.mrf.mxu0
        %1317 = vmatprep.mubr.f32.mxu0 0.0
        %1318 = vmatmul.mubr.f32.gmra.mxu0 %v1127
        %v1319 = vpop.f32.mrf.mxu0
        %v1320 = vadd.f32 %v996, %v1319
        %v1321 = vpop.f32.mrf.mxu0
        %1322 = vmatprep.mubr.f32.mxu0 0.0
        %1323 = vmatmul.mubr.f32.gmra.mxu0 %v1130
        %v1324 = vpop.f32.mrf.mxu0
        %v1325 = vadd.f32 %v1001, %v1324
        %v1326 = vpop.f32.mrf.mxu0
        %1327 = vmatprep.mubr.f32.mxu0 0.0
        %1328 = vmatmul.mubr.f32.gmra.mxu0 %v1133
        %v1329 = vpop.f32.mrf.mxu0
        %v1330 = vadd.f32 %v1006, %v1329
        %v1331 = vpop.f32.mrf.mxu0
        %1332 = vmatprep.mubr.f32.mxu0 0.0
        %1333 = vmatmul.mubr.f32.gmra.mxu0 %v1136
        %v1334 = vpop.f32.mrf.mxu0
        %v1335 = vadd.f32 %v1011, %v1334
        %v1336 = vpop.f32.mrf.mxu0
        %1337 = vmatprep.mubr.f32.mxu0 0.0
        %1338 = vmatmul.mubr.f32.gmra.mxu0 %v1139
        %v1339 = vpop.f32.mrf.mxu0
        %v1340 = vadd.f32 %v1016, %v1339
        %v1341 = vpop.f32.mrf.mxu0
        %1342 = vmatprep.mubr.f32.mxu0 0.0
        %1343 = vmatmul.mubr.f32.gmra.mxu0 %v1142
        %v1344 = vpop.f32.mrf.mxu0
        %v1345 = vadd.f32 %v1021, %v1344
        %v1346 = vpop.f32.mrf.mxu0
        %1347 = vmatprep.mubr.f32.mxu0 0.0
        %1348 = vmatmul.mubr.f32.gmra.mxu0 %v1145
        %v1349 = vpop.f32.mrf.mxu0
        %v1350 = vadd.f32 %v1026, %v1349
        %v1351 = vpop.f32.mrf.mxu0
        %1352 = vmatprep.mubr.f32.mxu0 0.0
        %1353 = vmatmul.mubr.f32.gmra.mxu0 %v1148
        %v1354 = vpop.f32.mrf.mxu0
        %v1355 = vadd.f32 %v1031, %v1354
        %v1356 = vpop.f32.mrf.mxu0
        %1357 = vmatprep.mubr.f32.mxu0 0.0
        %1358 = vmatmul.mubr.f32.gmra.mxu0 %v1151
        %v1359 = vpop.f32.mrf.mxu0
        %v1360 = vadd.f32 %v1036, %v1359
        %v1361 = vpop.f32.mrf.mxu0
        %1362 = vmatprep.mubr.f32.mxu0 0.0
        %1363 = vmatmul.mubr.f32.gmra.mxu0 %v1154
        %v1364 = vpop.f32.mrf.mxu0
        %v1365 = vadd.f32 %v1041, %v1364
        %v1366 = vpop.f32.mrf.mxu0
        %1367 = vmatprep.mubr.f32.mxu0 0.0
        %1368 = vmatmul.mubr.f32.gmra.mxu0 %v1157
        %v1369 = vpop.f32.mrf.mxu0
        %v1370 = vadd.f32 %v1046, %v1369
        %v1371 = vpop.f32.mrf.mxu0
        %1372 = vmatprep.mubr.f32.mxu0 0.0
        %1373 = vmatmul.mubr.f32.gmra.mxu0 %v1160
        %v1374 = vpop.f32.mrf.mxu0
        %v1375 = vadd.f32 %v1051, %v1374
        %v1376 = vpop.f32.mrf.mxu0
        %1377 = vmatprep.mubr.f32.mxu0 0.0
        %1378 = vmatmul.mubr.f32.gmra.mxu0 %v1163
        %v1379 = vpop.f32.mrf.mxu0
        %v1380 = vadd.f32 %v1056, %v1379
        %v1381 = vpop.f32.mrf.mxu0
        %1382 = vmatprep.mubr.f32.mxu0 0.0
        %1383 = vmatmul.mubr.f32.gmra.mxu0 %v1166
        %v1384 = vpop.f32.mrf.mxu0
        %v1385 = vadd.f32 %v1061, %v1384
        %v1386 = vpop.f32.mrf.mxu0
        %1387 = vmatprep.mubr.f32.mxu0 0.0
        %1388 = vmatmul.mubr.f32.gmra.mxu0 %v1169
        %v1389 = vpop.f32.mrf.mxu0
        %v1390 = vadd.f32 %v1066, %v1389
        %v1391 = vpop.f32.mrf.mxu0
        %1392 = vmatprep.mubr.f32.mxu0 0.0
        %1393 = vmatmul.mubr.f32.gmra.mxu0 %v1172
        %v1394 = vpop.f32.mrf.mxu0
        %v1395 = vadd.f32 %v1071, %v1394
        %v1396 = vpop.f32.mrf.mxu0
        %1397 = vmatprep.mubr.f32.mxu0 0.0
        %1398 = vmatmul.mubr.f32.gmra.mxu0 %v1175
        %v1399 = vpop.f32.mrf.mxu0
        %v1400 = vadd.f32 %v1076, %v1399
        %v1401 = vpop.f32.mrf.mxu0
        %1402 = vmatprep.mubr.f32.mxu0 0.0
        %1403 = vmatmul.mubr.f32.gmra.mxu0 %v1178
        %v1404 = vpop.f32.mrf.mxu0
        %v1405 = vadd.f32 %v1081, %v1404
        %v1406 = vpop.f32.mrf.mxu0
        %1407 = vdwg.mxu0
        %v1408 = vld [vmem:[#allocation2 + $0x2] sm:$0xff]
        %v1409 = vld [vmem:[#allocation2 + $0xa] sm:$0xff]
        %v1410 = vld [vmem:[#allocation2 + $0x1a] sm:$0xff]
        %v1411 = vld [vmem:[#allocation2 + $0x22] sm:$0xff]
        %v1412 = vld [vmem:[#allocation2 + $0x32] sm:$0xff]
        %v1413 = vld [vmem:[#allocation2 + $0x3a] sm:$0xff]
        %v1414 = vld [vmem:[#allocation2 + $0x4a] sm:$0xff]
        %v1415 = vld [vmem:[#allocation2 + $0x52] sm:$0xff]
        %v1416 = vld [vmem:[#allocation2 + $0x62] sm:$0xff]
        %v1417 = vld [vmem:[#allocation2 + $0x6a] sm:$0xff]
        %v1418 = vld [vmem:[#allocation2 + $0x7a] sm:$0xff]
        %v1419 = vld [vmem:[#allocation2 + $0x82] sm:$0xff]
        %v1420 = vld [vmem:[#allocation2 + $0x92] sm:$0xff]
        %v1421 = vld [vmem:[#allocation2 + $0x9a] sm:$0xff]
        %v1422 = vld [vmem:[#allocation2 + $0xaa] sm:$0xff]
        %v1423 = vld [vmem:[#allocation2 + $0xb2] sm:$0xff]
        %v1424 = vld [vmem:[#allocation2 + $0xc2] sm:$0xff]
        %v1425 = vld [vmem:[#allocation2 + $0xca] sm:$0xff]
        %v1426 = vld [vmem:[#allocation2 + $0xda] sm:$0xff]
        %v1427 = vld [vmem:[#allocation2 + $0xe2] sm:$0xff]
        %v1428 = vld [vmem:[#allocation2 + $0xf2] sm:$0xff]
        %v1429 = vld [vmem:[#allocation2 + $0xfa] sm:$0xff]
        %v1430 = vld [vmem:[#allocation2 + $0x10a] sm:$0xff]
        %v1431 = vld [vmem:[#allocation2 + $0x112] sm:$0xff]
        %v1432 = vld [vmem:[#allocation2 + $0x122] sm:$0xff]
        %v1433 = vld [vmem:[#allocation2 + $0x12a] sm:$0xff]
        %v1434 = vld [vmem:[#allocation2 + $0x13a] sm:$0xff]
        %v1435 = vld [vmem:[#allocation2 + $0x142] sm:$0xff]
        %v1436 = vld [vmem:[#allocation2 + $0x152] sm:$0xff]
        %v1437 = vld [vmem:[#allocation2 + $0x15a] sm:$0xff]
        %v1438 = vld [vmem:[#allocation2 + $0x16a] sm:$0xff]
        %v1439 = vld [vmem:[#allocation2 + $0x172] sm:$0xff]
        %s1440 = scalar_lea.vmem %s3, 8
        %v1441 = vld [vmem:[%s1440] sm:$0xf]
        %v1443 = vsel %vm617, %v1408, 0
        %v1446 = vsel %vm617, %v1409, 0
        %v1449 = vsel %vm617, %v1410, 0
        %v1452 = vsel %vm617, %v1411, 0
        %v1455 = vsel %vm617, %v1412, 0
        %v1458 = vsel %vm617, %v1413, 0
        %v1461 = vsel %vm617, %v1414, 0
        %v1464 = vsel %vm617, %v1415, 0
        %v1467 = vsel %vm617, %v1416, 0
        %v1470 = vsel %vm617, %v1417, 0
        %v1473 = vsel %vm617, %v1418, 0
        %v1476 = vsel %vm617, %v1419, 0
        %v1479 = vsel %vm617, %v1420, 0
        %v1482 = vsel %vm617, %v1421, 0
        %v1485 = vsel %vm617, %v1422, 0
        %v1488 = vsel %vm617, %v1423, 0
        %v1491 = vsel %vm617, %v1424, 0
        %v1494 = vsel %vm617, %v1425, 0
        %v1497 = vsel %vm617, %v1426, 0
        %v1500 = vsel %vm617, %v1427, 0
        %v1503 = vsel %vm617, %v1428, 0
        %v1506 = vsel %vm617, %v1429, 0
        %v1509 = vsel %vm617, %v1430, 0
        %v1512 = vsel %vm617, %v1431, 0
        %v1515 = vsel %vm617, %v1432, 0
        %v1518 = vsel %vm617, %v1433, 0
        %v1521 = vsel %vm617, %v1434, 0
        %v1524 = vsel %vm617, %v1435, 0
        %v1527 = vsel %vm617, %v1436, 0
        %v1530 = vsel %vm617, %v1437, 0
        %v1533 = vsel %vm617, %v1438, 0
        %v1536 = vsel %vm617, %v1439, 0
        %v1539 = vsel %vm855, %v1441, 0
        %1541 = vmatprep.subr.mxu0 0.0
        %1542 = vmatpush1.msra.mxu0 0.0
        %1543 = vmatprep.subr.mxu0 0.0
        %1544 = vmatpush1.msra.mxu0 0.0
        %1545 = vmatprep.subr.mxu0 0.0
        %1546 = vmatpush1.msra.mxu0 0.0
        %1547 = vmatprep.subr.mxu0 0.0
        %1548 = vmatpush1.msra.mxu0 0.0
        %1549 = vmatprep.subr.mxu0 0.0
        %1550 = vmatpush1.msra.mxu0 0.0
        %1551 = vmatprep.subr.mxu0 0.0
        %1552 = vmatpush1.msra.mxu0 0.0
        %1553 = vmatprep.subr.mxu0 0.0
        %1554 = vmatpush1.msra.mxu0 0.0
        %1555 = vmatprep.subr.mxu0 0.0
        %1556 = vmatpush1.msra.mxu0 0.0
        %1557 = vmatprep.subr.mxu0 0.0
        %1558 = vmatpush1.msra.mxu0 0.0
        %1559 = vmatprep.subr.mxu0 0.0
        %1560 = vmatpush1.msra.mxu0 0.0
        %1561 = vmatprep.subr.mxu0 0.0
        %1562 = vmatpush1.msra.mxu0 0.0
        %1563 = vmatprep.subr.mxu0 0.0
        %1564 = vmatpush1.msra.mxu0 0.0
        %1565 = vmatprep.subr.mxu0 0.0
        %1566 = vmatpush1.msra.mxu0 0.0
        %1567 = vmatprep.subr.mxu0 0.0
        %1568 = vmatpush1.msra.mxu0 0.0
        %1569 = vmatprep.subr.mxu0 0.0
        %1570 = vmatpush1.msra.mxu0 0.0
        %1571 = vmatprep.subr.mxu0 0.0
        %1572 = vmatpush1.msra.mxu0 %v1539
        %1573 = vmatprep.subr.mxu0 0.0
        %1574 = vmatpush2.msra.mxu0 0.0
        %1575 = vmatprep.subr.mxu0 0.0
        %1576 = vmatpush2.msra.mxu0 0.0
        %1577 = vmatprep.subr.mxu0 0.0
        %1578 = vmatpush2.msra.mxu0 0.0
        %1579 = vmatprep.subr.mxu0 0.0
        %1580 = vmatpush2.msra.mxu0 0.0
        %1581 = vmatprep.subr.mxu0 0.0
        %1582 = vmatpush2.msra.mxu0 0.0
        %1583 = vmatprep.subr.mxu0 0.0
        %1584 = vmatpush2.msra.mxu0 0.0
        %1585 = vmatprep.subr.mxu0 0.0
        %1586 = vmatpush2.msra.mxu0 0.0
        %1587 = vmatprep.subr.mxu0 0.0
        %1588 = vmatpush2.msra.mxu0 0.0
        %1589 = vmatprep.subr.mxu0 0.0
        %1590 = vmatpush2.msra.mxu0 0.0
        %1591 = vmatprep.subr.mxu0 0.0
        %1592 = vmatpush2.msra.mxu0 0.0
        %1593 = vmatprep.subr.mxu0 0.0
        %1594 = vmatpush2.msra.mxu0 0.0
        %1595 = vmatprep.subr.mxu0 0.0
        %1596 = vmatpush2.msra.mxu0 0.0
        %1597 = vmatprep.subr.mxu0 0.0
        %1598 = vmatpush2.msra.mxu0 0.0
        %1599 = vmatprep.subr.mxu0 0.0
        %1600 = vmatpush2.msra.mxu0 0.0
        %1601 = vmatprep.subr.mxu0 0.0
        %1602 = vmatpush2.msra.mxu0 0.0
        %1603 = vmatprep.subr.mxu0 0.0
        %1604 = vmatpush2.msra.mxu0 0.0
        %1605 = vmatprep.mubr.f32.mxu0 0.0
        %1606 = vmatmul.mubr.f32.gmra.mxu0 %v1443
        %v1607 = vpop.f32.mrf.mxu0
        %v1608 = vadd.f32 0.0, %v1607
        %v1609 = vpop.f32.mrf.mxu0
        %1610 = vmatprep.mubr.f32.mxu0 0.0
        %1611 = vmatmul.mubr.f32.gmra.mxu0 %v1446
        %v1612 = vpop.f32.mrf.mxu0
        %v1613 = vadd.f32 0.0, %v1612
        %v1614 = vpop.f32.mrf.mxu0
        %1615 = vmatprep.mubr.f32.mxu0 0.0
        %1616 = vmatmul.mubr.f32.gmra.mxu0 %v1449
        %v1617 = vpop.f32.mrf.mxu0
        %v1618 = vadd.f32 0.0, %v1617
        %v1619 = vpop.f32.mrf.mxu0
        %1620 = vmatprep.mubr.f32.mxu0 0.0
        %1621 = vmatmul.mubr.f32.gmra.mxu0 %v1452
        %v1622 = vpop.f32.mrf.mxu0
        %v1623 = vadd.f32 0.0, %v1622
        %v1624 = vpop.f32.mrf.mxu0
        %1625 = vmatprep.mubr.f32.mxu0 0.0
        %1626 = vmatmul.mubr.f32.gmra.mxu0 %v1455
        %v1627 = vpop.f32.mrf.mxu0
        %v1628 = vadd.f32 0.0, %v1627
        %v1629 = vpop.f32.mrf.mxu0
        %1630 = vmatprep.mubr.f32.mxu0 0.0
        %1631 = vmatmul.mubr.f32.gmra.mxu0 %v1458
        %v1632 = vpop.f32.mrf.mxu0
        %v1633 = vadd.f32 0.0, %v1632
        %v1634 = vpop.f32.mrf.mxu0
        %1635 = vmatprep.mubr.f32.mxu0 0.0
        %1636 = vmatmul.mubr.f32.gmra.mxu0 %v1461
        %v1637 = vpop.f32.mrf.mxu0
        %v1638 = vadd.f32 0.0, %v1637
        %v1639 = vpop.f32.mrf.mxu0
        %1640 = vmatprep.mubr.f32.mxu0 0.0
        %1641 = vmatmul.mubr.f32.gmra.mxu0 %v1464
        %v1642 = vpop.f32.mrf.mxu0
        %v1643 = vadd.f32 0.0, %v1642
        %v1644 = vpop.f32.mrf.mxu0
        %1645 = vmatprep.mubr.f32.mxu0 0.0
        %1646 = vmatmul.mubr.f32.gmra.mxu0 %v1467
        %v1647 = vpop.f32.mrf.mxu0
        %v1648 = vadd.f32 0.0, %v1647
        %v1649 = vpop.f32.mrf.mxu0
        %1650 = vmatprep.mubr.f32.mxu0 0.0
        %1651 = vmatmul.mubr.f32.gmra.mxu0 %v1470
        %v1652 = vpop.f32.mrf.mxu0
        %v1653 = vadd.f32 0.0, %v1652
        %v1654 = vpop.f32.mrf.mxu0
        %1655 = vmatprep.mubr.f32.mxu0 0.0
        %1656 = vmatmul.mubr.f32.gmra.mxu0 %v1473
        %v1657 = vpop.f32.mrf.mxu0
        %v1658 = vadd.f32 0.0, %v1657
        %v1659 = vpop.f32.mrf.mxu0
        %1660 = vmatprep.mubr.f32.mxu0 0.0
        %1661 = vmatmul.mubr.f32.gmra.mxu0 %v1476
        %v1662 = vpop.f32.mrf.mxu0
        %v1663 = vadd.f32 0.0, %v1662
        %v1664 = vpop.f32.mrf.mxu0
        %1665 = vmatprep.mubr.f32.mxu0 0.0
        %1666 = vmatmul.mubr.f32.gmra.mxu0 %v1479
        %v1667 = vpop.f32.mrf.mxu0
        %v1668 = vadd.f32 0.0, %v1667
        %v1669 = vpop.f32.mrf.mxu0
        %1670 = vmatprep.mubr.f32.mxu0 0.0
        %1671 = vmatmul.mubr.f32.gmra.mxu0 %v1482
        %v1672 = vpop.f32.mrf.mxu0
        %v1673 = vadd.f32 0.0, %v1672
        %v1674 = vpop.f32.mrf.mxu0
        %1675 = vmatprep.mubr.f32.mxu0 0.0
        %1676 = vmatmul.mubr.f32.gmra.mxu0 %v1485
        %v1677 = vpop.f32.mrf.mxu0
        %v1678 = vadd.f32 0.0, %v1677
        %v1679 = vpop.f32.mrf.mxu0
        %1680 = vmatprep.mubr.f32.mxu0 0.0
        %1681 = vmatmul.mubr.f32.gmra.mxu0 %v1488
        %v1682 = vpop.f32.mrf.mxu0
        %v1683 = vadd.f32 0.0, %v1682
        %v1684 = vpop.f32.mrf.mxu0
        %1685 = vmatprep.mubr.f32.mxu0 0.0
        %1686 = vmatmul.mubr.f32.gmra.mxu0 %v1491
        %v1687 = vpop.f32.mrf.mxu0
        %v1688 = vadd.f32 0.0, %v1687
        %v1689 = vpop.f32.mrf.mxu0
        %1690 = vmatprep.mubr.f32.mxu0 0.0
        %1691 = vmatmul.mubr.f32.gmra.mxu0 %v1494
        %v1692 = vpop.f32.mrf.mxu0
        %v1693 = vadd.f32 0.0, %v1692
        %v1694 = vpop.f32.mrf.mxu0
        %1695 = vmatprep.mubr.f32.mxu0 0.0
        %1696 = vmatmul.mubr.f32.gmra.mxu0 %v1497
        %v1697 = vpop.f32.mrf.mxu0
        %v1698 = vadd.f32 0.0, %v1697
        %v1699 = vpop.f32.mrf.mxu0
        %1700 = vmatprep.mubr.f32.mxu0 0.0
        %1701 = vmatmul.mubr.f32.gmra.mxu0 %v1500
        %v1702 = vpop.f32.mrf.mxu0
        %v1703 = vadd.f32 0.0, %v1702
        %v1704 = vpop.f32.mrf.mxu0
        %1705 = vmatprep.mubr.f32.mxu0 0.0
        %1706 = vmatmul.mubr.f32.gmra.mxu0 %v1503
        %v1707 = vpop.f32.mrf.mxu0
        %v1708 = vadd.f32 0.0, %v1707
        %v1709 = vpop.f32.mrf.mxu0
        %1710 = vmatprep.mubr.f32.mxu0 0.0
        %1711 = vmatmul.mubr.f32.gmra.mxu0 %v1506
        %v1712 = vpop.f32.mrf.mxu0
        %v1713 = vadd.f32 0.0, %v1712
        %v1714 = vpop.f32.mrf.mxu0
        %1715 = vmatprep.mubr.f32.mxu0 0.0
        %1716 = vmatmul.mubr.f32.gmra.mxu0 %v1509
        %v1717 = vpop.f32.mrf.mxu0
        %v1718 = vadd.f32 0.0, %v1717
        %v1719 = vpop.f32.mrf.mxu0
        %1720 = vmatprep.mubr.f32.mxu0 0.0
        %1721 = vmatmul.mubr.f32.gmra.mxu0 %v1512
        %v1722 = vpop.f32.mrf.mxu0
        %v1723 = vadd.f32 0.0, %v1722
        %v1724 = vpop.f32.mrf.mxu0
        %1725 = vmatprep.mubr.f32.mxu0 0.0
        %1726 = vmatmul.mubr.f32.gmra.mxu0 %v1515
        %v1727 = vpop.f32.mrf.mxu0
        %v1728 = vadd.f32 0.0, %v1727
        %v1729 = vpop.f32.mrf.mxu0
        %1730 = vmatprep.mubr.f32.mxu0 0.0
        %1731 = vmatmul.mubr.f32.gmra.mxu0 %v1518
        %v1732 = vpop.f32.mrf.mxu0
        %v1733 = vadd.f32 0.0, %v1732
        %v1734 = vpop.f32.mrf.mxu0
        %1735 = vmatprep.mubr.f32.mxu0 0.0
        %1736 = vmatmul.mubr.f32.gmra.mxu0 %v1521
        %v1737 = vpop.f32.mrf.mxu0
        %v1738 = vadd.f32 0.0, %v1737
        %v1739 = vpop.f32.mrf.mxu0
        %1740 = vmatprep.mubr.f32.mxu0 0.0
        %1741 = vmatmul.mubr.f32.gmra.mxu0 %v1524
        %v1742 = vpop.f32.mrf.mxu0
        %v1743 = vadd.f32 0.0, %v1742
        %v1744 = vpop.f32.mrf.mxu0
        %1745 = vmatprep.mubr.f32.mxu0 0.0
        %1746 = vmatmul.mubr.f32.gmra.mxu0 %v1527
        %v1747 = vpop.f32.mrf.mxu0
        %v1748 = vadd.f32 0.0, %v1747
        %v1749 = vpop.f32.mrf.mxu0
        %1750 = vmatprep.mubr.f32.mxu0 0.0
        %1751 = vmatmul.mubr.f32.gmra.mxu0 %v1530
        %v1752 = vpop.f32.mrf.mxu0
        %v1753 = vadd.f32 0.0, %v1752
        %v1754 = vpop.f32.mrf.mxu0
        %1755 = vmatprep.mubr.f32.mxu0 0.0
        %1756 = vmatmul.mubr.f32.gmra.mxu0 %v1533
        %v1757 = vpop.f32.mrf.mxu0
        %v1758 = vadd.f32 0.0, %v1757
        %v1759 = vpop.f32.mrf.mxu0
        %1760 = vmatprep.mubr.f32.mxu0 0.0
        %1761 = vmatmul.mubr.f32.gmra.mxu0 %v1536
        %v1762 = vpop.f32.mrf.mxu0
        %v1763 = vadd.f32 0.0, %v1762
        %v1764 = vpop.f32.mrf.mxu0
        %1765 = vdwg.mxu0
        %v1766 = vadd.f32 %v1250, %v1608
        %v1767 = vadd.f32 %v1255, %v1613
        %v1768 = vadd.f32 %v1260, %v1618
        %v1769 = vadd.f32 %v1265, %v1623
        %v1770 = vadd.f32 %v1270, %v1628
        %v1771 = vadd.f32 %v1275, %v1633
        %v1772 = vadd.f32 %v1280, %v1638
        %v1773 = vadd.f32 %v1285, %v1643
        %v1774 = vadd.f32 %v1290, %v1648
        %v1775 = vadd.f32 %v1295, %v1653
        %v1776 = vadd.f32 %v1300, %v1658
        %v1777 = vadd.f32 %v1305, %v1663
        %v1778 = vadd.f32 %v1310, %v1668
        %v1779 = vadd.f32 %v1315, %v1673
        %v1780 = vadd.f32 %v1320, %v1678
        %v1781 = vadd.f32 %v1325, %v1683
        %v1782 = vadd.f32 %v1330, %v1688
        %v1783 = vadd.f32 %v1335, %v1693
        %v1784 = vadd.f32 %v1340, %v1698
        %v1785 = vadd.f32 %v1345, %v1703
        %v1786 = vadd.f32 %v1350, %v1708
        %v1787 = vadd.f32 %v1355, %v1713
        %v1788 = vadd.f32 %v1360, %v1718
        %v1789 = vadd.f32 %v1365, %v1723
        %v1790 = vadd.f32 %v1370, %v1728
        %v1791 = vadd.f32 %v1375, %v1733
        %v1792 = vadd.f32 %v1380, %v1738
        %v1793 = vadd.f32 %v1385, %v1743
        %v1794 = vadd.f32 %v1390, %v1748
        %v1795 = vadd.f32 %v1395, %v1753
        %v1796 = vadd.f32 %v1400, %v1758
        %v1797 = vadd.f32 %v1405, %v1763
        %v1798 = vld [vmem:[%s626] sm:$0xff]
        %v1799 = vld [vmem:[%s626 + $0x8] sm:$0xff]
        %v1800 = vld [vmem:[%s626 + $0x18] sm:$0xff]
        %v1801 = vld [vmem:[%s626 + $0x20] sm:$0xff]
        %v1802 = vld [vmem:[%s626 + $0x30] sm:$0xff]
        %v1803 = vld [vmem:[%s626 + $0x38] sm:$0xff]
        %v1804 = vld [vmem:[%s626 + $0x48] sm:$0xff]
        %v1805 = vld [vmem:[%s626 + $0x50] sm:$0xff]
        %v1806 = vld [vmem:[%s626 + $0x60] sm:$0xff]
        %v1807 = vld [vmem:[%s626 + $0x68] sm:$0xff]
        %v1808 = vld [vmem:[%s626 + $0x78] sm:$0xff]
        %v1809 = vld [vmem:[%s626 + $0x80] sm:$0xff]
        %v1810 = vld [vmem:[%s626 + $0x90] sm:$0xff]
        %v1811 = vld [vmem:[%s626 + $0x98] sm:$0xff]
        %v1812 = vld [vmem:[%s626 + $0xa8] sm:$0xff]
        %v1813 = vld [vmem:[%s626 + $0xb0] sm:$0xff]
        %v1814 = vld [vmem:[%s626 + $0xc0] sm:$0xff]
        %v1815 = vld [vmem:[%s626 + $0xc8] sm:$0xff]
        %v1816 = vld [vmem:[%s626 + $0xd8] sm:$0xff]
        %v1817 = vld [vmem:[%s626 + $0xe0] sm:$0xff]
        %v1818 = vld [vmem:[%s626 + $0xf0] sm:$0xff]
        %v1819 = vld [vmem:[%s626 + $0xf8] sm:$0xff]
        %v1820 = vld [vmem:[%s626 + $0x108] sm:$0xff]
        %v1821 = vld [vmem:[%s626 + $0x110] sm:$0xff]
        %v1822 = vld [vmem:[%s626 + $0x120] sm:$0xff]
        %v1823 = vld [vmem:[%s626 + $0x128] sm:$0xff]
        %v1824 = vld [vmem:[%s626 + $0x138] sm:$0xff]
        %v1825 = vld [vmem:[%s626 + $0x140] sm:$0xff]
        %v1826 = vld [vmem:[%s626 + $0x150] sm:$0xff]
        %v1827 = vld [vmem:[%s626 + $0x158] sm:$0xff]
        %v1828 = vld [vmem:[%s626 + $0x168] sm:$0xff]
        %v1829 = vld [vmem:[%s626 + $0x170] sm:$0xff]
        %s1830 = scalar_lea.vmem %s3, 12
        %v1831 = vld [vmem:[%s1830] sm:$0xf]
        %v1833 = vsel %vm617, %v1798, 0
        %v1836 = vsel %vm617, %v1799, 0
        %v1839 = vsel %vm617, %v1800, 0
        %v1842 = vsel %vm617, %v1801, 0
        %v1845 = vsel %vm617, %v1802, 0
        %v1848 = vsel %vm617, %v1803, 0
        %v1851 = vsel %vm617, %v1804, 0
        %v1854 = vsel %vm617, %v1805, 0
        %v1857 = vsel %vm617, %v1806, 0
        %v1860 = vsel %vm617, %v1807, 0
        %v1863 = vsel %vm617, %v1808, 0
        %v1866 = vsel %vm617, %v1809, 0
        %v1869 = vsel %vm617, %v1810, 0
        %v1872 = vsel %vm617, %v1811, 0
        %v1875 = vsel %vm617, %v1812, 0
        %v1878 = vsel %vm617, %v1813, 0
        %v1881 = vsel %vm617, %v1814, 0
        %v1884 = vsel %vm617, %v1815, 0
        %v1887 = vsel %vm617, %v1816, 0
        %v1890 = vsel %vm617, %v1817, 0
        %v1893 = vsel %vm617, %v1818, 0
        %v1896 = vsel %vm617, %v1819, 0
        %v1899 = vsel %vm617, %v1820, 0
        %v1902 = vsel %vm617, %v1821, 0
        %v1905 = vsel %vm617, %v1822, 0
        %v1908 = vsel %vm617, %v1823, 0
        %v1911 = vsel %vm617, %v1824, 0
        %v1914 = vsel %vm617, %v1825, 0
        %v1917 = vsel %vm617, %v1826, 0
        %v1920 = vsel %vm617, %v1827, 0
        %v1923 = vsel %vm617, %v1828, 0
        %v1926 = vsel %vm617, %v1829, 0
        %v1929 = vsel %vm855, %v1831, 0
        %1931 = vmatprep.subr.mxu0 0.0
        %1932 = vmatpush1.msra.mxu0 0.0
        %1933 = vmatprep.subr.mxu0 0.0
        %1934 = vmatpush1.msra.mxu0 0.0
        %1935 = vmatprep.subr.mxu0 0.0
        %1936 = vmatpush1.msra.mxu0 0.0
        %1937 = vmatprep.subr.mxu0 0.0
        %1938 = vmatpush1.msra.mxu0 0.0
        %1939 = vmatprep.subr.mxu0 0.0
        %1940 = vmatpush1.msra.mxu0 0.0
        %1941 = vmatprep.subr.mxu0 0.0
        %1942 = vmatpush1.msra.mxu0 0.0
        %1943 = vmatprep.subr.mxu0 0.0
        %1944 = vmatpush1.msra.mxu0 0.0
        %1945 = vmatprep.subr.mxu0 0.0
        %1946 = vmatpush1.msra.mxu0 0.0
        %1947 = vmatprep.subr.mxu0 0.0
        %1948 = vmatpush1.msra.mxu0 0.0
        %1949 = vmatprep.subr.mxu0 0.0
        %1950 = vmatpush1.msra.mxu0 0.0
        %1951 = vmatprep.subr.mxu0 0.0
        %1952 = vmatpush1.msra.mxu0 0.0
        %1953 = vmatprep.subr.mxu0 0.0
        %1954 = vmatpush1.msra.mxu0 0.0
        %1955 = vmatprep.subr.mxu0 0.0
        %1956 = vmatpush1.msra.mxu0 0.0
        %1957 = vmatprep.subr.mxu0 0.0
        %1958 = vmatpush1.msra.mxu0 0.0
        %1959 = vmatprep.subr.mxu0 0.0
        %1960 = vmatpush1.msra.mxu0 0.0
        %1961 = vmatprep.subr.mxu0 0.0
        %1962 = vmatpush1.msra.mxu0 %v1929
        %1963 = vmatprep.subr.mxu0 0.0
        %1964 = vmatpush2.msra.mxu0 0.0
        %1965 = vmatprep.subr.mxu0 0.0
        %1966 = vmatpush2.msra.mxu0 0.0
        %1967 = vmatprep.subr.mxu0 0.0
        %1968 = vmatpush2.msra.mxu0 0.0
        %1969 = vmatprep.subr.mxu0 0.0
        %1970 = vmatpush2.msra.mxu0 0.0
        %1971 = vmatprep.subr.mxu0 0.0
        %1972 = vmatpush2.msra.mxu0 0.0
        %1973 = vmatprep.subr.mxu0 0.0
        %1974 = vmatpush2.msra.mxu0 0.0
        %1975 = vmatprep.subr.mxu0 0.0
        %1976 = vmatpush2.msra.mxu0 0.0
        %1977 = vmatprep.subr.mxu0 0.0
        %1978 = vmatpush2.msra.mxu0 0.0
        %1979 = vmatprep.subr.mxu0 0.0
        %1980 = vmatpush2.msra.mxu0 0.0
        %1981 = vmatprep.subr.mxu0 0.0
        %1982 = vmatpush2.msra.mxu0 0.0
        %1983 = vmatprep.subr.mxu0 0.0
        %1984 = vmatpush2.msra.mxu0 0.0
        %1985 = vmatprep.subr.mxu0 0.0
        %1986 = vmatpush2.msra.mxu0 0.0
        %1987 = vmatprep.subr.mxu0 0.0
        %1988 = vmatpush2.msra.mxu0 0.0
        %1989 = vmatprep.subr.mxu0 0.0
        %1990 = vmatpush2.msra.mxu0 0.0
        %1991 = vmatprep.subr.mxu0 0.0
        %1992 = vmatpush2.msra.mxu0 0.0
        %1993 = vmatprep.subr.mxu0 0.0
        %1994 = vmatpush2.msra.mxu0 0.0
        %1995 = vmatprep.mubr.f32.mxu0 0.0
        %1996 = vmatmul.mubr.f32.gmra.mxu0 %v1833
        %v1997 = vpop.f32.mrf.mxu0
        %v1998 = vadd.f32 0.0, %v1997
        %v1999 = vpop.f32.mrf.mxu0
        %2000 = vmatprep.mubr.f32.mxu0 0.0
        %2001 = vmatmul.mubr.f32.gmra.mxu0 %v1836
        %v2002 = vpop.f32.mrf.mxu0
        %v2003 = vadd.f32 0.0, %v2002
        %v2004 = vpop.f32.mrf.mxu0
        %2005 = vmatprep.mubr.f32.mxu0 0.0
        %2006 = vmatmul.mubr.f32.gmra.mxu0 %v1839
        %v2007 = vpop.f32.mrf.mxu0
        %v2008 = vadd.f32 0.0, %v2007
        %v2009 = vpop.f32.mrf.mxu0
        %2010 = vmatprep.mubr.f32.mxu0 0.0
        %2011 = vmatmul.mubr.f32.gmra.mxu0 %v1842
        %v2012 = vpop.f32.mrf.mxu0
        %v2013 = vadd.f32 0.0, %v2012
        %v2014 = vpop.f32.mrf.mxu0
        %2015 = vmatprep.mubr.f32.mxu0 0.0
        %2016 = vmatmul.mubr.f32.gmra.mxu0 %v1845
        %v2017 = vpop.f32.mrf.mxu0
        %v2018 = vadd.f32 0.0, %v2017
        %v2019 = vpop.f32.mrf.mxu0
        %2020 = vmatprep.mubr.f32.mxu0 0.0
        %2021 = vmatmul.mubr.f32.gmra.mxu0 %v1848
        %v2022 = vpop.f32.mrf.mxu0
        %v2023 = vadd.f32 0.0, %v2022
        %v2024 = vpop.f32.mrf.mxu0
        %2025 = vmatprep.mubr.f32.mxu0 0.0
        %2026 = vmatmul.mubr.f32.gmra.mxu0 %v1851
        %v2027 = vpop.f32.mrf.mxu0
        %v2028 = vadd.f32 0.0, %v2027
        %v2029 = vpop.f32.mrf.mxu0
        %2030 = vmatprep.mubr.f32.mxu0 0.0
        %2031 = vmatmul.mubr.f32.gmra.mxu0 %v1854
        %v2032 = vpop.f32.mrf.mxu0
        %v2033 = vadd.f32 0.0, %v2032
        %v2034 = vpop.f32.mrf.mxu0
        %2035 = vmatprep.mubr.f32.mxu0 0.0
        %2036 = vmatmul.mubr.f32.gmra.mxu0 %v1857
        %v2037 = vpop.f32.mrf.mxu0
        %v2038 = vadd.f32 0.0, %v2037
        %v2039 = vpop.f32.mrf.mxu0
        %2040 = vmatprep.mubr.f32.mxu0 0.0
        %2041 = vmatmul.mubr.f32.gmra.mxu0 %v1860
        %v2042 = vpop.f32.mrf.mxu0
        %v2043 = vadd.f32 0.0, %v2042
        %v2044 = vpop.f32.mrf.mxu0
        %2045 = vmatprep.mubr.f32.mxu0 0.0
        %2046 = vmatmul.mubr.f32.gmra.mxu0 %v1863
        %v2047 = vpop.f32.mrf.mxu0
        %v2048 = vadd.f32 0.0, %v2047
        %v2049 = vpop.f32.mrf.mxu0
        %2050 = vmatprep.mubr.f32.mxu0 0.0
        %2051 = vmatmul.mubr.f32.gmra.mxu0 %v1866
        %v2052 = vpop.f32.mrf.mxu0
        %v2053 = vadd.f32 0.0, %v2052
        %v2054 = vpop.f32.mrf.mxu0
        %2055 = vmatprep.mubr.f32.mxu0 0.0
        %2056 = vmatmul.mubr.f32.gmra.mxu0 %v1869
        %v2057 = vpop.f32.mrf.mxu0
        %v2058 = vadd.f32 0.0, %v2057
        %v2059 = vpop.f32.mrf.mxu0
        %2060 = vmatprep.mubr.f32.mxu0 0.0
        %2061 = vmatmul.mubr.f32.gmra.mxu0 %v1872
        %v2062 = vpop.f32.mrf.mxu0
        %v2063 = vadd.f32 0.0, %v2062
        %v2064 = vpop.f32.mrf.mxu0
        %2065 = vmatprep.mubr.f32.mxu0 0.0
        %2066 = vmatmul.mubr.f32.gmra.mxu0 %v1875
        %v2067 = vpop.f32.mrf.mxu0
        %v2068 = vadd.f32 0.0, %v2067
        %v2069 = vpop.f32.mrf.mxu0
        %2070 = vmatprep.mubr.f32.mxu0 0.0
        %2071 = vmatmul.mubr.f32.gmra.mxu0 %v1878
        %v2072 = vpop.f32.mrf.mxu0
        %v2073 = vadd.f32 0.0, %v2072
        %v2074 = vpop.f32.mrf.mxu0
        %2075 = vmatprep.mubr.f32.mxu0 0.0
        %2076 = vmatmul.mubr.f32.gmra.mxu0 %v1881
        %v2077 = vpop.f32.mrf.mxu0
        %v2078 = vadd.f32 0.0, %v2077
        %v2079 = vpop.f32.mrf.mxu0
        %2080 = vmatprep.mubr.f32.mxu0 0.0
        %2081 = vmatmul.mubr.f32.gmra.mxu0 %v1884
        %v2082 = vpop.f32.mrf.mxu0
        %v2083 = vadd.f32 0.0, %v2082
        %v2084 = vpop.f32.mrf.mxu0
        %2085 = vmatprep.mubr.f32.mxu0 0.0
        %2086 = vmatmul.mubr.f32.gmra.mxu0 %v1887
        %v2087 = vpop.f32.mrf.mxu0
        %v2088 = vadd.f32 0.0, %v2087
        %v2089 = vpop.f32.mrf.mxu0
        %2090 = vmatprep.mubr.f32.mxu0 0.0
        %2091 = vmatmul.mubr.f32.gmra.mxu0 %v1890
        %v2092 = vpop.f32.mrf.mxu0
        %v2093 = vadd.f32 0.0, %v2092
        %v2094 = vpop.f32.mrf.mxu0
        %2095 = vmatprep.mubr.f32.mxu0 0.0
        %2096 = vmatmul.mubr.f32.gmra.mxu0 %v1893
        %v2097 = vpop.f32.mrf.mxu0
        %v2098 = vadd.f32 0.0, %v2097
        %v2099 = vpop.f32.mrf.mxu0
        %2100 = vmatprep.mubr.f32.mxu0 0.0
        %2101 = vmatmul.mubr.f32.gmra.mxu0 %v1896
        %v2102 = vpop.f32.mrf.mxu0
        %v2103 = vadd.f32 0.0, %v2102
        %v2104 = vpop.f32.mrf.mxu0
        %2105 = vmatprep.mubr.f32.mxu0 0.0
        %2106 = vmatmul.mubr.f32.gmra.mxu0 %v1899
        %v2107 = vpop.f32.mrf.mxu0
        %v2108 = vadd.f32 0.0, %v2107
        %v2109 = vpop.f32.mrf.mxu0
        %2110 = vmatprep.mubr.f32.mxu0 0.0
        %2111 = vmatmul.mubr.f32.gmra.mxu0 %v1902
        %v2112 = vpop.f32.mrf.mxu0
        %v2113 = vadd.f32 0.0, %v2112
        %v2114 = vpop.f32.mrf.mxu0
        %2115 = vmatprep.mubr.f32.mxu0 0.0
        %2116 = vmatmul.mubr.f32.gmra.mxu0 %v1905
        %v2117 = vpop.f32.mrf.mxu0
        %v2118 = vadd.f32 0.0, %v2117
        %v2119 = vpop.f32.mrf.mxu0
        %2120 = vmatprep.mubr.f32.mxu0 0.0
        %2121 = vmatmul.mubr.f32.gmra.mxu0 %v1908
        %v2122 = vpop.f32.mrf.mxu0
        %v2123 = vadd.f32 0.0, %v2122
        %v2124 = vpop.f32.mrf.mxu0
        %2125 = vmatprep.mubr.f32.mxu0 0.0
        %2126 = vmatmul.mubr.f32.gmra.mxu0 %v1911
        %v2127 = vpop.f32.mrf.mxu0
        %v2128 = vadd.f32 0.0, %v2127
        %v2129 = vpop.f32.mrf.mxu0
        %2130 = vmatprep.mubr.f32.mxu0 0.0
        %2131 = vmatmul.mubr.f32.gmra.mxu0 %v1914
        %v2132 = vpop.f32.mrf.mxu0
        %v2133 = vadd.f32 0.0, %v2132
        %v2134 = vpop.f32.mrf.mxu0
        %2135 = vmatprep.mubr.f32.mxu0 0.0
        %2136 = vmatmul.mubr.f32.gmra.mxu0 %v1917
        %v2137 = vpop.f32.mrf.mxu0
        %v2138 = vadd.f32 0.0, %v2137
        %v2139 = vpop.f32.mrf.mxu0
        %2140 = vmatprep.mubr.f32.mxu0 0.0
        %2141 = vmatmul.mubr.f32.gmra.mxu0 %v1920
        %v2142 = vpop.f32.mrf.mxu0
        %v2143 = vadd.f32 0.0, %v2142
        %v2144 = vpop.f32.mrf.mxu0
        %2145 = vmatprep.mubr.f32.mxu0 0.0
        %2146 = vmatmul.mubr.f32.gmra.mxu0 %v1923
        %v2147 = vpop.f32.mrf.mxu0
        %v2148 = vadd.f32 0.0, %v2147
        %v2149 = vpop.f32.mrf.mxu0
        %2150 = vmatprep.mubr.f32.mxu0 0.0
        %2151 = vmatmul.mubr.f32.gmra.mxu0 %v1926
        %v2152 = vpop.f32.mrf.mxu0
        %v2153 = vadd.f32 0.0, %v2152
        %v2154 = vpop.f32.mrf.mxu0
        %2155 = vdwg.mxu0
        %v2156 = vadd.f32 %v1766, %v1998
        %v2157 = vadd.f32 %v1767, %v2003
        %v2158 = vadd.f32 %v1768, %v2008
        %v2159 = vadd.f32 %v1769, %v2013
        %v2160 = vadd.f32 %v1770, %v2018
        %v2161 = vadd.f32 %v1771, %v2023
        %v2162 = vadd.f32 %v1772, %v2028
        %v2163 = vadd.f32 %v1773, %v2033
        %v2164 = vadd.f32 %v1774, %v2038
        %v2165 = vadd.f32 %v1775, %v2043
        %v2166 = vadd.f32 %v1776, %v2048
        %v2167 = vadd.f32 %v1777, %v2053
        %v2168 = vadd.f32 %v1778, %v2058
        %v2169 = vadd.f32 %v1779, %v2063
        %v2170 = vadd.f32 %v1780, %v2068
        %v2171 = vadd.f32 %v1781, %v2073
        %v2172 = vadd.f32 %v1782, %v2078
        %v2173 = vadd.f32 %v1783, %v2083
        %v2174 = vadd.f32 %v1784, %v2088
        %v2175 = vadd.f32 %v1785, %v2093
        %v2176 = vadd.f32 %v1786, %v2098
        %v2177 = vadd.f32 %v1787, %v2103
        %v2178 = vadd.f32 %v1788, %v2108
        %v2179 = vadd.f32 %v1789, %v2113
        %v2180 = vadd.f32 %v1790, %v2118
        %v2181 = vadd.f32 %v1791, %v2123
        %v2182 = vadd.f32 %v1792, %v2128
        %v2183 = vadd.f32 %v1793, %v2133
        %v2184 = vadd.f32 %v1794, %v2138
        %v2185 = vadd.f32 %v1795, %v2143
        %v2186 = vadd.f32 %v1796, %v2148
        %v2187 = vadd.f32 %v1797, %v2153
        %v2188 = vld [vmem:[%s626 + $0x1] sm:$0xff]
        %v2189 = vld [vmem:[%s626 + $0x9] sm:$0xff]
        %v2190 = vld [vmem:[%s626 + $0x19] sm:$0xff]
        %v2191 = vld [vmem:[%s626 + $0x21] sm:$0xff]
        %v2192 = vld [vmem:[%s626 + $0x31] sm:$0xff]
        %v2193 = vld [vmem:[%s626 + $0x39] sm:$0xff]
        %v2194 = vld [vmem:[%s626 + $0x49] sm:$0xff]
        %v2195 = vld [vmem:[%s626 + $0x51] sm:$0xff]
        %v2196 = vld [vmem:[%s626 + $0x61] sm:$0xff]
        %v2197 = vld [vmem:[%s626 + $0x69] sm:$0xff]
        %v2198 = vld [vmem:[%s626 + $0x79] sm:$0xff]
        %v2199 = vld [vmem:[%s626 + $0x81] sm:$0xff]
        %v2200 = vld [vmem:[%s626 + $0x91] sm:$0xff]
        %v2201 = vld [vmem:[%s626 + $0x99] sm:$0xff]
        %v2202 = vld [vmem:[%s626 + $0xa9] sm:$0xff]
        %v2203 = vld [vmem:[%s626 + $0xb1] sm:$0xff]
        %v2204 = vld [vmem:[%s626 + $0xc1] sm:$0xff]
        %v2205 = vld [vmem:[%s626 + $0xc9] sm:$0xff]
        %v2206 = vld [vmem:[%s626 + $0xd9] sm:$0xff]
        %v2207 = vld [vmem:[%s626 + $0xe1] sm:$0xff]
        %v2208 = vld [vmem:[%s626 + $0xf1] sm:$0xff]
        %v2209 = vld [vmem:[%s626 + $0xf9] sm:$0xff]
        %v2210 = vld [vmem:[%s626 + $0x109] sm:$0xff]
        %v2211 = vld [vmem:[%s626 + $0x111] sm:$0xff]
        %v2212 = vld [vmem:[%s626 + $0x121] sm:$0xff]
        %v2213 = vld [vmem:[%s626 + $0x129] sm:$0xff]
        %v2214 = vld [vmem:[%s626 + $0x139] sm:$0xff]
        %v2215 = vld [vmem:[%s626 + $0x141] sm:$0xff]
        %v2216 = vld [vmem:[%s626 + $0x151] sm:$0xff]
        %v2217 = vld [vmem:[%s626 + $0x159] sm:$0xff]
        %v2218 = vld [vmem:[%s626 + $0x169] sm:$0xff]
        %v2219 = vld [vmem:[%s626 + $0x171] sm:$0xff]
        %s2220 = scalar_lea.vmem %s3, 16
        %v2221 = vld [vmem:[%s2220] sm:$0xf]
        %v2223 = vsel %vm617, %v2188, 0
        %v2226 = vsel %vm617, %v2189, 0
        %v2229 = vsel %vm617, %v2190, 0
        %v2232 = vsel %vm617, %v2191, 0
        %v2235 = vsel %vm617, %v2192, 0
        %v2238 = vsel %vm617, %v2193, 0
        %v2241 = vsel %vm617, %v2194, 0
        %v2244 = vsel %vm617, %v2195, 0
        %v2247 = vsel %vm617, %v2196, 0
        %v2250 = vsel %vm617, %v2197, 0
        %v2253 = vsel %vm617, %v2198, 0
        %v2256 = vsel %vm617, %v2199, 0
        %v2259 = vsel %vm617, %v2200, 0
        %v2262 = vsel %vm617, %v2201, 0
        %v2265 = vsel %vm617, %v2202, 0
        %v2268 = vsel %vm617, %v2203, 0
        %v2271 = vsel %vm617, %v2204, 0
        %v2274 = vsel %vm617, %v2205, 0
        %v2277 = vsel %vm617, %v2206, 0
        %v2280 = vsel %vm617, %v2207, 0
        %v2283 = vsel %vm617, %v2208, 0
        %v2286 = vsel %vm617, %v2209, 0
        %v2289 = vsel %vm617, %v2210, 0
        %v2292 = vsel %vm617, %v2211, 0
        %v2295 = vsel %vm617, %v2212, 0
        %v2298 = vsel %vm617, %v2213, 0
        %v2301 = vsel %vm617, %v2214, 0
        %v2304 = vsel %vm617, %v2215, 0
        %v2307 = vsel %vm617, %v2216, 0
        %v2310 = vsel %vm617, %v2217, 0
        %v2313 = vsel %vm617, %v2218, 0
        %v2316 = vsel %vm617, %v2219, 0
        %v2319 = vsel %vm855, %v2221, 0
        %2321 = vmatprep.subr.mxu0 0.0
        %2322 = vmatpush1.msra.mxu0 0.0
        %2323 = vmatprep.subr.mxu0 0.0
        %2324 = vmatpush1.msra.mxu0 0.0
        %2325 = vmatprep.subr.mxu0 0.0
        %2326 = vmatpush1.msra.mxu0 0.0
        %2327 = vmatprep.subr.mxu0 0.0
        %2328 = vmatpush1.msra.mxu0 0.0
        %2329 = vmatprep.subr.mxu0 0.0
        %2330 = vmatpush1.msra.mxu0 0.0
        %2331 = vmatprep.subr.mxu0 0.0
        %2332 = vmatpush1.msra.mxu0 0.0
        %2333 = vmatprep.subr.mxu0 0.0
        %2334 = vmatpush1.msra.mxu0 0.0
        %2335 = vmatprep.subr.mxu0 0.0
        %2336 = vmatpush1.msra.mxu0 0.0
        %2337 = vmatprep.subr.mxu0 0.0
        %2338 = vmatpush1.msra.mxu0 0.0
        %2339 = vmatprep.subr.mxu0 0.0
        %2340 = vmatpush1.msra.mxu0 0.0
        %2341 = vmatprep.subr.mxu0 0.0
        %2342 = vmatpush1.msra.mxu0 0.0
        %2343 = vmatprep.subr.mxu0 0.0
        %2344 = vmatpush1.msra.mxu0 0.0
        %2345 = vmatprep.subr.mxu0 0.0
        %2346 = vmatpush1.msra.mxu0 0.0
        %2347 = vmatprep.subr.mxu0 0.0
        %2348 = vmatpush1.msra.mxu0 0.0
        %2349 = vmatprep.subr.mxu0 0.0
        %2350 = vmatpush1.msra.mxu0 0.0
        %2351 = vmatprep.subr.mxu0 0.0
        %2352 = vmatpush1.msra.mxu0 %v2319
        %2353 = vmatprep.subr.mxu0 0.0
        %2354 = vmatpush2.msra.mxu0 0.0
        %2355 = vmatprep.subr.mxu0 0.0
        %2356 = vmatpush2.msra.mxu0 0.0
        %2357 = vmatprep.subr.mxu0 0.0
        %2358 = vmatpush2.msra.mxu0 0.0
        %2359 = vmatprep.subr.mxu0 0.0
        %2360 = vmatpush2.msra.mxu0 0.0
        %2361 = vmatprep.subr.mxu0 0.0
        %2362 = vmatpush2.msra.mxu0 0.0
        %2363 = vmatprep.subr.mxu0 0.0
        %2364 = vmatpush2.msra.mxu0 0.0
        %2365 = vmatprep.subr.mxu0 0.0
        %2366 = vmatpush2.msra.mxu0 0.0
        %2367 = vmatprep.subr.mxu0 0.0
        %2368 = vmatpush2.msra.mxu0 0.0
        %2369 = vmatprep.subr.mxu0 0.0
        %2370 = vmatpush2.msra.mxu0 0.0
        %2371 = vmatprep.subr.mxu0 0.0
        %2372 = vmatpush2.msra.mxu0 0.0
        %2373 = vmatprep.subr.mxu0 0.0
        %2374 = vmatpush2.msra.mxu0 0.0
        %2375 = vmatprep.subr.mxu0 0.0
        %2376 = vmatpush2.msra.mxu0 0.0
        %2377 = vmatprep.subr.mxu0 0.0
        %2378 = vmatpush2.msra.mxu0 0.0
        %2379 = vmatprep.subr.mxu0 0.0
        %2380 = vmatpush2.msra.mxu0 0.0
        %2381 = vmatprep.subr.mxu0 0.0
        %2382 = vmatpush2.msra.mxu0 0.0
        %2383 = vmatprep.subr.mxu0 0.0
        %2384 = vmatpush2.msra.mxu0 0.0
        %2385 = vmatprep.mubr.f32.mxu0 0.0
        %2386 = vmatmul.mubr.f32.gmra.mxu0 %v2223
        %v2387 = vpop.f32.mrf.mxu0
        %v2388 = vadd.f32 0.0, %v2387
        %v2389 = vpop.f32.mrf.mxu0
        %2390 = vmatprep.mubr.f32.mxu0 0.0
        %2391 = vmatmul.mubr.f32.gmra.mxu0 %v2226
        %v2392 = vpop.f32.mrf.mxu0
        %v2393 = vadd.f32 0.0, %v2392
        %v2394 = vpop.f32.mrf.mxu0
        %2395 = vmatprep.mubr.f32.mxu0 0.0
        %2396 = vmatmul.mubr.f32.gmra.mxu0 %v2229
        %v2397 = vpop.f32.mrf.mxu0
        %v2398 = vadd.f32 0.0, %v2397
        %v2399 = vpop.f32.mrf.mxu0
        %2400 = vmatprep.mubr.f32.mxu0 0.0
        %2401 = vmatmul.mubr.f32.gmra.mxu0 %v2232
        %v2402 = vpop.f32.mrf.mxu0
        %v2403 = vadd.f32 0.0, %v2402
        %v2404 = vpop.f32.mrf.mxu0
        %2405 = vmatprep.mubr.f32.mxu0 0.0
        %2406 = vmatmul.mubr.f32.gmra.mxu0 %v2235
        %v2407 = vpop.f32.mrf.mxu0
        %v2408 = vadd.f32 0.0, %v2407
        %v2409 = vpop.f32.mrf.mxu0
        %2410 = vmatprep.mubr.f32.mxu0 0.0
        %2411 = vmatmul.mubr.f32.gmra.mxu0 %v2238
        %v2412 = vpop.f32.mrf.mxu0
        %v2413 = vadd.f32 0.0, %v2412
        %v2414 = vpop.f32.mrf.mxu0
        %2415 = vmatprep.mubr.f32.mxu0 0.0
        %2416 = vmatmul.mubr.f32.gmra.mxu0 %v2241
        %v2417 = vpop.f32.mrf.mxu0
        %v2418 = vadd.f32 0.0, %v2417
        %v2419 = vpop.f32.mrf.mxu0
        %2420 = vmatprep.mubr.f32.mxu0 0.0
        %2421 = vmatmul.mubr.f32.gmra.mxu0 %v2244
        %v2422 = vpop.f32.mrf.mxu0
        %v2423 = vadd.f32 0.0, %v2422
        %v2424 = vpop.f32.mrf.mxu0
        %2425 = vmatprep.mubr.f32.mxu0 0.0
        %2426 = vmatmul.mubr.f32.gmra.mxu0 %v2247
        %v2427 = vpop.f32.mrf.mxu0
        %v2428 = vadd.f32 0.0, %v2427
        %v2429 = vpop.f32.mrf.mxu0
        %2430 = vmatprep.mubr.f32.mxu0 0.0
        %2431 = vmatmul.mubr.f32.gmra.mxu0 %v2250
        %v2432 = vpop.f32.mrf.mxu0
        %v2433 = vadd.f32 0.0, %v2432
        %v2434 = vpop.f32.mrf.mxu0
        %2435 = vmatprep.mubr.f32.mxu0 0.0
        %2436 = vmatmul.mubr.f32.gmra.mxu0 %v2253
        %v2437 = vpop.f32.mrf.mxu0
        %v2438 = vadd.f32 0.0, %v2437
        %v2439 = vpop.f32.mrf.mxu0
        %2440 = vmatprep.mubr.f32.mxu0 0.0
        %2441 = vmatmul.mubr.f32.gmra.mxu0 %v2256
        %v2442 = vpop.f32.mrf.mxu0
        %v2443 = vadd.f32 0.0, %v2442
        %v2444 = vpop.f32.mrf.mxu0
        %2445 = vmatprep.mubr.f32.mxu0 0.0
        %2446 = vmatmul.mubr.f32.gmra.mxu0 %v2259
        %v2447 = vpop.f32.mrf.mxu0
        %v2448 = vadd.f32 0.0, %v2447
        %v2449 = vpop.f32.mrf.mxu0
        %2450 = vmatprep.mubr.f32.mxu0 0.0
        %2451 = vmatmul.mubr.f32.gmra.mxu0 %v2262
        %v2452 = vpop.f32.mrf.mxu0
        %v2453 = vadd.f32 0.0, %v2452
        %v2454 = vpop.f32.mrf.mxu0
        %2455 = vmatprep.mubr.f32.mxu0 0.0
        %2456 = vmatmul.mubr.f32.gmra.mxu0 %v2265
        %v2457 = vpop.f32.mrf.mxu0
        %v2458 = vadd.f32 0.0, %v2457
        %v2459 = vpop.f32.mrf.mxu0
        %2460 = vmatprep.mubr.f32.mxu0 0.0
        %2461 = vmatmul.mubr.f32.gmra.mxu0 %v2268
        %v2462 = vpop.f32.mrf.mxu0
        %v2463 = vadd.f32 0.0, %v2462
        %v2464 = vpop.f32.mrf.mxu0
        %2465 = vmatprep.mubr.f32.mxu0 0.0
        %2466 = vmatmul.mubr.f32.gmra.mxu0 %v2271
        %v2467 = vpop.f32.mrf.mxu0
        %v2468 = vadd.f32 0.0, %v2467
        %v2469 = vpop.f32.mrf.mxu0
        %2470 = vmatprep.mubr.f32.mxu0 0.0
        %2471 = vmatmul.mubr.f32.gmra.mxu0 %v2274
        %v2472 = vpop.f32.mrf.mxu0
        %v2473 = vadd.f32 0.0, %v2472
        %v2474 = vpop.f32.mrf.mxu0
        %2475 = vmatprep.mubr.f32.mxu0 0.0
        %2476 = vmatmul.mubr.f32.gmra.mxu0 %v2277
        %v2477 = vpop.f32.mrf.mxu0
        %v2478 = vadd.f32 0.0, %v2477
        %v2479 = vpop.f32.mrf.mxu0
        %2480 = vmatprep.mubr.f32.mxu0 0.0
        %2481 = vmatmul.mubr.f32.gmra.mxu0 %v2280
        %v2482 = vpop.f32.mrf.mxu0
        %v2483 = vadd.f32 0.0, %v2482
        %v2484 = vpop.f32.mrf.mxu0
        %2485 = vmatprep.mubr.f32.mxu0 0.0
        %2486 = vmatmul.mubr.f32.gmra.mxu0 %v2283
        %v2487 = vpop.f32.mrf.mxu0
        %v2488 = vadd.f32 0.0, %v2487
        %v2489 = vpop.f32.mrf.mxu0
        %2490 = vmatprep.mubr.f32.mxu0 0.0
        %2491 = vmatmul.mubr.f32.gmra.mxu0 %v2286
        %v2492 = vpop.f32.mrf.mxu0
        %v2493 = vadd.f32 0.0, %v2492
        %v2494 = vpop.f32.mrf.mxu0
        %2495 = vmatprep.mubr.f32.mxu0 0.0
        %2496 = vmatmul.mubr.f32.gmra.mxu0 %v2289
        %v2497 = vpop.f32.mrf.mxu0
        %v2498 = vadd.f32 0.0, %v2497
        %v2499 = vpop.f32.mrf.mxu0
        %2500 = vmatprep.mubr.f32.mxu0 0.0
        %2501 = vmatmul.mubr.f32.gmra.mxu0 %v2292
        %v2502 = vpop.f32.mrf.mxu0
        %v2503 = vadd.f32 0.0, %v2502
        %v2504 = vpop.f32.mrf.mxu0
        %2505 = vmatprep.mubr.f32.mxu0 0.0
        %2506 = vmatmul.mubr.f32.gmra.mxu0 %v2295
        %v2507 = vpop.f32.mrf.mxu0
        %v2508 = vadd.f32 0.0, %v2507
        %v2509 = vpop.f32.mrf.mxu0
        %2510 = vmatprep.mubr.f32.mxu0 0.0
        %2511 = vmatmul.mubr.f32.gmra.mxu0 %v2298
        %v2512 = vpop.f32.mrf.mxu0
        %v2513 = vadd.f32 0.0, %v2512
        %v2514 = vpop.f32.mrf.mxu0
        %2515 = vmatprep.mubr.f32.mxu0 0.0
        %2516 = vmatmul.mubr.f32.gmra.mxu0 %v2301
        %v2517 = vpop.f32.mrf.mxu0
        %v2518 = vadd.f32 0.0, %v2517
        %v2519 = vpop.f32.mrf.mxu0
        %2520 = vmatprep.mubr.f32.mxu0 0.0
        %2521 = vmatmul.mubr.f32.gmra.mxu0 %v2304
        %v2522 = vpop.f32.mrf.mxu0
        %v2523 = vadd.f32 0.0, %v2522
        %v2524 = vpop.f32.mrf.mxu0
        %2525 = vmatprep.mubr.f32.mxu0 0.0
        %2526 = vmatmul.mubr.f32.gmra.mxu0 %v2307
        %v2527 = vpop.f32.mrf.mxu0
        %v2528 = vadd.f32 0.0, %v2527
        %v2529 = vpop.f32.mrf.mxu0
        %2530 = vmatprep.mubr.f32.mxu0 0.0
        %2531 = vmatmul.mubr.f32.gmra.mxu0 %v2310
        %v2532 = vpop.f32.mrf.mxu0
        %v2533 = vadd.f32 0.0, %v2532
        %v2534 = vpop.f32.mrf.mxu0
        %2535 = vmatprep.mubr.f32.mxu0 0.0
        %2536 = vmatmul.mubr.f32.gmra.mxu0 %v2313
        %v2537 = vpop.f32.mrf.mxu0
        %v2538 = vadd.f32 0.0, %v2537
        %v2539 = vpop.f32.mrf.mxu0
        %2540 = vmatprep.mubr.f32.mxu0 0.0
        %2541 = vmatmul.mubr.f32.gmra.mxu0 %v2316
        %v2542 = vpop.f32.mrf.mxu0
        %v2543 = vadd.f32 0.0, %v2542
        %v2544 = vpop.f32.mrf.mxu0
        %2545 = vdwg.mxu0
        %v2546 = vadd.f32 %v2156, %v2388
        %v2547 = vadd.f32 %v2157, %v2393
        %v2548 = vadd.f32 %v2158, %v2398
        %v2549 = vadd.f32 %v2159, %v2403
        %v2550 = vadd.f32 %v2160, %v2408
        %v2551 = vadd.f32 %v2161, %v2413
        %v2552 = vadd.f32 %v2162, %v2418
        %v2553 = vadd.f32 %v2163, %v2423
        %v2554 = vadd.f32 %v2164, %v2428
        %v2555 = vadd.f32 %v2165, %v2433
        %v2556 = vadd.f32 %v2166, %v2438
        %v2557 = vadd.f32 %v2167, %v2443
        %v2558 = vadd.f32 %v2168, %v2448
        %v2559 = vadd.f32 %v2169, %v2453
        %v2560 = vadd.f32 %v2170, %v2458
        %v2561 = vadd.f32 %v2171, %v2463
        %v2562 = vadd.f32 %v2172, %v2468
        %v2563 = vadd.f32 %v2173, %v2473
        %v2564 = vadd.f32 %v2174, %v2478
        %v2565 = vadd.f32 %v2175, %v2483
        %v2566 = vadd.f32 %v2176, %v2488
        %v2567 = vadd.f32 %v2177, %v2493
        %v2568 = vadd.f32 %v2178, %v2498
        %v2569 = vadd.f32 %v2179, %v2503
        %v2570 = vadd.f32 %v2180, %v2508
        %v2571 = vadd.f32 %v2181, %v2513
        %v2572 = vadd.f32 %v2182, %v2518
        %v2573 = vadd.f32 %v2183, %v2523
        %v2574 = vadd.f32 %v2184, %v2528
        %v2575 = vadd.f32 %v2185, %v2533
        %v2576 = vadd.f32 %v2186, %v2538
        %v2577 = vadd.f32 %v2187, %v2543
        %v2578 = vld [vmem:[%s626 + $0x2] sm:$0xff]
        %v2579 = vld [vmem:[%s626 + $0xa] sm:$0xff]
        %v2580 = vld [vmem:[%s626 + $0x1a] sm:$0xff]
        %v2581 = vld [vmem:[%s626 + $0x22] sm:$0xff]
        %v2582 = vld [vmem:[%s626 + $0x32] sm:$0xff]
        %v2583 = vld [vmem:[%s626 + $0x3a] sm:$0xff]
        %v2584 = vld [vmem:[%s626 + $0x4a] sm:$0xff]
        %v2585 = vld [vmem:[%s626 + $0x52] sm:$0xff]
        %v2586 = vld [vmem:[%s626 + $0x62] sm:$0xff]
        %v2587 = vld [vmem:[%s626 + $0x6a] sm:$0xff]
        %v2588 = vld [vmem:[%s626 + $0x7a] sm:$0xff]
        %v2589 = vld [vmem:[%s626 + $0x82] sm:$0xff]
        %v2590 = vld [vmem:[%s626 + $0x92] sm:$0xff]
        %v2591 = vld [vmem:[%s626 + $0x9a] sm:$0xff]
        %v2592 = vld [vmem:[%s626 + $0xaa] sm:$0xff]
        %v2593 = vld [vmem:[%s626 + $0xb2] sm:$0xff]
        %v2594 = vld [vmem:[%s626 + $0xc2] sm:$0xff]
        %v2595 = vld [vmem:[%s626 + $0xca] sm:$0xff]
        %v2596 = vld [vmem:[%s626 + $0xda] sm:$0xff]
        %v2597 = vld [vmem:[%s626 + $0xe2] sm:$0xff]
        %v2598 = vld [vmem:[%s626 + $0xf2] sm:$0xff]
        %v2599 = vld [vmem:[%s626 + $0xfa] sm:$0xff]
        %v2600 = vld [vmem:[%s626 + $0x10a] sm:$0xff]
        %v2601 = vld [vmem:[%s626 + $0x112] sm:$0xff]
        %v2602 = vld [vmem:[%s626 + $0x122] sm:$0xff]
        %v2603 = vld [vmem:[%s626 + $0x12a] sm:$0xff]
        %v2604 = vld [vmem:[%s626 + $0x13a] sm:$0xff]
        %v2605 = vld [vmem:[%s626 + $0x142] sm:$0xff]
        %v2606 = vld [vmem:[%s626 + $0x152] sm:$0xff]
        %v2607 = vld [vmem:[%s626 + $0x15a] sm:$0xff]
        %v2608 = vld [vmem:[%s626 + $0x16a] sm:$0xff]
        %v2609 = vld [vmem:[%s626 + $0x172] sm:$0xff]
        %s2610 = scalar_lea.vmem %s3, 20
        %v2611 = vld [vmem:[%s2610] sm:$0xf]
        %v2613 = vsel %vm617, %v2578, 0
        %v2616 = vsel %vm617, %v2579, 0
        %v2619 = vsel %vm617, %v2580, 0
        %v2622 = vsel %vm617, %v2581, 0
        %v2625 = vsel %vm617, %v2582, 0
        %v2628 = vsel %vm617, %v2583, 0
        %v2631 = vsel %vm617, %v2584, 0
        %v2634 = vsel %vm617, %v2585, 0
        %v2637 = vsel %vm617, %v2586, 0
        %v2640 = vsel %vm617, %v2587, 0
        %v2643 = vsel %vm617, %v2588, 0
        %v2646 = vsel %vm617, %v2589, 0
        %v2649 = vsel %vm617, %v2590, 0
        %v2652 = vsel %vm617, %v2591, 0
        %v2655 = vsel %vm617, %v2592, 0
        %v2658 = vsel %vm617, %v2593, 0
        %v2661 = vsel %vm617, %v2594, 0
        %v2664 = vsel %vm617, %v2595, 0
        %v2667 = vsel %vm617, %v2596, 0
        %v2670 = vsel %vm617, %v2597, 0
        %v2673 = vsel %vm617, %v2598, 0
        %v2676 = vsel %vm617, %v2599, 0
        %v2679 = vsel %vm617, %v2600, 0
        %v2682 = vsel %vm617, %v2601, 0
        %v2685 = vsel %vm617, %v2602, 0
        %v2688 = vsel %vm617, %v2603, 0
        %v2691 = vsel %vm617, %v2604, 0
        %v2694 = vsel %vm617, %v2605, 0
        %v2697 = vsel %vm617, %v2606, 0
        %v2700 = vsel %vm617, %v2607, 0
        %v2703 = vsel %vm617, %v2608, 0
        %v2706 = vsel %vm617, %v2609, 0
        %v2709 = vsel %vm855, %v2611, 0
        %2711 = vmatprep.subr.mxu0 0.0
        %2712 = vmatpush1.msra.mxu0 0.0
        %2713 = vmatprep.subr.mxu0 0.0
        %2714 = vmatpush1.msra.mxu0 0.0
        %2715 = vmatprep.subr.mxu0 0.0
        %2716 = vmatpush1.msra.mxu0 0.0
        %2717 = vmatprep.subr.mxu0 0.0
        %2718 = vmatpush1.msra.mxu0 0.0
        %2719 = vmatprep.subr.mxu0 0.0
        %2720 = vmatpush1.msra.mxu0 0.0
        %2721 = vmatprep.subr.mxu0 0.0
        %2722 = vmatpush1.msra.mxu0 0.0
        %2723 = vmatprep.subr.mxu0 0.0
        %2724 = vmatpush1.msra.mxu0 0.0
        %2725 = vmatprep.subr.mxu0 0.0
        %2726 = vmatpush1.msra.mxu0 0.0
        %2727 = vmatprep.subr.mxu0 0.0
        %2728 = vmatpush1.msra.mxu0 0.0
        %2729 = vmatprep.subr.mxu0 0.0
        %2730 = vmatpush1.msra.mxu0 0.0
        %2731 = vmatprep.subr.mxu0 0.0
        %2732 = vmatpush1.msra.mxu0 0.0
        %2733 = vmatprep.subr.mxu0 0.0
        %2734 = vmatpush1.msra.mxu0 0.0
        %2735 = vmatprep.subr.mxu0 0.0
        %2736 = vmatpush1.msra.mxu0 0.0
        %2737 = vmatprep.subr.mxu0 0.0
        %2738 = vmatpush1.msra.mxu0 0.0
        %2739 = vmatprep.subr.mxu0 0.0
        %2740 = vmatpush1.msra.mxu0 0.0
        %2741 = vmatprep.subr.mxu0 0.0
        %2742 = vmatpush1.msra.mxu0 %v2709
        %2743 = vmatprep.subr.mxu0 0.0
        %2744 = vmatpush2.msra.mxu0 0.0
        %2745 = vmatprep.subr.mxu0 0.0
        %2746 = vmatpush2.msra.mxu0 0.0
        %2747 = vmatprep.subr.mxu0 0.0
        %2748 = vmatpush2.msra.mxu0 0.0
        %2749 = vmatprep.subr.mxu0 0.0
        %2750 = vmatpush2.msra.mxu0 0.0
        %2751 = vmatprep.subr.mxu0 0.0
        %2752 = vmatpush2.msra.mxu0 0.0
        %2753 = vmatprep.subr.mxu0 0.0
        %2754 = vmatpush2.msra.mxu0 0.0
        %2755 = vmatprep.subr.mxu0 0.0
        %2756 = vmatpush2.msra.mxu0 0.0
        %2757 = vmatprep.subr.mxu0 0.0
        %2758 = vmatpush2.msra.mxu0 0.0
        %2759 = vmatprep.subr.mxu0 0.0
        %2760 = vmatpush2.msra.mxu0 0.0
        %2761 = vmatprep.subr.mxu0 0.0
        %2762 = vmatpush2.msra.mxu0 0.0
        %2763 = vmatprep.subr.mxu0 0.0
        %2764 = vmatpush2.msra.mxu0 0.0
        %2765 = vmatprep.subr.mxu0 0.0
        %2766 = vmatpush2.msra.mxu0 0.0
        %2767 = vmatprep.subr.mxu0 0.0
        %2768 = vmatpush2.msra.mxu0 0.0
        %2769 = vmatprep.subr.mxu0 0.0
        %2770 = vmatpush2.msra.mxu0 0.0
        %2771 = vmatprep.subr.mxu0 0.0
        %2772 = vmatpush2.msra.mxu0 0.0
        %2773 = vmatprep.subr.mxu0 0.0
        %2774 = vmatpush2.msra.mxu0 0.0
        %2775 = vmatprep.mubr.f32.mxu0 0.0
        %2776 = vmatmul.mubr.f32.gmra.mxu0 %v2613
        %v2777 = vpop.f32.mrf.mxu0
        %v2778 = vadd.f32 0.0, %v2777
        %v2779 = vpop.f32.mrf.mxu0
        %2780 = vmatprep.mubr.f32.mxu0 0.0
        %2781 = vmatmul.mubr.f32.gmra.mxu0 %v2616
        %v2782 = vpop.f32.mrf.mxu0
        %v2783 = vadd.f32 0.0, %v2782
        %v2784 = vpop.f32.mrf.mxu0
        %2785 = vmatprep.mubr.f32.mxu0 0.0
        %2786 = vmatmul.mubr.f32.gmra.mxu0 %v2619
        %v2787 = vpop.f32.mrf.mxu0
        %v2788 = vadd.f32 0.0, %v2787
        %v2789 = vpop.f32.mrf.mxu0
        %2790 = vmatprep.mubr.f32.mxu0 0.0
        %2791 = vmatmul.mubr.f32.gmra.mxu0 %v2622
        %v2792 = vpop.f32.mrf.mxu0
        %v2793 = vadd.f32 0.0, %v2792
        %v2794 = vpop.f32.mrf.mxu0
        %2795 = vmatprep.mubr.f32.mxu0 0.0
        %2796 = vmatmul.mubr.f32.gmra.mxu0 %v2625
        %v2797 = vpop.f32.mrf.mxu0
        %v2798 = vadd.f32 0.0, %v2797
        %v2799 = vpop.f32.mrf.mxu0
        %2800 = vmatprep.mubr.f32.mxu0 0.0
        %2801 = vmatmul.mubr.f32.gmra.mxu0 %v2628
        %v2802 = vpop.f32.mrf.mxu0
        %v2803 = vadd.f32 0.0, %v2802
        %v2804 = vpop.f32.mrf.mxu0
        %2805 = vmatprep.mubr.f32.mxu0 0.0
        %2806 = vmatmul.mubr.f32.gmra.mxu0 %v2631
        %v2807 = vpop.f32.mrf.mxu0
        %v2808 = vadd.f32 0.0, %v2807
        %v2809 = vpop.f32.mrf.mxu0
        %2810 = vmatprep.mubr.f32.mxu0 0.0
        %2811 = vmatmul.mubr.f32.gmra.mxu0 %v2634
        %v2812 = vpop.f32.mrf.mxu0
        %v2813 = vadd.f32 0.0, %v2812
        %v2814 = vpop.f32.mrf.mxu0
        %2815 = vmatprep.mubr.f32.mxu0 0.0
        %2816 = vmatmul.mubr.f32.gmra.mxu0 %v2637
        %v2817 = vpop.f32.mrf.mxu0
        %v2818 = vadd.f32 0.0, %v2817
        %v2819 = vpop.f32.mrf.mxu0
        %2820 = vmatprep.mubr.f32.mxu0 0.0
        %2821 = vmatmul.mubr.f32.gmra.mxu0 %v2640
        %v2822 = vpop.f32.mrf.mxu0
        %v2823 = vadd.f32 0.0, %v2822
        %v2824 = vpop.f32.mrf.mxu0
        %2825 = vmatprep.mubr.f32.mxu0 0.0
        %2826 = vmatmul.mubr.f32.gmra.mxu0 %v2643
        %v2827 = vpop.f32.mrf.mxu0
        %v2828 = vadd.f32 0.0, %v2827
        %v2829 = vpop.f32.mrf.mxu0
        %2830 = vmatprep.mubr.f32.mxu0 0.0
        %2831 = vmatmul.mubr.f32.gmra.mxu0 %v2646
        %v2832 = vpop.f32.mrf.mxu0
        %v2833 = vadd.f32 0.0, %v2832
        %v2834 = vpop.f32.mrf.mxu0
        %2835 = vmatprep.mubr.f32.mxu0 0.0
        %2836 = vmatmul.mubr.f32.gmra.mxu0 %v2649
        %v2837 = vpop.f32.mrf.mxu0
        %v2838 = vadd.f32 0.0, %v2837
        %v2839 = vpop.f32.mrf.mxu0
        %2840 = vmatprep.mubr.f32.mxu0 0.0
        %2841 = vmatmul.mubr.f32.gmra.mxu0 %v2652
        %v2842 = vpop.f32.mrf.mxu0
        %v2843 = vadd.f32 0.0, %v2842
        %v2844 = vpop.f32.mrf.mxu0
        %2845 = vmatprep.mubr.f32.mxu0 0.0
        %2846 = vmatmul.mubr.f32.gmra.mxu0 %v2655
        %v2847 = vpop.f32.mrf.mxu0
        %v2848 = vadd.f32 0.0, %v2847
        %v2849 = vpop.f32.mrf.mxu0
        %2850 = vmatprep.mubr.f32.mxu0 0.0
        %2851 = vmatmul.mubr.f32.gmra.mxu0 %v2658
        %v2852 = vpop.f32.mrf.mxu0
        %v2853 = vadd.f32 0.0, %v2852
        %v2854 = vpop.f32.mrf.mxu0
        %2855 = vmatprep.mubr.f32.mxu0 0.0
        %2856 = vmatmul.mubr.f32.gmra.mxu0 %v2661
        %v2857 = vpop.f32.mrf.mxu0
        %v2858 = vadd.f32 0.0, %v2857
        %v2859 = vpop.f32.mrf.mxu0
        %2860 = vmatprep.mubr.f32.mxu0 0.0
        %2861 = vmatmul.mubr.f32.gmra.mxu0 %v2664
        %v2862 = vpop.f32.mrf.mxu0
        %v2863 = vadd.f32 0.0, %v2862
        %v2864 = vpop.f32.mrf.mxu0
        %2865 = vmatprep.mubr.f32.mxu0 0.0
        %2866 = vmatmul.mubr.f32.gmra.mxu0 %v2667
        %v2867 = vpop.f32.mrf.mxu0
        %v2868 = vadd.f32 0.0, %v2867
        %v2869 = vpop.f32.mrf.mxu0
        %2870 = vmatprep.mubr.f32.mxu0 0.0
        %2871 = vmatmul.mubr.f32.gmra.mxu0 %v2670
        %v2872 = vpop.f32.mrf.mxu0
        %v2873 = vadd.f32 0.0, %v2872
        %v2874 = vpop.f32.mrf.mxu0
        %2875 = vmatprep.mubr.f32.mxu0 0.0
        %2876 = vmatmul.mubr.f32.gmra.mxu0 %v2673
        %v2877 = vpop.f32.mrf.mxu0
        %v2878 = vadd.f32 0.0, %v2877
        %v2879 = vpop.f32.mrf.mxu0
        %2880 = vmatprep.mubr.f32.mxu0 0.0
        %2881 = vmatmul.mubr.f32.gmra.mxu0 %v2676
        %v2882 = vpop.f32.mrf.mxu0
        %v2883 = vadd.f32 0.0, %v2882
        %v2884 = vpop.f32.mrf.mxu0
        %2885 = vmatprep.mubr.f32.mxu0 0.0
        %2886 = vmatmul.mubr.f32.gmra.mxu0 %v2679
        %v2887 = vpop.f32.mrf.mxu0
        %v2888 = vadd.f32 0.0, %v2887
        %v2889 = vpop.f32.mrf.mxu0
        %2890 = vmatprep.mubr.f32.mxu0 0.0
        %2891 = vmatmul.mubr.f32.gmra.mxu0 %v2682
        %v2892 = vpop.f32.mrf.mxu0
        %v2893 = vadd.f32 0.0, %v2892
        %v2894 = vpop.f32.mrf.mxu0
        %2895 = vmatprep.mubr.f32.mxu0 0.0
        %2896 = vmatmul.mubr.f32.gmra.mxu0 %v2685
        %v2897 = vpop.f32.mrf.mxu0
        %v2898 = vadd.f32 0.0, %v2897
        %v2899 = vpop.f32.mrf.mxu0
        %2900 = vmatprep.mubr.f32.mxu0 0.0
        %2901 = vmatmul.mubr.f32.gmra.mxu0 %v2688
        %v2902 = vpop.f32.mrf.mxu0
        %v2903 = vadd.f32 0.0, %v2902
        %v2904 = vpop.f32.mrf.mxu0
        %2905 = vmatprep.mubr.f32.mxu0 0.0
        %2906 = vmatmul.mubr.f32.gmra.mxu0 %v2691
        %v2907 = vpop.f32.mrf.mxu0
        %v2908 = vadd.f32 0.0, %v2907
        %v2909 = vpop.f32.mrf.mxu0
        %2910 = vmatprep.mubr.f32.mxu0 0.0
        %2911 = vmatmul.mubr.f32.gmra.mxu0 %v2694
        %v2912 = vpop.f32.mrf.mxu0
        %v2913 = vadd.f32 0.0, %v2912
        %v2914 = vpop.f32.mrf.mxu0
        %2915 = vmatprep.mubr.f32.mxu0 0.0
        %2916 = vmatmul.mubr.f32.gmra.mxu0 %v2697
        %v2917 = vpop.f32.mrf.mxu0
        %v2918 = vadd.f32 0.0, %v2917
        %v2919 = vpop.f32.mrf.mxu0
        %2920 = vmatprep.mubr.f32.mxu0 0.0
        %2921 = vmatmul.mubr.f32.gmra.mxu0 %v2700
        %v2922 = vpop.f32.mrf.mxu0
        %v2923 = vadd.f32 0.0, %v2922
        %v2924 = vpop.f32.mrf.mxu0
        %2925 = vmatprep.mubr.f32.mxu0 0.0
        %2926 = vmatmul.mubr.f32.gmra.mxu0 %v2703
        %v2927 = vpop.f32.mrf.mxu0
        %v2928 = vadd.f32 0.0, %v2927
        %v2929 = vpop.f32.mrf.mxu0
        %2930 = vmatprep.mubr.f32.mxu0 0.0
        %2931 = vmatmul.mubr.f32.gmra.mxu0 %v2706
        %v2932 = vpop.f32.mrf.mxu0
        %v2933 = vadd.f32 0.0, %v2932
        %v2934 = vpop.f32.mrf.mxu0
        %2935 = vdwg.mxu0
        %v2936 = vadd.f32 %v2546, %v2778
        %v2937 = vadd.f32 %v2547, %v2783
        %v2938 = vadd.f32 %v2548, %v2788
        %v2939 = vadd.f32 %v2549, %v2793
        %v2940 = vadd.f32 %v2550, %v2798
        %v2941 = vadd.f32 %v2551, %v2803
        %v2942 = vadd.f32 %v2552, %v2808
        %v2943 = vadd.f32 %v2553, %v2813
        %v2944 = vadd.f32 %v2554, %v2818
        %v2945 = vadd.f32 %v2555, %v2823
        %v2946 = vadd.f32 %v2556, %v2828
        %v2947 = vadd.f32 %v2557, %v2833
        %v2948 = vadd.f32 %v2558, %v2838
        %v2949 = vadd.f32 %v2559, %v2843
        %v2950 = vadd.f32 %v2560, %v2848
        %v2951 = vadd.f32 %v2561, %v2853
        %v2952 = vadd.f32 %v2562, %v2858
        %v2953 = vadd.f32 %v2563, %v2863
        %v2954 = vadd.f32 %v2564, %v2868
        %v2955 = vadd.f32 %v2565, %v2873
        %v2956 = vadd.f32 %v2566, %v2878
        %v2957 = vadd.f32 %v2567, %v2883
        %v2958 = vadd.f32 %v2568, %v2888
        %v2959 = vadd.f32 %v2569, %v2893
        %v2960 = vadd.f32 %v2570, %v2898
        %v2961 = vadd.f32 %v2571, %v2903
        %v2962 = vadd.f32 %v2572, %v2908
        %v2963 = vadd.f32 %v2573, %v2913
        %v2964 = vadd.f32 %v2574, %v2918
        %v2965 = vadd.f32 %v2575, %v2923
        %v2966 = vadd.f32 %v2576, %v2928
        %v2967 = vadd.f32 %v2577, %v2933
        %s2968 = scalar_lea.vmem [#allocation2], 48
        %v2969 = vld [vmem:[%s2968] sm:$0xff]
        %v2970 = vld [vmem:[%s2968 + $0x8] sm:$0xff]
        %v2971 = vld [vmem:[%s2968 + $0x18] sm:$0xff]
        %v2972 = vld [vmem:[%s2968 + $0x20] sm:$0xff]
        %v2973 = vld [vmem:[%s2968 + $0x30] sm:$0xff]
        %v2974 = vld [vmem:[%s2968 + $0x38] sm:$0xff]
        %v2975 = vld [vmem:[%s2968 + $0x48] sm:$0xff]
        %v2976 = vld [vmem:[%s2968 + $0x50] sm:$0xff]
        %v2977 = vld [vmem:[%s2968 + $0x60] sm:$0xff]
        %v2978 = vld [vmem:[%s2968 + $0x68] sm:$0xff]
        %v2979 = vld [vmem:[%s2968 + $0x78] sm:$0xff]
        %v2980 = vld [vmem:[%s2968 + $0x80] sm:$0xff]
        %v2981 = vld [vmem:[%s2968 + $0x90] sm:$0xff]
        %v2982 = vld [vmem:[%s2968 + $0x98] sm:$0xff]
        %v2983 = vld [vmem:[%s2968 + $0xa8] sm:$0xff]
        %v2984 = vld [vmem:[%s2968 + $0xb0] sm:$0xff]
        %v2985 = vld [vmem:[%s2968 + $0xc0] sm:$0xff]
        %v2986 = vld [vmem:[%s2968 + $0xc8] sm:$0xff]
        %v2987 = vld [vmem:[%s2968 + $0xd8] sm:$0xff]
        %v2988 = vld [vmem:[%s2968 + $0xe0] sm:$0xff]
        %v2989 = vld [vmem:[%s2968 + $0xf0] sm:$0xff]
        %v2990 = vld [vmem:[%s2968 + $0xf8] sm:$0xff]
        %v2991 = vld [vmem:[%s2968 + $0x108] sm:$0xff]
        %v2992 = vld [vmem:[%s2968 + $0x110] sm:$0xff]
        %v2993 = vld [vmem:[%s2968 + $0x120] sm:$0xff]
        %v2994 = vld [vmem:[%s2968 + $0x128] sm:$0xff]
        %v2995 = vld [vmem:[%s2968 + $0x138] sm:$0xff]
        %v2996 = vld [vmem:[%s2968 + $0x140] sm:$0xff]
        %v2997 = vld [vmem:[%s2968 + $0x150] sm:$0xff]
        %v2998 = vld [vmem:[%s2968 + $0x158] sm:$0xff]
        %v2999 = vld [vmem:[%s2968 + $0x168] sm:$0xff]
        %v3000 = vld [vmem:[%s2968 + $0x170] sm:$0xff]
        %s3001 = scalar_lea.vmem %s3, 24
        %v3002 = vld [vmem:[%s3001] sm:$0xf]
        %v3004 = vsel %vm617, %v2969, 0
        %v3007 = vsel %vm617, %v2970, 0
        %v3010 = vsel %vm617, %v2971, 0
        %v3013 = vsel %vm617, %v2972, 0
        %v3016 = vsel %vm617, %v2973, 0
        %v3019 = vsel %vm617, %v2974, 0
        %v3022 = vsel %vm617, %v2975, 0
        %v3025 = vsel %vm617, %v2976, 0
        %v3028 = vsel %vm617, %v2977, 0
        %v3031 = vsel %vm617, %v2978, 0
        %v3034 = vsel %vm617, %v2979, 0
        %v3037 = vsel %vm617, %v2980, 0
        %v3040 = vsel %vm617, %v2981, 0
        %v3043 = vsel %vm617, %v2982, 0
        %v3046 = vsel %vm617, %v2983, 0
        %v3049 = vsel %vm617, %v2984, 0
        %v3052 = vsel %vm617, %v2985, 0
        %v3055 = vsel %vm617, %v2986, 0
        %v3058 = vsel %vm617, %v2987, 0
        %v3061 = vsel %vm617, %v2988, 0
        %v3064 = vsel %vm617, %v2989, 0
        %v3067 = vsel %vm617, %v2990, 0
        %v3070 = vsel %vm617, %v2991, 0
        %v3073 = vsel %vm617, %v2992, 0
        %v3076 = vsel %vm617, %v2993, 0
        %v3079 = vsel %vm617, %v2994, 0
        %v3082 = vsel %vm617, %v2995, 0
        %v3085 = vsel %vm617, %v2996, 0
        %v3088 = vsel %vm617, %v2997, 0
        %v3091 = vsel %vm617, %v2998, 0
        %v3094 = vsel %vm617, %v2999, 0
        %v3097 = vsel %vm617, %v3000, 0
        %v3100 = vsel %vm855, %v3002, 0
        %3102 = vmatprep.subr.mxu0 0.0
        %3103 = vmatpush1.msra.mxu0 0.0
        %3104 = vmatprep.subr.mxu0 0.0
        %3105 = vmatpush1.msra.mxu0 0.0
        %3106 = vmatprep.subr.mxu0 0.0
        %3107 = vmatpush1.msra.mxu0 0.0
        %3108 = vmatprep.subr.mxu0 0.0
        %3109 = vmatpush1.msra.mxu0 0.0
        %3110 = vmatprep.subr.mxu0 0.0
        %3111 = vmatpush1.msra.mxu0 0.0
        %3112 = vmatprep.subr.mxu0 0.0
        %3113 = vmatpush1.msra.mxu0 0.0
        %3114 = vmatprep.subr.mxu0 0.0
        %3115 = vmatpush1.msra.mxu0 0.0
        %3116 = vmatprep.subr.mxu0 0.0
        %3117 = vmatpush1.msra.mxu0 0.0
        %3118 = vmatprep.subr.mxu0 0.0
        %3119 = vmatpush1.msra.mxu0 0.0
        %3120 = vmatprep.subr.mxu0 0.0
        %3121 = vmatpush1.msra.mxu0 0.0
        %3122 = vmatprep.subr.mxu0 0.0
        %3123 = vmatpush1.msra.mxu0 0.0
        %3124 = vmatprep.subr.mxu0 0.0
        %3125 = vmatpush1.msra.mxu0 0.0
        %3126 = vmatprep.subr.mxu0 0.0
        %3127 = vmatpush1.msra.mxu0 0.0
        %3128 = vmatprep.subr.mxu0 0.0
        %3129 = vmatpush1.msra.mxu0 0.0
        %3130 = vmatprep.subr.mxu0 0.0
        %3131 = vmatpush1.msra.mxu0 0.0
        %3132 = vmatprep.subr.mxu0 0.0
        %3133 = vmatpush1.msra.mxu0 %v3100
        %3134 = vmatprep.subr.mxu0 0.0
        %3135 = vmatpush2.msra.mxu0 0.0
        %3136 = vmatprep.subr.mxu0 0.0
        %3137 = vmatpush2.msra.mxu0 0.0
        %3138 = vmatprep.subr.mxu0 0.0
        %3139 = vmatpush2.msra.mxu0 0.0
        %3140 = vmatprep.subr.mxu0 0.0
        %3141 = vmatpush2.msra.mxu0 0.0
        %3142 = vmatprep.subr.mxu0 0.0
        %3143 = vmatpush2.msra.mxu0 0.0
        %3144 = vmatprep.subr.mxu0 0.0
        %3145 = vmatpush2.msra.mxu0 0.0
        %3146 = vmatprep.subr.mxu0 0.0
        %3147 = vmatpush2.msra.mxu0 0.0
        %3148 = vmatprep.subr.mxu0 0.0
        %3149 = vmatpush2.msra.mxu0 0.0
        %3150 = vmatprep.subr.mxu0 0.0
        %3151 = vmatpush2.msra.mxu0 0.0
        %3152 = vmatprep.subr.mxu0 0.0
        %3153 = vmatpush2.msra.mxu0 0.0
        %3154 = vmatprep.subr.mxu0 0.0
        %3155 = vmatpush2.msra.mxu0 0.0
        %3156 = vmatprep.subr.mxu0 0.0
        %3157 = vmatpush2.msra.mxu0 0.0
        %3158 = vmatprep.subr.mxu0 0.0
        %3159 = vmatpush2.msra.mxu0 0.0
        %3160 = vmatprep.subr.mxu0 0.0
        %3161 = vmatpush2.msra.mxu0 0.0
        %3162 = vmatprep.subr.mxu0 0.0
        %3163 = vmatpush2.msra.mxu0 0.0
        %3164 = vmatprep.subr.mxu0 0.0
        %3165 = vmatpush2.msra.mxu0 0.0
        %3166 = vmatprep.mubr.f32.mxu0 0.0
        %3167 = vmatmul.mubr.f32.gmra.mxu0 %v3004
        %v3168 = vpop.f32.mrf.mxu0
        %v3169 = vadd.f32 0.0, %v3168
        %v3170 = vpop.f32.mrf.mxu0
        %3171 = vmatprep.mubr.f32.mxu0 0.0
        %3172 = vmatmul.mubr.f32.gmra.mxu0 %v3007
        %v3173 = vpop.f32.mrf.mxu0
        %v3174 = vadd.f32 0.0, %v3173
        %v3175 = vpop.f32.mrf.mxu0
        %3176 = vmatprep.mubr.f32.mxu0 0.0
        %3177 = vmatmul.mubr.f32.gmra.mxu0 %v3010
        %v3178 = vpop.f32.mrf.mxu0
        %v3179 = vadd.f32 0.0, %v3178
        %v3180 = vpop.f32.mrf.mxu0
        %3181 = vmatprep.mubr.f32.mxu0 0.0
        %3182 = vmatmul.mubr.f32.gmra.mxu0 %v3013
        %v3183 = vpop.f32.mrf.mxu0
        %v3184 = vadd.f32 0.0, %v3183
        %v3185 = vpop.f32.mrf.mxu0
        %3186 = vmatprep.mubr.f32.mxu0 0.0
        %3187 = vmatmul.mubr.f32.gmra.mxu0 %v3016
        %v3188 = vpop.f32.mrf.mxu0
        %v3189 = vadd.f32 0.0, %v3188
        %v3190 = vpop.f32.mrf.mxu0
        %3191 = vmatprep.mubr.f32.mxu0 0.0
        %3192 = vmatmul.mubr.f32.gmra.mxu0 %v3019
        %v3193 = vpop.f32.mrf.mxu0
        %v3194 = vadd.f32 0.0, %v3193
        %v3195 = vpop.f32.mrf.mxu0
        %3196 = vmatprep.mubr.f32.mxu0 0.0
        %3197 = vmatmul.mubr.f32.gmra.mxu0 %v3022
        %v3198 = vpop.f32.mrf.mxu0
        %v3199 = vadd.f32 0.0, %v3198
        %v3200 = vpop.f32.mrf.mxu0
        %3201 = vmatprep.mubr.f32.mxu0 0.0
        %3202 = vmatmul.mubr.f32.gmra.mxu0 %v3025
        %v3203 = vpop.f32.mrf.mxu0
        %v3204 = vadd.f32 0.0, %v3203
        %v3205 = vpop.f32.mrf.mxu0
        %3206 = vmatprep.mubr.f32.mxu0 0.0
        %3207 = vmatmul.mubr.f32.gmra.mxu0 %v3028
        %v3208 = vpop.f32.mrf.mxu0
        %v3209 = vadd.f32 0.0, %v3208
        %v3210 = vpop.f32.mrf.mxu0
        %3211 = vmatprep.mubr.f32.mxu0 0.0
        %3212 = vmatmul.mubr.f32.gmra.mxu0 %v3031
        %v3213 = vpop.f32.mrf.mxu0
        %v3214 = vadd.f32 0.0, %v3213
        %v3215 = vpop.f32.mrf.mxu0
        %3216 = vmatprep.mubr.f32.mxu0 0.0
        %3217 = vmatmul.mubr.f32.gmra.mxu0 %v3034
        %v3218 = vpop.f32.mrf.mxu0
        %v3219 = vadd.f32 0.0, %v3218
        %v3220 = vpop.f32.mrf.mxu0
        %3221 = vmatprep.mubr.f32.mxu0 0.0
        %3222 = vmatmul.mubr.f32.gmra.mxu0 %v3037
        %v3223 = vpop.f32.mrf.mxu0
        %v3224 = vadd.f32 0.0, %v3223
        %v3225 = vpop.f32.mrf.mxu0
        %3226 = vmatprep.mubr.f32.mxu0 0.0
        %3227 = vmatmul.mubr.f32.gmra.mxu0 %v3040
        %v3228 = vpop.f32.mrf.mxu0
        %v3229 = vadd.f32 0.0, %v3228
        %v3230 = vpop.f32.mrf.mxu0
        %3231 = vmatprep.mubr.f32.mxu0 0.0
        %3232 = vmatmul.mubr.f32.gmra.mxu0 %v3043
        %v3233 = vpop.f32.mrf.mxu0
        %v3234 = vadd.f32 0.0, %v3233
        %v3235 = vpop.f32.mrf.mxu0
        %3236 = vmatprep.mubr.f32.mxu0 0.0
        %3237 = vmatmul.mubr.f32.gmra.mxu0 %v3046
        %v3238 = vpop.f32.mrf.mxu0
        %v3239 = vadd.f32 0.0, %v3238
        %v3240 = vpop.f32.mrf.mxu0
        %3241 = vmatprep.mubr.f32.mxu0 0.0
        %3242 = vmatmul.mubr.f32.gmra.mxu0 %v3049
        %v3243 = vpop.f32.mrf.mxu0
        %v3244 = vadd.f32 0.0, %v3243
        %v3245 = vpop.f32.mrf.mxu0
        %3246 = vmatprep.mubr.f32.mxu0 0.0
        %3247 = vmatmul.mubr.f32.gmra.mxu0 %v3052
        %v3248 = vpop.f32.mrf.mxu0
        %v3249 = vadd.f32 0.0, %v3248
        %v3250 = vpop.f32.mrf.mxu0
        %3251 = vmatprep.mubr.f32.mxu0 0.0
        %3252 = vmatmul.mubr.f32.gmra.mxu0 %v3055
        %v3253 = vpop.f32.mrf.mxu0
        %v3254 = vadd.f32 0.0, %v3253
        %v3255 = vpop.f32.mrf.mxu0
        %3256 = vmatprep.mubr.f32.mxu0 0.0
        %3257 = vmatmul.mubr.f32.gmra.mxu0 %v3058
        %v3258 = vpop.f32.mrf.mxu0
        %v3259 = vadd.f32 0.0, %v3258
        %v3260 = vpop.f32.mrf.mxu0
        %3261 = vmatprep.mubr.f32.mxu0 0.0
        %3262 = vmatmul.mubr.f32.gmra.mxu0 %v3061
        %v3263 = vpop.f32.mrf.mxu0
        %v3264 = vadd.f32 0.0, %v3263
        %v3265 = vpop.f32.mrf.mxu0
        %3266 = vmatprep.mubr.f32.mxu0 0.0
        %3267 = vmatmul.mubr.f32.gmra.mxu0 %v3064
        %v3268 = vpop.f32.mrf.mxu0
        %v3269 = vadd.f32 0.0, %v3268
        %v3270 = vpop.f32.mrf.mxu0
        %3271 = vmatprep.mubr.f32.mxu0 0.0
        %3272 = vmatmul.mubr.f32.gmra.mxu0 %v3067
        %v3273 = vpop.f32.mrf.mxu0
        %v3274 = vadd.f32 0.0, %v3273
        %v3275 = vpop.f32.mrf.mxu0
        %3276 = vmatprep.mubr.f32.mxu0 0.0
        %3277 = vmatmul.mubr.f32.gmra.mxu0 %v3070
        %v3278 = vpop.f32.mrf.mxu0
        %v3279 = vadd.f32 0.0, %v3278
        %v3280 = vpop.f32.mrf.mxu0
        %3281 = vmatprep.mubr.f32.mxu0 0.0
        %3282 = vmatmul.mubr.f32.gmra.mxu0 %v3073
        %v3283 = vpop.f32.mrf.mxu0
        %v3284 = vadd.f32 0.0, %v3283
        %v3285 = vpop.f32.mrf.mxu0
        %3286 = vmatprep.mubr.f32.mxu0 0.0
        %3287 = vmatmul.mubr.f32.gmra.mxu0 %v3076
        %v3288 = vpop.f32.mrf.mxu0
        %v3289 = vadd.f32 0.0, %v3288
        %v3290 = vpop.f32.mrf.mxu0
        %3291 = vmatprep.mubr.f32.mxu0 0.0
        %3292 = vmatmul.mubr.f32.gmra.mxu0 %v3079
        %v3293 = vpop.f32.mrf.mxu0
        %v3294 = vadd.f32 0.0, %v3293
        %v3295 = vpop.f32.mrf.mxu0
        %3296 = vmatprep.mubr.f32.mxu0 0.0
        %3297 = vmatmul.mubr.f32.gmra.mxu0 %v3082
        %v3298 = vpop.f32.mrf.mxu0
        %v3299 = vadd.f32 0.0, %v3298
        %v3300 = vpop.f32.mrf.mxu0
        %3301 = vmatprep.mubr.f32.mxu0 0.0
        %3302 = vmatmul.mubr.f32.gmra.mxu0 %v3085
        %v3303 = vpop.f32.mrf.mxu0
        %v3304 = vadd.f32 0.0, %v3303
        %v3305 = vpop.f32.mrf.mxu0
        %3306 = vmatprep.mubr.f32.mxu0 0.0
        %3307 = vmatmul.mubr.f32.gmra.mxu0 %v3088
        %v3308 = vpop.f32.mrf.mxu0
        %v3309 = vadd.f32 0.0, %v3308
        %v3310 = vpop.f32.mrf.mxu0
        %3311 = vmatprep.mubr.f32.mxu0 0.0
        %3312 = vmatmul.mubr.f32.gmra.mxu0 %v3091
        %v3313 = vpop.f32.mrf.mxu0
        %v3314 = vadd.f32 0.0, %v3313
        %v3315 = vpop.f32.mrf.mxu0
        %3316 = vmatprep.mubr.f32.mxu0 0.0
        %3317 = vmatmul.mubr.f32.gmra.mxu0 %v3094
        %v3318 = vpop.f32.mrf.mxu0
        %v3319 = vadd.f32 0.0, %v3318
        %v3320 = vpop.f32.mrf.mxu0
        %3321 = vmatprep.mubr.f32.mxu0 0.0
        %3322 = vmatmul.mubr.f32.gmra.mxu0 %v3097
        %v3323 = vpop.f32.mrf.mxu0
        %v3324 = vadd.f32 0.0, %v3323
        %v3325 = vpop.f32.mrf.mxu0
        %3326 = vdwg.mxu0
        %v3327 = vadd.f32 %v2936, %v3169
        %v3328 = vadd.f32 %v2937, %v3174
        %v3329 = vadd.f32 %v2938, %v3179
        %v3330 = vadd.f32 %v2939, %v3184
        %v3331 = vadd.f32 %v2940, %v3189
        %v3332 = vadd.f32 %v2941, %v3194
        %v3333 = vadd.f32 %v2942, %v3199
        %v3334 = vadd.f32 %v2943, %v3204
        %v3335 = vadd.f32 %v2944, %v3209
        %v3336 = vadd.f32 %v2945, %v3214
        %v3337 = vadd.f32 %v2946, %v3219
        %v3338 = vadd.f32 %v2947, %v3224
        %v3339 = vadd.f32 %v2948, %v3229
        %v3340 = vadd.f32 %v2949, %v3234
        %v3341 = vadd.f32 %v2950, %v3239
        %v3342 = vadd.f32 %v2951, %v3244
        %v3343 = vadd.f32 %v2952, %v3249
        %v3344 = vadd.f32 %v2953, %v3254
        %v3345 = vadd.f32 %v2954, %v3259
        %v3346 = vadd.f32 %v2955, %v3264
        %v3347 = vadd.f32 %v2956, %v3269
        %v3348 = vadd.f32 %v2957, %v3274
        %v3349 = vadd.f32 %v2958, %v3279
        %v3350 = vadd.f32 %v2959, %v3284
        %v3351 = vadd.f32 %v2960, %v3289
        %v3352 = vadd.f32 %v2961, %v3294
        %v3353 = vadd.f32 %v2962, %v3299
        %v3354 = vadd.f32 %v2963, %v3304
        %v3355 = vadd.f32 %v2964, %v3309
        %v3356 = vadd.f32 %v2965, %v3314
        %v3357 = vadd.f32 %v2966, %v3319
        %v3358 = vadd.f32 %v2967, %v3324
        %v3359 = vld [vmem:[%s2968 + $0x1] sm:$0xff]
        %v3360 = vld [vmem:[%s2968 + $0x9] sm:$0xff]
        %v3361 = vld [vmem:[%s2968 + $0x19] sm:$0xff]
        %v3362 = vld [vmem:[%s2968 + $0x21] sm:$0xff]
        %v3363 = vld [vmem:[%s2968 + $0x31] sm:$0xff]
        %v3364 = vld [vmem:[%s2968 + $0x39] sm:$0xff]
        %v3365 = vld [vmem:[%s2968 + $0x49] sm:$0xff]
        %v3366 = vld [vmem:[%s2968 + $0x51] sm:$0xff]
        %v3367 = vld [vmem:[%s2968 + $0x61] sm:$0xff]
        %v3368 = vld [vmem:[%s2968 + $0x69] sm:$0xff]
        %v3369 = vld [vmem:[%s2968 + $0x79] sm:$0xff]
        %v3370 = vld [vmem:[%s2968 + $0x81] sm:$0xff]
        %v3371 = vld [vmem:[%s2968 + $0x91] sm:$0xff]
        %v3372 = vld [vmem:[%s2968 + $0x99] sm:$0xff]
        %v3373 = vld [vmem:[%s2968 + $0xa9] sm:$0xff]
        %v3374 = vld [vmem:[%s2968 + $0xb1] sm:$0xff]
        %v3375 = vld [vmem:[%s2968 + $0xc1] sm:$0xff]
        %v3376 = vld [vmem:[%s2968 + $0xc9] sm:$0xff]
        %v3377 = vld [vmem:[%s2968 + $0xd9] sm:$0xff]
        %v3378 = vld [vmem:[%s2968 + $0xe1] sm:$0xff]
        %v3379 = vld [vmem:[%s2968 + $0xf1] sm:$0xff]
        %v3380 = vld [vmem:[%s2968 + $0xf9] sm:$0xff]
        %v3381 = vld [vmem:[%s2968 + $0x109] sm:$0xff]
        %v3382 = vld [vmem:[%s2968 + $0x111] sm:$0xff]
        %v3383 = vld [vmem:[%s2968 + $0x121] sm:$0xff]
        %v3384 = vld [vmem:[%s2968 + $0x129] sm:$0xff]
        %v3385 = vld [vmem:[%s2968 + $0x139] sm:$0xff]
        %v3386 = vld [vmem:[%s2968 + $0x141] sm:$0xff]
        %v3387 = vld [vmem:[%s2968 + $0x151] sm:$0xff]
        %v3388 = vld [vmem:[%s2968 + $0x159] sm:$0xff]
        %v3389 = vld [vmem:[%s2968 + $0x169] sm:$0xff]
        %v3390 = vld [vmem:[%s2968 + $0x171] sm:$0xff]
        %s3391 = scalar_lea.vmem %s3, 28
        %v3392 = vld [vmem:[%s3391] sm:$0xf]
        %v3394 = vsel %vm617, %v3359, 0
        %v3397 = vsel %vm617, %v3360, 0
        %v3400 = vsel %vm617, %v3361, 0
        %v3403 = vsel %vm617, %v3362, 0
        %v3406 = vsel %vm617, %v3363, 0
        %v3409 = vsel %vm617, %v3364, 0
        %v3412 = vsel %vm617, %v3365, 0
        %v3415 = vsel %vm617, %v3366, 0
        %v3418 = vsel %vm617, %v3367, 0
        %v3421 = vsel %vm617, %v3368, 0
        %v3424 = vsel %vm617, %v3369, 0
        %v3427 = vsel %vm617, %v3370, 0
        %v3430 = vsel %vm617, %v3371, 0
        %v3433 = vsel %vm617, %v3372, 0
        %v3436 = vsel %vm617, %v3373, 0
        %v3439 = vsel %vm617, %v3374, 0
        %v3442 = vsel %vm617, %v3375, 0
        %v3445 = vsel %vm617, %v3376, 0
        %v3448 = vsel %vm617, %v3377, 0
        %v3451 = vsel %vm617, %v3378, 0
        %v3454 = vsel %vm617, %v3379, 0
        %v3457 = vsel %vm617, %v3380, 0
        %v3460 = vsel %vm617, %v3381, 0
        %v3463 = vsel %vm617, %v3382, 0
        %v3466 = vsel %vm617, %v3383, 0
        %v3469 = vsel %vm617, %v3384, 0
        %v3472 = vsel %vm617, %v3385, 0
        %v3475 = vsel %vm617, %v3386, 0
        %v3478 = vsel %vm617, %v3387, 0
        %v3481 = vsel %vm617, %v3388, 0
        %v3484 = vsel %vm617, %v3389, 0
        %v3487 = vsel %vm617, %v3390, 0
        %v3490 = vsel %vm855, %v3392, 0
        %3492 = vmatprep.subr.mxu0 0.0
        %3493 = vmatpush1.msra.mxu0 0.0
        %3494 = vmatprep.subr.mxu0 0.0
        %3495 = vmatpush1.msra.mxu0 0.0
        %3496 = vmatprep.subr.mxu0 0.0
        %3497 = vmatpush1.msra.mxu0 0.0
        %3498 = vmatprep.subr.mxu0 0.0
        %3499 = vmatpush1.msra.mxu0 0.0
        %3500 = vmatprep.subr.mxu0 0.0
        %3501 = vmatpush1.msra.mxu0 0.0
        %3502 = vmatprep.subr.mxu0 0.0
        %3503 = vmatpush1.msra.mxu0 0.0
        %3504 = vmatprep.subr.mxu0 0.0
        %3505 = vmatpush1.msra.mxu0 0.0
        %3506 = vmatprep.subr.mxu0 0.0
        %3507 = vmatpush1.msra.mxu0 0.0
        %3508 = vmatprep.subr.mxu0 0.0
        %3509 = vmatpush1.msra.mxu0 0.0
        %3510 = vmatprep.subr.mxu0 0.0
        %3511 = vmatpush1.msra.mxu0 0.0
        %3512 = vmatprep.subr.mxu0 0.0
        %3513 = vmatpush1.msra.mxu0 0.0
        %3514 = vmatprep.subr.mxu0 0.0
        %3515 = vmatpush1.msra.mxu0 0.0
        %3516 = vmatprep.subr.mxu0 0.0
        %3517 = vmatpush1.msra.mxu0 0.0
        %3518 = vmatprep.subr.mxu0 0.0
        %3519 = vmatpush1.msra.mxu0 0.0
        %3520 = vmatprep.subr.mxu0 0.0
        %3521 = vmatpush1.msra.mxu0 0.0
        %3522 = vmatprep.subr.mxu0 0.0
        %3523 = vmatpush1.msra.mxu0 %v3490
        %3524 = vmatprep.subr.mxu0 0.0
        %3525 = vmatpush2.msra.mxu0 0.0
        %3526 = vmatprep.subr.mxu0 0.0
        %3527 = vmatpush2.msra.mxu0 0.0
        %3528 = vmatprep.subr.mxu0 0.0
        %3529 = vmatpush2.msra.mxu0 0.0
        %3530 = vmatprep.subr.mxu0 0.0
        %3531 = vmatpush2.msra.mxu0 0.0
        %3532 = vmatprep.subr.mxu0 0.0
        %3533 = vmatpush2.msra.mxu0 0.0
        %3534 = vmatprep.subr.mxu0 0.0
        %3535 = vmatpush2.msra.mxu0 0.0
        %3536 = vmatprep.subr.mxu0 0.0
        %3537 = vmatpush2.msra.mxu0 0.0
        %3538 = vmatprep.subr.mxu0 0.0
        %3539 = vmatpush2.msra.mxu0 0.0
        %3540 = vmatprep.subr.mxu0 0.0
        %3541 = vmatpush2.msra.mxu0 0.0
        %3542 = vmatprep.subr.mxu0 0.0
        %3543 = vmatpush2.msra.mxu0 0.0
        %3544 = vmatprep.subr.mxu0 0.0
        %3545 = vmatpush2.msra.mxu0 0.0
        %3546 = vmatprep.subr.mxu0 0.0
        %3547 = vmatpush2.msra.mxu0 0.0
        %3548 = vmatprep.subr.mxu0 0.0
        %3549 = vmatpush2.msra.mxu0 0.0
        %3550 = vmatprep.subr.mxu0 0.0
        %3551 = vmatpush2.msra.mxu0 0.0
        %3552 = vmatprep.subr.mxu0 0.0
        %3553 = vmatpush2.msra.mxu0 0.0
        %3554 = vmatprep.subr.mxu0 0.0
        %3555 = vmatpush2.msra.mxu0 0.0
        %3556 = vmatprep.mubr.f32.mxu0 0.0
        %3557 = vmatmul.mubr.f32.gmra.mxu0 %v3394
        %v3558 = vpop.f32.mrf.mxu0
        %v3559 = vadd.f32 0.0, %v3558
        %v3560 = vpop.f32.mrf.mxu0
        %3561 = vmatprep.mubr.f32.mxu0 0.0
        %3562 = vmatmul.mubr.f32.gmra.mxu0 %v3397
        %v3563 = vpop.f32.mrf.mxu0
        %v3564 = vadd.f32 0.0, %v3563
        %v3565 = vpop.f32.mrf.mxu0
        %3566 = vmatprep.mubr.f32.mxu0 0.0
        %3567 = vmatmul.mubr.f32.gmra.mxu0 %v3400
        %v3568 = vpop.f32.mrf.mxu0
        %v3569 = vadd.f32 0.0, %v3568
        %v3570 = vpop.f32.mrf.mxu0
        %3571 = vmatprep.mubr.f32.mxu0 0.0
        %3572 = vmatmul.mubr.f32.gmra.mxu0 %v3403
        %v3573 = vpop.f32.mrf.mxu0
        %v3574 = vadd.f32 0.0, %v3573
        %v3575 = vpop.f32.mrf.mxu0
        %3576 = vmatprep.mubr.f32.mxu0 0.0
        %3577 = vmatmul.mubr.f32.gmra.mxu0 %v3406
        %v3578 = vpop.f32.mrf.mxu0
        %v3579 = vadd.f32 0.0, %v3578
        %v3580 = vpop.f32.mrf.mxu0
        %3581 = vmatprep.mubr.f32.mxu0 0.0
        %3582 = vmatmul.mubr.f32.gmra.mxu0 %v3409
        %v3583 = vpop.f32.mrf.mxu0
        %v3584 = vadd.f32 0.0, %v3583
        %v3585 = vpop.f32.mrf.mxu0
        %3586 = vmatprep.mubr.f32.mxu0 0.0
        %3587 = vmatmul.mubr.f32.gmra.mxu0 %v3412
        %v3588 = vpop.f32.mrf.mxu0
        %v3589 = vadd.f32 0.0, %v3588
        %v3590 = vpop.f32.mrf.mxu0
        %3591 = vmatprep.mubr.f32.mxu0 0.0
        %3592 = vmatmul.mubr.f32.gmra.mxu0 %v3415
        %v3593 = vpop.f32.mrf.mxu0
        %v3594 = vadd.f32 0.0, %v3593
        %v3595 = vpop.f32.mrf.mxu0
        %3596 = vmatprep.mubr.f32.mxu0 0.0
        %3597 = vmatmul.mubr.f32.gmra.mxu0 %v3418
        %v3598 = vpop.f32.mrf.mxu0
        %v3599 = vadd.f32 0.0, %v3598
        %v3600 = vpop.f32.mrf.mxu0
        %3601 = vmatprep.mubr.f32.mxu0 0.0
        %3602 = vmatmul.mubr.f32.gmra.mxu0 %v3421
        %v3603 = vpop.f32.mrf.mxu0
        %v3604 = vadd.f32 0.0, %v3603
        %v3605 = vpop.f32.mrf.mxu0
        %3606 = vmatprep.mubr.f32.mxu0 0.0
        %3607 = vmatmul.mubr.f32.gmra.mxu0 %v3424
        %v3608 = vpop.f32.mrf.mxu0
        %v3609 = vadd.f32 0.0, %v3608
        %v3610 = vpop.f32.mrf.mxu0
        %3611 = vmatprep.mubr.f32.mxu0 0.0
        %3612 = vmatmul.mubr.f32.gmra.mxu0 %v3427
        %v3613 = vpop.f32.mrf.mxu0
        %v3614 = vadd.f32 0.0, %v3613
        %v3615 = vpop.f32.mrf.mxu0
        %3616 = vmatprep.mubr.f32.mxu0 0.0
        %3617 = vmatmul.mubr.f32.gmra.mxu0 %v3430
        %v3618 = vpop.f32.mrf.mxu0
        %v3619 = vadd.f32 0.0, %v3618
        %v3620 = vpop.f32.mrf.mxu0
        %3621 = vmatprep.mubr.f32.mxu0 0.0
        %3622 = vmatmul.mubr.f32.gmra.mxu0 %v3433
        %v3623 = vpop.f32.mrf.mxu0
        %v3624 = vadd.f32 0.0, %v3623
        %v3625 = vpop.f32.mrf.mxu0
        %3626 = vmatprep.mubr.f32.mxu0 0.0
        %3627 = vmatmul.mubr.f32.gmra.mxu0 %v3436
        %v3628 = vpop.f32.mrf.mxu0
        %v3629 = vadd.f32 0.0, %v3628
        %v3630 = vpop.f32.mrf.mxu0
        %3631 = vmatprep.mubr.f32.mxu0 0.0
        %3632 = vmatmul.mubr.f32.gmra.mxu0 %v3439
        %v3633 = vpop.f32.mrf.mxu0
        %v3634 = vadd.f32 0.0, %v3633
        %v3635 = vpop.f32.mrf.mxu0
        %3636 = vmatprep.mubr.f32.mxu0 0.0
        %3637 = vmatmul.mubr.f32.gmra.mxu0 %v3442
        %v3638 = vpop.f32.mrf.mxu0
        %v3639 = vadd.f32 0.0, %v3638
        %v3640 = vpop.f32.mrf.mxu0
        %3641 = vmatprep.mubr.f32.mxu0 0.0
        %3642 = vmatmul.mubr.f32.gmra.mxu0 %v3445
        %v3643 = vpop.f32.mrf.mxu0
        %v3644 = vadd.f32 0.0, %v3643
        %v3645 = vpop.f32.mrf.mxu0
        %3646 = vmatprep.mubr.f32.mxu0 0.0
        %3647 = vmatmul.mubr.f32.gmra.mxu0 %v3448
        %v3648 = vpop.f32.mrf.mxu0
        %v3649 = vadd.f32 0.0, %v3648
        %v3650 = vpop.f32.mrf.mxu0
        %3651 = vmatprep.mubr.f32.mxu0 0.0
        %3652 = vmatmul.mubr.f32.gmra.mxu0 %v3451
        %v3653 = vpop.f32.mrf.mxu0
        %v3654 = vadd.f32 0.0, %v3653
        %v3655 = vpop.f32.mrf.mxu0
        %3656 = vmatprep.mubr.f32.mxu0 0.0
        %3657 = vmatmul.mubr.f32.gmra.mxu0 %v3454
        %v3658 = vpop.f32.mrf.mxu0
        %v3659 = vadd.f32 0.0, %v3658
        %v3660 = vpop.f32.mrf.mxu0
        %3661 = vmatprep.mubr.f32.mxu0 0.0
        %3662 = vmatmul.mubr.f32.gmra.mxu0 %v3457
        %v3663 = vpop.f32.mrf.mxu0
        %v3664 = vadd.f32 0.0, %v3663
        %v3665 = vpop.f32.mrf.mxu0
        %3666 = vmatprep.mubr.f32.mxu0 0.0
        %3667 = vmatmul.mubr.f32.gmra.mxu0 %v3460
        %v3668 = vpop.f32.mrf.mxu0
        %v3669 = vadd.f32 0.0, %v3668
        %v3670 = vpop.f32.mrf.mxu0
        %3671 = vmatprep.mubr.f32.mxu0 0.0
        %3672 = vmatmul.mubr.f32.gmra.mxu0 %v3463
        %v3673 = vpop.f32.mrf.mxu0
        %v3674 = vadd.f32 0.0, %v3673
        %v3675 = vpop.f32.mrf.mxu0
        %3676 = vmatprep.mubr.f32.mxu0 0.0
        %3677 = vmatmul.mubr.f32.gmra.mxu0 %v3466
        %v3678 = vpop.f32.mrf.mxu0
        %v3679 = vadd.f32 0.0, %v3678
        %v3680 = vpop.f32.mrf.mxu0
        %3681 = vmatprep.mubr.f32.mxu0 0.0
        %3682 = vmatmul.mubr.f32.gmra.mxu0 %v3469
        %v3683 = vpop.f32.mrf.mxu0
        %v3684 = vadd.f32 0.0, %v3683
        %v3685 = vpop.f32.mrf.mxu0
        %3686 = vmatprep.mubr.f32.mxu0 0.0
        %3687 = vmatmul.mubr.f32.gmra.mxu0 %v3472
        %v3688 = vpop.f32.mrf.mxu0
        %v3689 = vadd.f32 0.0, %v3688
        %v3690 = vpop.f32.mrf.mxu0
        %3691 = vmatprep.mubr.f32.mxu0 0.0
        %3692 = vmatmul.mubr.f32.gmra.mxu0 %v3475
        %v3693 = vpop.f32.mrf.mxu0
        %v3694 = vadd.f32 0.0, %v3693
        %v3695 = vpop.f32.mrf.mxu0
        %3696 = vmatprep.mubr.f32.mxu0 0.0
        %3697 = vmatmul.mubr.f32.gmra.mxu0 %v3478
        %v3698 = vpop.f32.mrf.mxu0
        %v3699 = vadd.f32 0.0, %v3698
        %v3700 = vpop.f32.mrf.mxu0
        %3701 = vmatprep.mubr.f32.mxu0 0.0
        %3702 = vmatmul.mubr.f32.gmra.mxu0 %v3481
        %v3703 = vpop.f32.mrf.mxu0
        %v3704 = vadd.f32 0.0, %v3703
        %v3705 = vpop.f32.mrf.mxu0
        %3706 = vmatprep.mubr.f32.mxu0 0.0
        %3707 = vmatmul.mubr.f32.gmra.mxu0 %v3484
        %v3708 = vpop.f32.mrf.mxu0
        %v3709 = vadd.f32 0.0, %v3708
        %v3710 = vpop.f32.mrf.mxu0
        %3711 = vmatprep.mubr.f32.mxu0 0.0
        %3712 = vmatmul.mubr.f32.gmra.mxu0 %v3487
        %v3713 = vpop.f32.mrf.mxu0
        %v3714 = vadd.f32 0.0, %v3713
        %v3715 = vpop.f32.mrf.mxu0
        %3716 = vdwg.mxu0
        %v3717 = vadd.f32 %v3327, %v3559
        %v3718 = vadd.f32 %v3328, %v3564
        %v3719 = vadd.f32 %v3329, %v3569
        %v3720 = vadd.f32 %v3330, %v3574
        %v3721 = vadd.f32 %v3331, %v3579
        %v3722 = vadd.f32 %v3332, %v3584
        %v3723 = vadd.f32 %v3333, %v3589
        %v3724 = vadd.f32 %v3334, %v3594
        %v3725 = vadd.f32 %v3335, %v3599
        %v3726 = vadd.f32 %v3336, %v3604
        %v3727 = vadd.f32 %v3337, %v3609
        %v3728 = vadd.f32 %v3338, %v3614
        %v3729 = vadd.f32 %v3339, %v3619
        %v3730 = vadd.f32 %v3340, %v3624
        %v3731 = vadd.f32 %v3341, %v3629
        %v3732 = vadd.f32 %v3342, %v3634
        %v3733 = vadd.f32 %v3343, %v3639
        %v3734 = vadd.f32 %v3344, %v3644
        %v3735 = vadd.f32 %v3345, %v3649
        %v3736 = vadd.f32 %v3346, %v3654
        %v3737 = vadd.f32 %v3347, %v3659
        %v3738 = vadd.f32 %v3348, %v3664
        %v3739 = vadd.f32 %v3349, %v3669
        %v3740 = vadd.f32 %v3350, %v3674
        %v3741 = vadd.f32 %v3351, %v3679
        %v3742 = vadd.f32 %v3352, %v3684
        %v3743 = vadd.f32 %v3353, %v3689
        %v3744 = vadd.f32 %v3354, %v3694
        %v3745 = vadd.f32 %v3355, %v3699
        %v3746 = vadd.f32 %v3356, %v3704
        %v3747 = vadd.f32 %v3357, %v3709
        %v3748 = vadd.f32 %v3358, %v3714
        %v3749 = vld [vmem:[%s2968 + $0x2] sm:$0xff]
        %v3750 = vld [vmem:[%s2968 + $0xa] sm:$0xff]
        %v3751 = vld [vmem:[%s2968 + $0x1a] sm:$0xff]
        %v3752 = vld [vmem:[%s2968 + $0x22] sm:$0xff]
        %v3753 = vld [vmem:[%s2968 + $0x32] sm:$0xff]
        %v3754 = vld [vmem:[%s2968 + $0x3a] sm:$0xff]
        %v3755 = vld [vmem:[%s2968 + $0x4a] sm:$0xff]
        %v3756 = vld [vmem:[%s2968 + $0x52] sm:$0xff]
        %v3757 = vld [vmem:[%s2968 + $0x62] sm:$0xff]
        %v3758 = vld [vmem:[%s2968 + $0x6a] sm:$0xff]
        %v3759 = vld [vmem:[%s2968 + $0x7a] sm:$0xff]
        %v3760 = vld [vmem:[%s2968 + $0x82] sm:$0xff]
        %v3761 = vld [vmem:[%s2968 + $0x92] sm:$0xff]
        %v3762 = vld [vmem:[%s2968 + $0x9a] sm:$0xff]
        %v3763 = vld [vmem:[%s2968 + $0xaa] sm:$0xff]
        %v3764 = vld [vmem:[%s2968 + $0xb2] sm:$0xff]
        %v3765 = vld [vmem:[%s2968 + $0xc2] sm:$0xff]
        %v3766 = vld [vmem:[%s2968 + $0xca] sm:$0xff]
        %v3767 = vld [vmem:[%s2968 + $0xda] sm:$0xff]
        %v3768 = vld [vmem:[%s2968 + $0xe2] sm:$0xff]
        %v3769 = vld [vmem:[%s2968 + $0xf2] sm:$0xff]
        %v3770 = vld [vmem:[%s2968 + $0xfa] sm:$0xff]
        %v3771 = vld [vmem:[%s2968 + $0x10a] sm:$0xff]
        %v3772 = vld [vmem:[%s2968 + $0x112] sm:$0xff]
        %v3773 = vld [vmem:[%s2968 + $0x122] sm:$0xff]
        %v3774 = vld [vmem:[%s2968 + $0x12a] sm:$0xff]
        %v3775 = vld [vmem:[%s2968 + $0x13a] sm:$0xff]
        %v3776 = vld [vmem:[%s2968 + $0x142] sm:$0xff]
        %v3777 = vld [vmem:[%s2968 + $0x152] sm:$0xff]
        %v3778 = vld [vmem:[%s2968 + $0x15a] sm:$0xff]
        %v3779 = vld [vmem:[%s2968 + $0x16a] sm:$0xff]
        %v3780 = vld [vmem:[%s2968 + $0x172] sm:$0xff]
        %s3781 = scalar_lea.vmem %s3, 32
        %v3782 = vld [vmem:[%s3781] sm:$0xf]
        %v3784 = vsel %vm617, %v3749, 0
        %v3787 = vsel %vm617, %v3750, 0
        %v3790 = vsel %vm617, %v3751, 0
        %v3793 = vsel %vm617, %v3752, 0
        %v3796 = vsel %vm617, %v3753, 0
        %v3799 = vsel %vm617, %v3754, 0
        %v3802 = vsel %vm617, %v3755, 0
        %v3805 = vsel %vm617, %v3756, 0
        %v3808 = vsel %vm617, %v3757, 0
        %v3811 = vsel %vm617, %v3758, 0
        %v3814 = vsel %vm617, %v3759, 0
        %v3817 = vsel %vm617, %v3760, 0
        %v3820 = vsel %vm617, %v3761, 0
        %v3823 = vsel %vm617, %v3762, 0
        %v3826 = vsel %vm617, %v3763, 0
        %v3829 = vsel %vm617, %v3764, 0
        %v3832 = vsel %vm617, %v3765, 0
        %v3835 = vsel %vm617, %v3766, 0
        %v3838 = vsel %vm617, %v3767, 0
        %v3841 = vsel %vm617, %v3768, 0
        %v3844 = vsel %vm617, %v3769, 0
        %v3847 = vsel %vm617, %v3770, 0
        %v3850 = vsel %vm617, %v3771, 0
        %v3853 = vsel %vm617, %v3772, 0
        %v3856 = vsel %vm617, %v3773, 0
        %v3859 = vsel %vm617, %v3774, 0
        %v3862 = vsel %vm617, %v3775, 0
        %v3865 = vsel %vm617, %v3776, 0
        %v3868 = vsel %vm617, %v3777, 0
        %v3871 = vsel %vm617, %v3778, 0
        %v3874 = vsel %vm617, %v3779, 0
        %v3877 = vsel %vm617, %v3780, 0
        %v3880 = vsel %vm855, %v3782, 0
        %3882 = vmatprep.subr.mxu0 0.0
        %3883 = vmatpush1.msra.mxu0 0.0
        %3884 = vmatprep.subr.mxu0 0.0
        %3885 = vmatpush1.msra.mxu0 0.0
        %3886 = vmatprep.subr.mxu0 0.0
        %3887 = vmatpush1.msra.mxu0 0.0
        %3888 = vmatprep.subr.mxu0 0.0
        %3889 = vmatpush1.msra.mxu0 0.0
        %3890 = vmatprep.subr.mxu0 0.0
        %3891 = vmatpush1.msra.mxu0 0.0
        %3892 = vmatprep.subr.mxu0 0.0
        %3893 = vmatpush1.msra.mxu0 0.0
        %3894 = vmatprep.subr.mxu0 0.0
        %3895 = vmatpush1.msra.mxu0 0.0
        %3896 = vmatprep.subr.mxu0 0.0
        %3897 = vmatpush1.msra.mxu0 0.0
        %3898 = vmatprep.subr.mxu0 0.0
        %3899 = vmatpush1.msra.mxu0 0.0
        %3900 = vmatprep.subr.mxu0 0.0
        %3901 = vmatpush1.msra.mxu0 0.0
        %3902 = vmatprep.subr.mxu0 0.0
        %3903 = vmatpush1.msra.mxu0 0.0
        %3904 = vmatprep.subr.mxu0 0.0
        %3905 = vmatpush1.msra.mxu0 0.0
        %3906 = vmatprep.subr.mxu0 0.0
        %3907 = vmatpush1.msra.mxu0 0.0
        %3908 = vmatprep.subr.mxu0 0.0
        %3909 = vmatpush1.msra.mxu0 0.0
        %3910 = vmatprep.subr.mxu0 0.0
        %3911 = vmatpush1.msra.mxu0 0.0
        %3912 = vmatprep.subr.mxu0 0.0
        %3913 = vmatpush1.msra.mxu0 %v3880
        %3914 = vmatprep.subr.mxu0 0.0
        %3915 = vmatpush2.msra.mxu0 0.0
        %3916 = vmatprep.subr.mxu0 0.0
        %3917 = vmatpush2.msra.mxu0 0.0
        %3918 = vmatprep.subr.mxu0 0.0
        %3919 = vmatpush2.msra.mxu0 0.0
        %3920 = vmatprep.subr.mxu0 0.0
        %3921 = vmatpush2.msra.mxu0 0.0
        %3922 = vmatprep.subr.mxu0 0.0
        %3923 = vmatpush2.msra.mxu0 0.0
        %3924 = vmatprep.subr.mxu0 0.0
        %3925 = vmatpush2.msra.mxu0 0.0
        %3926 = vmatprep.subr.mxu0 0.0
        %3927 = vmatpush2.msra.mxu0 0.0
        %3928 = vmatprep.subr.mxu0 0.0
        %3929 = vmatpush2.msra.mxu0 0.0
        %3930 = vmatprep.subr.mxu0 0.0
        %3931 = vmatpush2.msra.mxu0 0.0
        %3932 = vmatprep.subr.mxu0 0.0
        %3933 = vmatpush2.msra.mxu0 0.0
        %3934 = vmatprep.subr.mxu0 0.0
        %3935 = vmatpush2.msra.mxu0 0.0
        %3936 = vmatprep.subr.mxu0 0.0
        %3937 = vmatpush2.msra.mxu0 0.0
        %3938 = vmatprep.subr.mxu0 0.0
        %3939 = vmatpush2.msra.mxu0 0.0
        %3940 = vmatprep.subr.mxu0 0.0
        %3941 = vmatpush2.msra.mxu0 0.0
        %3942 = vmatprep.subr.mxu0 0.0
        %3943 = vmatpush2.msra.mxu0 0.0
        %3944 = vmatprep.subr.mxu0 0.0
        %3945 = vmatpush2.msra.mxu0 0.0
        %3946 = vmatprep.mubr.f32.mxu0 0.0
        %3947 = vmatmul.mubr.f32.gmra.mxu0 %v3784
        %v3948 = vpop.f32.mrf.mxu0
        %v3949 = vadd.f32 0.0, %v3948
        %v3950 = vpop.f32.mrf.mxu0
        %3951 = vmatprep.mubr.f32.mxu0 0.0
        %3952 = vmatmul.mubr.f32.gmra.mxu0 %v3787
        %v3953 = vpop.f32.mrf.mxu0
        %v3954 = vadd.f32 0.0, %v3953
        %v3955 = vpop.f32.mrf.mxu0
        %3956 = vmatprep.mubr.f32.mxu0 0.0
        %3957 = vmatmul.mubr.f32.gmra.mxu0 %v3790
        %v3958 = vpop.f32.mrf.mxu0
        %v3959 = vadd.f32 0.0, %v3958
        %v3960 = vpop.f32.mrf.mxu0
        %3961 = vmatprep.mubr.f32.mxu0 0.0
        %3962 = vmatmul.mubr.f32.gmra.mxu0 %v3793
        %v3963 = vpop.f32.mrf.mxu0
        %v3964 = vadd.f32 0.0, %v3963
        %v3965 = vpop.f32.mrf.mxu0
        %3966 = vmatprep.mubr.f32.mxu0 0.0
        %3967 = vmatmul.mubr.f32.gmra.mxu0 %v3796
        %v3968 = vpop.f32.mrf.mxu0
        %v3969 = vadd.f32 0.0, %v3968
        %v3970 = vpop.f32.mrf.mxu0
        %3971 = vmatprep.mubr.f32.mxu0 0.0
        %3972 = vmatmul.mubr.f32.gmra.mxu0 %v3799
        %v3973 = vpop.f32.mrf.mxu0
        %v3974 = vadd.f32 0.0, %v3973
        %v3975 = vpop.f32.mrf.mxu0
        %3976 = vmatprep.mubr.f32.mxu0 0.0
        %3977 = vmatmul.mubr.f32.gmra.mxu0 %v3802
        %v3978 = vpop.f32.mrf.mxu0
        %v3979 = vadd.f32 0.0, %v3978
        %v3980 = vpop.f32.mrf.mxu0
        %3981 = vmatprep.mubr.f32.mxu0 0.0
        %3982 = vmatmul.mubr.f32.gmra.mxu0 %v3805
        %v3983 = vpop.f32.mrf.mxu0
        %v3984 = vadd.f32 0.0, %v3983
        %v3985 = vpop.f32.mrf.mxu0
        %3986 = vmatprep.mubr.f32.mxu0 0.0
        %3987 = vmatmul.mubr.f32.gmra.mxu0 %v3808
        %v3988 = vpop.f32.mrf.mxu0
        %v3989 = vadd.f32 0.0, %v3988
        %v3990 = vpop.f32.mrf.mxu0
        %3991 = vmatprep.mubr.f32.mxu0 0.0
        %3992 = vmatmul.mubr.f32.gmra.mxu0 %v3811
        %v3993 = vpop.f32.mrf.mxu0
        %v3994 = vadd.f32 0.0, %v3993
        %v3995 = vpop.f32.mrf.mxu0
        %3996 = vmatprep.mubr.f32.mxu0 0.0
        %3997 = vmatmul.mubr.f32.gmra.mxu0 %v3814
        %v3998 = vpop.f32.mrf.mxu0
        %v3999 = vadd.f32 0.0, %v3998
        %v4000 = vpop.f32.mrf.mxu0
        %4001 = vmatprep.mubr.f32.mxu0 0.0
        %4002 = vmatmul.mubr.f32.gmra.mxu0 %v3817
        %v4003 = vpop.f32.mrf.mxu0
        %v4004 = vadd.f32 0.0, %v4003
        %v4005 = vpop.f32.mrf.mxu0
        %4006 = vmatprep.mubr.f32.mxu0 0.0
        %4007 = vmatmul.mubr.f32.gmra.mxu0 %v3820
        %v4008 = vpop.f32.mrf.mxu0
        %v4009 = vadd.f32 0.0, %v4008
        %v4010 = vpop.f32.mrf.mxu0
        %4011 = vmatprep.mubr.f32.mxu0 0.0
        %4012 = vmatmul.mubr.f32.gmra.mxu0 %v3823
        %v4013 = vpop.f32.mrf.mxu0
        %v4014 = vadd.f32 0.0, %v4013
        %v4015 = vpop.f32.mrf.mxu0
        %4016 = vmatprep.mubr.f32.mxu0 0.0
        %4017 = vmatmul.mubr.f32.gmra.mxu0 %v3826
        %v4018 = vpop.f32.mrf.mxu0
        %v4019 = vadd.f32 0.0, %v4018
        %v4020 = vpop.f32.mrf.mxu0
        %4021 = vmatprep.mubr.f32.mxu0 0.0
        %4022 = vmatmul.mubr.f32.gmra.mxu0 %v3829
        %v4023 = vpop.f32.mrf.mxu0
        %v4024 = vadd.f32 0.0, %v4023
        %v4025 = vpop.f32.mrf.mxu0
        %4026 = vmatprep.mubr.f32.mxu0 0.0
        %4027 = vmatmul.mubr.f32.gmra.mxu0 %v3832
        %v4028 = vpop.f32.mrf.mxu0
        %v4029 = vadd.f32 0.0, %v4028
        %v4030 = vpop.f32.mrf.mxu0
        %4031 = vmatprep.mubr.f32.mxu0 0.0
        %4032 = vmatmul.mubr.f32.gmra.mxu0 %v3835
        %v4033 = vpop.f32.mrf.mxu0
        %v4034 = vadd.f32 0.0, %v4033
        %v4035 = vpop.f32.mrf.mxu0
        %4036 = vmatprep.mubr.f32.mxu0 0.0
        %4037 = vmatmul.mubr.f32.gmra.mxu0 %v3838
        %v4038 = vpop.f32.mrf.mxu0
        %v4039 = vadd.f32 0.0, %v4038
        %v4040 = vpop.f32.mrf.mxu0
        %4041 = vmatprep.mubr.f32.mxu0 0.0
        %4042 = vmatmul.mubr.f32.gmra.mxu0 %v3841
        %v4043 = vpop.f32.mrf.mxu0
        %v4044 = vadd.f32 0.0, %v4043
        %v4045 = vpop.f32.mrf.mxu0
        %4046 = vmatprep.mubr.f32.mxu0 0.0
        %4047 = vmatmul.mubr.f32.gmra.mxu0 %v3844
        %v4048 = vpop.f32.mrf.mxu0
        %v4049 = vadd.f32 0.0, %v4048
        %v4050 = vpop.f32.mrf.mxu0
        %4051 = vmatprep.mubr.f32.mxu0 0.0
        %4052 = vmatmul.mubr.f32.gmra.mxu0 %v3847
        %v4053 = vpop.f32.mrf.mxu0
        %v4054 = vadd.f32 0.0, %v4053
        %v4055 = vpop.f32.mrf.mxu0
        %4056 = vmatprep.mubr.f32.mxu0 0.0
        %4057 = vmatmul.mubr.f32.gmra.mxu0 %v3850
        %v4058 = vpop.f32.mrf.mxu0
        %v4059 = vadd.f32 0.0, %v4058
        %v4060 = vpop.f32.mrf.mxu0
        %4061 = vmatprep.mubr.f32.mxu0 0.0
        %4062 = vmatmul.mubr.f32.gmra.mxu0 %v3853
        %v4063 = vpop.f32.mrf.mxu0
        %v4064 = vadd.f32 0.0, %v4063
        %v4065 = vpop.f32.mrf.mxu0
        %4066 = vmatprep.mubr.f32.mxu0 0.0
        %4067 = vmatmul.mubr.f32.gmra.mxu0 %v3856
        %v4068 = vpop.f32.mrf.mxu0
        %v4069 = vadd.f32 0.0, %v4068
        %v4070 = vpop.f32.mrf.mxu0
        %4071 = vmatprep.mubr.f32.mxu0 0.0
        %4072 = vmatmul.mubr.f32.gmra.mxu0 %v3859
        %v4073 = vpop.f32.mrf.mxu0
        %v4074 = vadd.f32 0.0, %v4073
        %v4075 = vpop.f32.mrf.mxu0
        %4076 = vmatprep.mubr.f32.mxu0 0.0
        %4077 = vmatmul.mubr.f32.gmra.mxu0 %v3862
        %v4078 = vpop.f32.mrf.mxu0
        %v4079 = vadd.f32 0.0, %v4078
        %v4080 = vpop.f32.mrf.mxu0
        %4081 = vmatprep.mubr.f32.mxu0 0.0
        %4082 = vmatmul.mubr.f32.gmra.mxu0 %v3865
        %v4083 = vpop.f32.mrf.mxu0
        %v4084 = vadd.f32 0.0, %v4083
        %v4085 = vpop.f32.mrf.mxu0
        %4086 = vmatprep.mubr.f32.mxu0 0.0
        %4087 = vmatmul.mubr.f32.gmra.mxu0 %v3868
        %v4088 = vpop.f32.mrf.mxu0
        %v4089 = vadd.f32 0.0, %v4088
        %v4090 = vpop.f32.mrf.mxu0
        %4091 = vmatprep.mubr.f32.mxu0 0.0
        %4092 = vmatmul.mubr.f32.gmra.mxu0 %v3871
        %v4093 = vpop.f32.mrf.mxu0
        %v4094 = vadd.f32 0.0, %v4093
        %v4095 = vpop.f32.mrf.mxu0
        %4096 = vmatprep.mubr.f32.mxu0 0.0
        %4097 = vmatmul.mubr.f32.gmra.mxu0 %v3874
        %v4098 = vpop.f32.mrf.mxu0
        %v4099 = vadd.f32 0.0, %v4098
        %v4100 = vpop.f32.mrf.mxu0
        %4101 = vmatprep.mubr.f32.mxu0 0.0
        %4102 = vmatmul.mubr.f32.gmra.mxu0 %v3877
        %v4103 = vpop.f32.mrf.mxu0
        %v4104 = vadd.f32 0.0, %v4103
        %v4105 = vpop.f32.mrf.mxu0
        %4106 = vdwg.mxu0
        %v4107 = vadd.f32 %v3717, %v3949
        %v4108 = vadd.f32 %v3718, %v3954
        %v4109 = vadd.f32 %v3719, %v3959
        %v4110 = vadd.f32 %v3720, %v3964
        %v4111 = vadd.f32 %v3721, %v3969
        %v4112 = vadd.f32 %v3722, %v3974
        %v4113 = vadd.f32 %v3723, %v3979
        %v4114 = vadd.f32 %v3724, %v3984
        %v4115 = vadd.f32 %v3725, %v3989
        %v4116 = vadd.f32 %v3726, %v3994
        %v4117 = vadd.f32 %v3727, %v3999
        %v4118 = vadd.f32 %v3728, %v4004
        %v4119 = vadd.f32 %v3729, %v4009
        %v4120 = vadd.f32 %v3730, %v4014
        %v4121 = vadd.f32 %v3731, %v4019
        %v4122 = vadd.f32 %v3732, %v4024
        %v4123 = vadd.f32 %v3733, %v4029
        %v4124 = vadd.f32 %v3734, %v4034
        %v4125 = vadd.f32 %v3735, %v4039
        %v4126 = vadd.f32 %v3736, %v4044
        %v4127 = vadd.f32 %v3737, %v4049
        %v4128 = vadd.f32 %v3738, %v4054
        %v4129 = vadd.f32 %v3739, %v4059
        %v4130 = vadd.f32 %v3740, %v4064
        %v4131 = vadd.f32 %v3741, %v4069
        %v4132 = vadd.f32 %v3742, %v4074
        %v4133 = vadd.f32 %v3743, %v4079
        %v4134 = vadd.f32 %v3744, %v4084
        %v4135 = vadd.f32 %v3745, %v4089
        %v4136 = vadd.f32 %v3746, %v4094
        %v4137 = vadd.f32 %v3747, %v4099
        %v4138 = vadd.f32 %v3748, %v4104
        %v4139 = vld [vmem:[%s4] sm:$0x1]
        %v4141 = vlaneseq
        %v4142 = vshrl.u32 %v4141, 7
        %v4143 = vsub.s32 0, %v4142
        %v4144 = vrot.slane %v4139, %v4143
        %v4146 = vadd.f32 %v4107, %v4144
        %v4147 = vadd.f32 %v4108, %v4144
        %v4148 = vadd.f32 %v4109, %v4144
        %v4149 = vadd.f32 %v4110, %v4144
        %v4150 = vadd.f32 %v4111, %v4144
        %v4151 = vadd.f32 %v4112, %v4144
        %v4152 = vadd.f32 %v4113, %v4144
        %v4153 = vadd.f32 %v4114, %v4144
        %v4154 = vadd.f32 %v4115, %v4144
        %v4155 = vadd.f32 %v4116, %v4144
        %v4156 = vadd.f32 %v4117, %v4144
        %v4157 = vadd.f32 %v4118, %v4144
        %v4158 = vadd.f32 %v4119, %v4144
        %v4159 = vadd.f32 %v4120, %v4144
        %v4160 = vadd.f32 %v4121, %v4144
        %v4161 = vadd.f32 %v4122, %v4144
        %v4162 = vadd.f32 %v4123, %v4144
        %v4163 = vadd.f32 %v4124, %v4144
        %v4164 = vadd.f32 %v4125, %v4144
        %v4165 = vadd.f32 %v4126, %v4144
        %v4166 = vadd.f32 %v4127, %v4144
        %v4167 = vadd.f32 %v4128, %v4144
        %v4168 = vadd.f32 %v4129, %v4144
        %v4169 = vadd.f32 %v4130, %v4144
        %v4170 = vadd.f32 %v4131, %v4144
        %v4171 = vadd.f32 %v4132, %v4144
        %v4172 = vadd.f32 %v4133, %v4144
        %v4173 = vadd.f32 %v4134, %v4144
        %v4174 = vadd.f32 %v4135, %v4144
        %v4175 = vadd.f32 %v4136, %v4144
        %v4176 = vadd.f32 %v4137, %v4144
        %v4177 = vadd.f32 %v4138, %v4144
        %v4178 = vmax.f32 %v4146, 0.0
        %v4179 = vmax.f32 %v4147, 0.0
        %v4180 = vmax.f32 %v4148, 0.0
        %v4181 = vmax.f32 %v4149, 0.0
        %v4182 = vmax.f32 %v4150, 0.0
        %v4183 = vmax.f32 %v4151, 0.0
        %v4184 = vmax.f32 %v4152, 0.0
        %v4185 = vmax.f32 %v4153, 0.0
        %v4186 = vmax.f32 %v4154, 0.0
        %v4187 = vmax.f32 %v4155, 0.0
        %v4188 = vmax.f32 %v4156, 0.0
        %v4189 = vmax.f32 %v4157, 0.0
        %v4190 = vmax.f32 %v4158, 0.0
        %v4191 = vmax.f32 %v4159, 0.0
        %v4192 = vmax.f32 %v4160, 0.0
        %v4193 = vmax.f32 %v4161, 0.0
        %v4194 = vmax.f32 %v4162, 0.0
        %v4195 = vmax.f32 %v4163, 0.0
        %v4196 = vmax.f32 %v4164, 0.0
        %v4197 = vmax.f32 %v4165, 0.0
        %v4198 = vmax.f32 %v4166, 0.0
        %v4199 = vmax.f32 %v4167, 0.0
        %v4200 = vmax.f32 %v4168, 0.0
        %v4201 = vmax.f32 %v4169, 0.0
        %v4202 = vmax.f32 %v4170, 0.0
        %v4203 = vmax.f32 %v4171, 0.0
        %v4204 = vmax.f32 %v4172, 0.0
        %v4205 = vmax.f32 %v4173, 0.0
        %v4206 = vmax.f32 %v4174, 0.0
        %v4207 = vmax.f32 %v4175, 0.0
        %v4208 = vmax.f32 %v4176, 0.0
        %v4209 = vmax.f32 %v4177, 0.0
        %vm4210 = vcmask 130048
        %4211 = vst.msk [vmem:[%s217] sm:$0xff] %vm4210, %v4178
        %4212 = vst.msk [vmem:[%s217 + $0x8] sm:$0xff] %vm4210, %v4179
        %4213 = vst.msk [vmem:[%s217 + $0x10] sm:$0xff] %vm4210, %v4180
        %4214 = vst.msk [vmem:[%s217 + $0x18] sm:$0xff] %vm4210, %v4181
        %4215 = vst.msk [vmem:[%s217 + $0x20] sm:$0xff] %vm4210, %v4182
        %4216 = vst.msk [vmem:[%s217 + $0x28] sm:$0xff] %vm4210, %v4183
        %4217 = vst.msk [vmem:[%s217 + $0x30] sm:$0xff] %vm4210, %v4184
        %4218 = vst.msk [vmem:[%s217 + $0x38] sm:$0xff] %vm4210, %v4185
        %4219 = vst.msk [vmem:[%s217 + $0x40] sm:$0xff] %vm4210, %v4186
        %4220 = vst.msk [vmem:[%s217 + $0x48] sm:$0xff] %vm4210, %v4187
        %4221 = vst.msk [vmem:[%s217 + $0x50] sm:$0xff] %vm4210, %v4188
        %4222 = vst.msk [vmem:[%s217 + $0x58] sm:$0xff] %vm4210, %v4189
        %4223 = vst.msk [vmem:[%s217 + $0x60] sm:$0xff] %vm4210, %v4190
        %4224 = vst.msk [vmem:[%s217 + $0x68] sm:$0xff] %vm4210, %v4191
        %4225 = vst.msk [vmem:[%s217 + $0x70] sm:$0xff] %vm4210, %v4192
        %4226 = vst.msk [vmem:[%s217 + $0x78] sm:$0xff] %vm4210, %v4193
        %4227 = vst.msk [vmem:[%s217 + $0x80] sm:$0xff] %vm4210, %v4194
        %4228 = vst.msk [vmem:[%s217 + $0x88] sm:$0xff] %vm4210, %v4195
        %4229 = vst.msk [vmem:[%s217 + $0x90] sm:$0xff] %vm4210, %v4196
        %4230 = vst.msk [vmem:[%s217 + $0x98] sm:$0xff] %vm4210, %v4197
        %4231 = vst.msk [vmem:[%s217 + $0xa0] sm:$0xff] %vm4210, %v4198
        %4232 = vst.msk [vmem:[%s217 + $0xa8] sm:$0xff] %vm4210, %v4199
        %4233 = vst.msk [vmem:[%s217 + $0xb0] sm:$0xff] %vm4210, %v4200
        %4234 = vst.msk [vmem:[%s217 + $0xb8] sm:$0xff] %vm4210, %v4201
        %4235 = vst.msk [vmem:[%s217 + $0xc0] sm:$0xff] %vm4210, %v4202
        %4236 = vst.msk [vmem:[%s217 + $0xc8] sm:$0xff] %vm4210, %v4203
        %4237 = vst.msk [vmem:[%s217 + $0xd0] sm:$0xff] %vm4210, %v4204
        %4238 = vst.msk [vmem:[%s217 + $0xd8] sm:$0xff] %vm4210, %v4205
        %4239 = vst.msk [vmem:[%s217 + $0xe0] sm:$0xff] %vm4210, %v4206
        %4240 = vst.msk [vmem:[%s217 + $0xe8] sm:$0xff] %vm4210, %v4207
        %4241 = vst.msk [vmem:[%s217 + $0xf0] sm:$0xff] %vm4210, %v4208
        %4242 = vst.msk [vmem:[%s217 + $0xf8] sm:$0xff] %vm4210, %v4209
        %s4243 = sand.u32 %s137, 1
        %s4244 = scalar_lea.sflag [#allocation4], %s4243
        %s4245 = sand.u32 %s137, 1
        %s4246 = smul.addr %s4245, 256
        %s4247 = scalar_lea.vmem [#allocation3], %s4246
        // Predicated region
        $region41: #{tpu_custom_call.1} parent=39 // pred_check
          %p4248 = pneg %p147
        $region42: #{tpu_custom_call.1} parent=39 // pred_check_branch
          %4250 = sbr.rel (%p4248) target = $region44
        $region43: #{tpu_custom_call.1} parent=39 // pred_region
          %s4252 = ssub.s32 4096, 4096
          %4253 = vsyncadd %s4244, %s4252
          %s4254 = smul.addr %s19, 32
          %s4255 = smul.addr %s4254, 128
          %s4256 = scalar_lea.hbm %s5, %s4255
          %s4257 = sshll.u32 %s4247, 4
          %s4258 = int_to_ptr.vmem [resolvable:$true] %s4257
          %4263 = dma.vmem_to_hbm [thread:$0]  %s4258, 4096, %s4256, %s4244, 128, 128, 8
        $region44: #{tpu_custom_call.1} parent=39 // pred_fallthru
          _
      $region40: #{tpu_custom_call.1} parent=5 // pred_fallthru
        _
      %p4264 = scmp.le.s32.totalorder 2, %s14
      // Predicated region
      $region45: #{tpu_custom_call.1} parent=5 // pred_check
        %p4265 = pneg %p4264
      $region46: #{tpu_custom_call.1} parent=5 // pred_check_branch
        %4267 = sbr.rel (%p4265) target = $region48
      $region47: #{tpu_custom_call.1} parent=5 // pred_region
        %s4268 = ssub.s32 %s14, 2
        // Predicated region
        $region49: #{tpu_custom_call.1} parent=47 // pred_check
          %p4269 = pneg %p153
        $region50: #{tpu_custom_call.1} parent=47 // pred_check_branch
          %4271 = sbr.rel (%p4269) target = $region52
        $region51: #{tpu_custom_call.1} parent=47 // pred_region
          %s4272 = sand.u32 %s138, 1
          %s4273 = scalar_lea.sflag [#allocation4], %s4272
          %s4274 = sand.u32 %s138, 1
          %s4275 = smul.addr %s4274, 256
          %s4276 = scalar_lea.vmem [#allocation3], %s4275
          %4277 = dma.done %s4273, 4096
        $region52: #{tpu_custom_call.1} parent=47 // pred_fallthru
          _
      $region48: #{tpu_custom_call.1} parent=5 // pred_fallthru
        _
    $region6: #{tpu_custom_call.1} parent=1 // loop_footer
      %s18 = sadd.s32 1, %s14
    $region7: #{tpu_custom_call.1} parent=1 // loop_footer_branch
      %13 = sbr.rel target = $region3
    $region8: #{tpu_custom_call.1} parent=1 // loop_exit
      _
    %4278 = vsyncpa [#allocation4], 1
    %s4279 = scalar_lea.sflag [#allocation4], 1
    %4280 = vsyncpa %s4279, 1

</llo_original>
